<compile_context>
chip_gen: v5e
topology: v5e:2x2
jax: 0.10.0
libtpu: 0.0.40
codegen_flags: <defaults>
</compile_context>

<pallas_src>
import functools

import numpy as np
import jax
import jax.numpy as jnp
from jax.experimental import pallas as pl
from jax.experimental.pallas import tpu as pltpu


# --------------------------------- fused kernel ---------------------------------- #

def _shift_rows(x, d):
    """shifted[r] = x[(r + d) mod HW]; wrapped rows are zeroed by the boundary mask."""
    hw = x.shape[0]
    d = d % hw
    if d == 0:
        return x
    return jnp.concatenate([x[d:, :], x[:d, :]], axis=0)


def _encdec_kernel(x_ref,
                   w1_ref, b1_ref, m1_ref,
                   w2_ref, b2_ref, m2_ref,
                   w3_ref, b3_ref, m3_ref,
                   w4_ref, b4_ref, w5_ref, b5_ref,
                   o_ref,
                   patch_ref, pool_ref,
                   *, W, apply_activation):
    f32, bf16 = jnp.float32, jnp.bfloat16

    def conv3x3_relu(x, m_ref, w_ref, b_ref, wdim):
        # x: (hw, cin) f32; m_ref: (hw, 9*cin) boundary mask; w_ref: (9*cin, cout) bf16.
        hw, cin = x.shape
        for t in range(9):                       # pack 9 shifted taps -> one K=9*cin dot
            oy, ox = t // 3 - 1, t % 3 - 1
            patch_ref[0:hw, t * cin:(t + 1) * cin] = _shift_rows(x, oy * wdim + ox)
        patches = patch_ref[0:hw, 0:9 * cin] * m_ref[...]
        acc = jnp.dot(patches.astype(bf16), w_ref[...], preferred_element_type=f32)
        return jnp.maximum(acc + b_ref[...], 0.0)

    def maxpool2x2(y, wdim):
        # VPU maxes against shifted copies + sublane-strided downsample (no MXU work).
        hw, c = y.shape
        m = jnp.maximum(y, _shift_rows(y, 1))        # horizontal pair (j, j+1)
        m = jnp.maximum(m, _shift_rows(m, wdim))     # vertical pair   (i, i+1)
        pool_ref[0:hw, 0:c] = m
        ho, wo = hw // wdim // 2, wdim // 2
        rows = [pool_ref[pl.ds(2 * i2 * wdim, wo, stride=2), 0:c] for i2 in range(ho)]
        return jnp.concatenate(rows, axis=0)         # (hw // 4, c)

    x = x_ref[0].astype(f32)                         # (H*W, Cin)

    # ----- encoder -----
    h = conv3x3_relu(x, m1_ref, w1_ref, b1_ref, W)
    h = maxpool2x2(h, W)
    h = conv3x3_relu(h, m2_ref, w2_ref, b2_ref, W // 2)
    h = maxpool2x2(h, W // 2)

    # ----- decoder -----
    h = conv3x3_relu(h, m3_ref, w3_ref, b3_ref, W // 4)      # (hw3, F)

    # ConvTranspose2d(k=2, s=2) twice + softmax are pointwise per (pixel, phase):
    # compute in phase-blocked layout; spatial interleave is a free host reshape.
    out_ch = w5_ref.shape[1] // 4
    hb = h.astype(bf16)
    h4 = []
    for g4 in range(4):
        p = jnp.dot(hb, w4_ref[g4], preferred_element_type=f32) + b4_ref[...]
        h4.append(jnp.maximum(p, 0.0))
    h4 = jnp.concatenate(h4, axis=0)                          # (4*hw3, F), rows = (g4, p3)
    logits = jnp.dot(h4.astype(bf16), w5_ref[...],
                     preferred_element_type=f32) + b5_ref[...]  # (4*hw3, 4*out_ch)

    for g5 in range(4):
        z = logits[:, g5 * out_ch:(g5 + 1) * out_ch]
        if apply_activation:
            z = z - jnp.max(z, axis=-1, keepdims=True)
            e = jnp.exp(z)
            z = e / jnp.sum(e, axis=-1, keepdims=True)        # exact divide
        o_ref[0, :, g5 * out_ch:(g5 + 1) * out_ch] = z


# --------------------- host-side (numpy) boundary-mask constants ------------------ #

@functools.lru_cache(maxsize=None)
def _conv_boundary_mask(h, w, cin):
    # (h*w, 9*cin) f32: 1 where the 'same'-padded 3x3 tap reads a real pixel, else 0.
    hw = h * w
    r = np.arange(hw)
    i, j = r // w, r % w
    m = np.zeros((hw, 9 * cin), np.float32)
    for t in range(9):
        oy, ox = t // 3 - 1, t % 3 - 1
        valid = ((i + oy >= 0) & (i + oy < h) & (j + ox >= 0) & (j + ox < w))
        m[:, t * cin:(t + 1) * cin] = valid.astype(np.float32)[:, None]
    return m


# ------------------------------- parameters (PyTorch layouts) --------------------- #

def init_raw_params(key, in_ch, out_ch, num_filters):
    F = num_filters
    ks = jax.random.split(key, 10)

    def w_conv(k, cout, cin):
        return jax.random.normal(k, (cout, cin, 3, 3), jnp.float32) / np.sqrt(cin * 9)

    def w_deconv(k, cin, cout):
        return jax.random.normal(k, (cin, cout, 2, 2), jnp.float32) / np.sqrt(cin * 4)

    def bias(k, c, fan_in):
        bound = 1.0 / np.sqrt(fan_in)
        return jax.random.uniform(k, (c,), jnp.float32, -bound, bound)

    return {
        "cw1": w_conv(ks[0], F, in_ch),    "cb1": bias(ks[1], F, in_ch * 9),
        "cw2": w_conv(ks[2], F, F),        "cb2": bias(ks[3], F, F * 9),
        "cw3": w_conv(ks[4], F, F),        "cb3": bias(ks[5], F, F * 9),
        "dw4": w_deconv(ks[6], F, F),      "db4": bias(ks[7], F, F * 4),
        "dw5": w_deconv(ks[8], F, out_ch), "db5": bias(ks[9], out_ch, F * 4),
    }


def pack_params(raw):
    def conv_w(w):        # (O, C, 3, 3) -> (9*C, O), K index = (dy*3+dx)*C + c
        o, c = w.shape[0], w.shape[1]
        return jnp.transpose(w, (2, 3, 1, 0)).reshape(9 * c, o).astype(jnp.bfloat16)

    def deconv_w_phased(w):   # (C, O, 2, 2) -> (4, C, O), g = dy*2+dx
        c, o = w.shape[0], w.shape[1]
        return jnp.transpose(w, (2, 3, 0, 1)).reshape(4, c, o).astype(jnp.bfloat16)

    def deconv_w_cat(w):      # (C, O, 2, 2) -> (C, 4*O), col = g*O + o
        c, o = w.shape[0], w.shape[1]
        pp = jnp.transpose(w, (2, 3, 0, 1)).reshape(4, c, o)
        return jnp.transpose(pp, (1, 0, 2)).reshape(c, 4 * o).astype(jnp.bfloat16)

    return {
        "w1": conv_w(raw["cw1"]), "b1": raw["cb1"].reshape(1, -1),
        "w2": conv_w(raw["cw2"]), "b2": raw["cb2"].reshape(1, -1),
        "w3": conv_w(raw["cw3"]), "b3": raw["cb3"].reshape(1, -1),
        "w4": deconv_w_phased(raw["dw4"]), "b4": raw["db4"].reshape(1, -1),
        "w5": deconv_w_cat(raw["dw5"]),
        "b5": jnp.tile(raw["db5"].reshape(1, -1), (1, 4)),
    }


# ------------------------------------ forward ------------------------------------- #

@functools.partial(jax.jit, static_argnames=("apply_activation",))
def _forward_jit(x_nchw, params, masks, apply_activation):
    N, Cin, H, W = x_nchw.shape
    F = params["b1"].shape[1]
    out_ch = params["w5"].shape[1] // 4
    Hq, Wq = H // 4, W // 4
    hw3 = Hq * Wq

    x = jnp.transpose(x_nchw, (0, 2, 3, 1)).reshape(N, H * W, Cin).astype(jnp.float32)
    m1, m2, m3 = masks

    operands = [x,
                params["w1"], params["b1"], m1,
                params["w2"], params["b2"], m2,
                params["w3"], params["b3"], m3,
                params["w4"], params["b4"], params["w5"], params["b5"]]

    def const_spec(a):
        nd = np.ndim(a)
        return pl.BlockSpec(tuple(np.shape(a)), lambda n, _nd=nd: (0,) * _nd)

    in_specs = [pl.BlockSpec((1, H * W, Cin), lambda n: (n, 0, 0))]
    in_specs += [const_spec(a) for a in operands[1:]]

    kern = functools.partial(_encdec_kernel, W=W, apply_activation=apply_activation)

    out = pl.pallas_call(
        kern,
        out_shape=jax.ShapeDtypeStruct((N, 4 * hw3, 4 * out_ch), jnp.float32),
        grid=(N,),
        in_specs=in_specs,
        out_specs=pl.BlockSpec((1, 4 * hw3, 4 * out_ch), lambda n: (n, 0, 0)),
        scratch_shapes=[pltpu.VMEM((H * W, 9 * max(Cin, F)), jnp.float32),  # conv patches
                        pltpu.VMEM((H * W, F), jnp.float32)],               # pool buffer
        compiler_params=pltpu.CompilerParams(dimension_semantics=("parallel",)),
    )(*operands)

    # Depth-to-space "layout plumbing" on the host: rows = (dy4, dx4, i3, j3),
    # cols = (dy5, dx5, c);  i = 4*i3 + 2*dy4 + dy5,  j = 4*j3 + 2*dx4 + dx5.
    y = out.reshape(N, 2, 2, Hq, Wq, 2, 2, out_ch)
    y = jnp.transpose(y, (0, 7, 3, 1, 5, 4, 2, 6))      # (n, c, i3, dy4, dy5, j3, dx4, dx5)
    y = y.reshape(N, out_ch, H, W)

    # F.pad(...) -- no-op when H, W are divisible by 4 (decoder restores full size)
    dY, dX = H - y.shape[2], W - y.shape[3]
    y = jnp.pad(y, ((0, 0), (0, 0), (dY // 2, dY - dY // 2), (dX // 2, dX - dX // 2)))
    return y


def encoder_decoder_forward(x_nchw, params, apply_activation=True):
    N, Cin, H, W = x_nchw.shape
    assert H % 4 == 0 and W % 4 == 0, "spatial dims must be divisible by 4"
    F = int(params["b1"].shape[1])
    masks = (_conv_boundary_mask(H, W, Cin),
             _conv_boundary_mask(H // 2, W // 2, F),
             _conv_boundary_mask(H // 4, W // 4, F))
    return _forward_jit(x_nchw, params, masks, apply_activation)
    # TODO(synk): get_model_card() is pure metadata (no compute) -- intentionally omitted.


# ------------------------- pure-JAX reference (bf16-matched) ----------------------- #

def reference_forward(x_nchw, raw, apply_activation=True):
    f32, bf16 = jnp.float32, jnp.bfloat16

    def conv3x3_relu(x, w, b):               # x (N,H,W,C); w (O,C,3,3); b (O,)
        n, h, wd, c = x.shape
        xp = jnp.pad(x.astype(bf16), ((0, 0), (1, 1), (1, 1), (0, 0)))
        wb = w.astype(bf16)
        acc = jnp.zeros((n, h, wd, w.shape[0]), f32)
        for dy in range(3):
            for dx in range(3):
                acc = acc + jnp.einsum("nhwc,oc->nhwo",
                                       xp[:, dy:dy + h, dx:dx + wd, :], wb[:, :, dy, dx],
                                       preferred_element_type=f32)
        return jnp.maximum(acc + b, 0.0)

    def maxpool2x2(x):
        n, h, wd, c = x.shape
        return x.reshape(n, h // 2, 2, wd // 2, 2, c).max(axis=(2, 4))

    def deconv2x2(x, w, b, relu):            # x (N,h,w,C); w (C,O,2,2); b (O,)
        n, h, wd, c = x.shape
        o = w.shape[1]
        xb, wb = x.astype(bf16), w.astype(bf16)
        out = jnp.zeros((n, 2 * h, 2 * wd, o), f32)
        for dy in range(2):
            for dx in range(2):
                ph = jnp.einsum("nhwc,co->nhwo", xb, wb[:, :, dy, dx],
                                preferred_element_type=f32) + b
                if relu:
                    ph = jnp.maximum(ph, 0.0)
                out = out.at[:, dy::2, dx::2, :].set(ph)
        return out

    x = jnp.transpose(x_nchw, (0, 2, 3, 1)).astype(f32)
    h = maxpool2x2(conv3x3_relu(x, raw["cw1"], raw["cb1"]))
    h = maxpool2x2(conv3x3_relu(h, raw["cw2"], raw["cb2"]))
    h = conv3x3_relu(h, raw["cw3"], raw["cb3"])
    h = deconv2x2(h, raw["dw4"], raw["db4"], relu=True)
    y = deconv2x2(h, raw["dw5"], raw["db5"], relu=False)
    if apply_activation:
        y = jax.nn.softmax(y, axis=-1)
    N, _, H, W = x_nchw.shape
    dY, dX = H - y.shape[1], W - y.shape[2]
    y = jnp.pad(y, ((0, 0), (dY // 2, dY - dY // 2), (dX // 2, dX - dX // 2), (0, 0)))
    return jnp.transpose(y, (0, 3, 1, 2))


# -------------------------------------- main --------------------------------------- #

if __name__ == "__main__":
    N, in_ch, out_ch, H, W = 2, 4, 3, 16, 16
    num_filters = 32

    key = jax.random.PRNGKey(0)
    k_x, k_p = jax.random.split(key)
    x = jax.random.normal(k_x, (N, in_ch, H, W), jnp.float32)

    raw = init_raw_params(k_p, in_ch, out_ch, num_filters)
    params = pack_params(raw)

    out = encoder_decoder_forward(x, params, apply_activation=True)
    out = jax.block_until_ready(out)

    assert out.shape == (N, out_ch, H, W), out.shape
    assert bool(jnp.all(jnp.isfinite(out)))
    # exact softmax -> per-pixel channel sums == 1
    assert bool(jnp.allclose(jnp.sum(out, axis=1), 1.0, atol=1e-3))
    # parity vs. a pure-JAX reference with the same bf16-matmul / f32-accumulate precision
    ref = reference_forward(x, raw, apply_activation=True)
    err = float(jnp.max(jnp.abs(out - ref)))
    assert err < 2e-3, f"max |kernel - reference| = {err}"
    print("KERNEL_OK")
</pallas_src>

<mosaic_0001>
module attributes {stable_mosaic.version = 11 : i64} {
  func.func @_encdec_kernel(%arg0: i32, %arg1: memref<1x256x4xf32, #tpu.memory_space<vmem>>, %arg2: memref<36x32xbf16, #tpu.memory_space<vmem>>, %arg3: memref<1x32xf32, #tpu.memory_space<vmem>>, %arg4: memref<256x36xf32, #tpu.memory_space<vmem>>, %arg5: memref<288x32xbf16, #tpu.memory_space<vmem>>, %arg6: memref<1x32xf32, #tpu.memory_space<vmem>>, %arg7: memref<64x288xf32, #tpu.memory_space<vmem>>, %arg8: memref<288x32xbf16, #tpu.memory_space<vmem>>, %arg9: memref<1x32xf32, #tpu.memory_space<vmem>>, %arg10: memref<16x288xf32, #tpu.memory_space<vmem>>, %arg11: memref<4x32x32xbf16, #tpu.memory_space<vmem>>, %arg12: memref<1x32xf32, #tpu.memory_space<vmem>>, %arg13: memref<32x12xbf16, #tpu.memory_space<vmem>>, %arg14: memref<1x12xf32, #tpu.memory_space<vmem>>, %arg15: memref<1x64x12xf32, #tpu.memory_space<vmem>>, %arg16: memref<256x288xf32, #tpu.memory_space<vmem>>, %arg17: memref<256x32xf32, #tpu.memory_space<vmem>>) attributes {dimension_semantics = [#tpu.dimension_semantics<parallel>], iteration_bounds = array<i64: 2>, scalar_prefetch = 0 : i64, scratch_operands = 2 : i64, tpu.core_type = #tpu.core_type<tc>, window_params = [{transform_indices = @transform_0, window_bounds = array<i64: 1, 256, 4>}, {pipeline_mode = #tpu.pipeline_mode<synchronous>, transform_indices = @transform_1, window_bounds = array<i64: 36, 32>}, {pipeline_mode = #tpu.pipeline_mode<synchronous>, transform_indices = @transform_2, window_bounds = array<i64: 1, 32>}, {pipeline_mode = #tpu.pipeline_mode<synchronous>, transform_indices = @transform_3, window_bounds = array<i64: 256, 36>}, {pipeline_mode = #tpu.pipeline_mode<synchronous>, transform_indices = @transform_4, window_bounds = array<i64: 288, 32>}, {pipeline_mode = #tpu.pipeline_mode<synchronous>, transform_indices = @transform_5, window_bounds = array<i64: 1, 32>}, {pipeline_mode = #tpu.pipeline_mode<synchronous>, transform_indices = @transform_6, window_bounds = array<i64: 64, 288>}, {pipeline_mode = #tpu.pipeline_mode<synchronous>, transform_indices = @transform_7, window_bounds = array<i64: 288, 32>}, {pipeline_mode = #tpu.pipeline_mode<synchronous>, transform_indices = @transform_8, window_bounds = array<i64: 1, 32>}, {pipeline_mode = #tpu.pipeline_mode<synchronous>, transform_indices = @transform_9, window_bounds = array<i64: 16, 288>}, {pipeline_mode = #tpu.pipeline_mode<synchronous>, transform_indices = @transform_10, window_bounds = array<i64: 4, 32, 32>}, {pipeline_mode = #tpu.pipeline_mode<synchronous>, transform_indices = @transform_11, window_bounds = array<i64: 1, 32>}, {pipeline_mode = #tpu.pipeline_mode<synchronous>, transform_indices = @transform_12, window_bounds = array<i64: 32, 12>}, {pipeline_mode = #tpu.pipeline_mode<synchronous>, transform_indices = @transform_13, window_bounds = array<i64: 1, 12>}, {transform_indices = @transform_14, window_bounds = array<i64: 1, 64, 12>}]} {
    %c0 = arith.constant 0 : index
    %c0_0 = arith.constant 0 : index
    %c0_1 = arith.constant 0 : index
    %0 = vector.load %arg1[%c0, %c0_0, %c0_1] : memref<1x256x4xf32, #tpu.memory_space<vmem>>, vector<1x256x4xf32>
    %1 = vector.shape_cast %0 : vector<1x256x4xf32> to vector<256x4xf32>
    %2 = vector.extract_strided_slice %1 {offsets = [239, 0], sizes = [17, 4], strides = [1, 1]} : vector<256x4xf32> to vector<17x4xf32>
    %3 = vector.extract_strided_slice %1 {offsets = [0, 0], sizes = [239, 4], strides = [1, 1]} : vector<256x4xf32> to vector<239x4xf32>
    %4 = tpu.concatenate %2, %3 in 0 : vector<17x4xf32>, vector<239x4xf32> -> vector<256x4xf32>
    %c0_2 = arith.constant 0 : index
    %c0_3 = arith.constant 0 : index
    %5 = vector.load %arg16[%c0_2, %c0_3] : memref<256x288xf32, #tpu.memory_space<vmem>>, vector<256x4xf32>
    tpu.vector_store %arg16[%c0_2, %c0_3], %4 {strides = array<i32>} : memref<256x288xf32, #tpu.memory_space<vmem>>, vector<256x4xf32>,
    %6 = vector.extract_strided_slice %1 {offsets = [240, 0], sizes = [16, 4], strides = [1, 1]} : vector<256x4xf32> to vector<16x4xf32>
    %7 = vector.extract_strided_slice %1 {offsets = [0, 0], sizes = [240, 4], strides = [1, 1]} : vector<256x4xf32> to vector<240x4xf32>
    %8 = tpu.concatenate %6, %7 in 0 : vector<16x4xf32>, vector<240x4xf32> -> vector<256x4xf32>
    %c0_4 = arith.constant 0 : index
    %c4 = arith.constant 4 : index
    %9 = vector.load %arg16[%c0_4, %c4] : memref<256x288xf32, #tpu.memory_space<vmem>>, vector<256x4xf32>
    tpu.vector_store %arg16[%c0_4, %c4], %8 {strides = array<i32>} : memref<256x288xf32, #tpu.memory_space<vmem>>, vector<256x4xf32>,
    %10 = vector.extract_strided_slice %1 {offsets = [241, 0], sizes = [15, 4], strides = [1, 1]} : vector<256x4xf32> to vector<15x4xf32>
    %11 = vector.extract_strided_slice %1 {offsets = [0, 0], sizes = [241, 4], strides = [1, 1]} : vector<256x4xf32> to vector<241x4xf32>
    %12 = tpu.concatenate %10, %11 in 0 : vector<15x4xf32>, vector<241x4xf32> -> vector<256x4xf32>
    %c0_5 = arith.constant 0 : index
    %c8 = arith.constant 8 : index
    %13 = vector.load %arg16[%c0_5, %c8] : memref<256x288xf32, #tpu.memory_space<vmem>>, vector<256x4xf32>
    tpu.vector_store %arg16[%c0_5, %c8], %12 {strides = array<i32>} : memref<256x288xf32, #tpu.memory_space<vmem>>, vector<256x4xf32>,
    %14 = vector.extract_strided_slice %1 {offsets = [255, 0], sizes = [1, 4], strides = [1, 1]} : vector<256x4xf32> to vector<1x4xf32>
    %15 = vector.extract_strided_slice %1 {offsets = [0, 0], sizes = [255, 4], strides = [1, 1]} : vector<256x4xf32> to vector<255x4xf32>
    %16 = tpu.concatenate %14, %15 in 0 : vector<1x4xf32>, vector<255x4xf32> -> vector<256x4xf32>
    %c0_6 = arith.constant 0 : index
    %c12 = arith.constant 12 : index
    %17 = vector.load %arg16[%c0_6, %c12] : memref<256x288xf32, #tpu.memory_space<vmem>>, vector<256x4xf32>
    tpu.vector_store %arg16[%c0_6, %c12], %16 {strides = array<i32>} : memref<256x288xf32, #tpu.memory_space<vmem>>, vector<256x4xf32>,
    %c0_7 = arith.constant 0 : index
    %c16 = arith.constant 16 : index
    %18 = vector.load %arg16[%c0_7, %c16] : memref<256x288xf32, #tpu.memory_space<vmem>>, vector<256x4xf32>
    tpu.vector_store %arg16[%c0_7, %c16], %1 {strides = array<i32>} : memref<256x288xf32, #tpu.memory_space<vmem>>, vector<256x4xf32>,
    %19 = vector.extract_strided_slice %1 {offsets = [1, 0], sizes = [255, 4], strides = [1, 1]} : vector<256x4xf32> to vector<255x4xf32>
    %20 = vector.extract_strided_slice %1 {offsets = [0, 0], sizes = [1, 4], strides = [1, 1]} : vector<256x4xf32> to vector<1x4xf32>
    %21 = tpu.concatenate %19, %20 in 0 : vector<255x4xf32>, vector<1x4xf32> -> vector<256x4xf32>
    %c0_8 = arith.constant 0 : index
    %c20 = arith.constant 20 : index
    %22 = vector.load %arg16[%c0_8, %c20] : memref<256x288xf32, #tpu.memory_space<vmem>>, vector<256x4xf32>
    tpu.vector_store %arg16[%c0_8, %c20], %21 {strides = array<i32>} : memref<256x288xf32, #tpu.memory_space<vmem>>, vector<256x4xf32>,
    %23 = vector.extract_strided_slice %1 {offsets = [15, 0], sizes = [241, 4], strides = [1, 1]} : vector<256x4xf32> to vector<241x4xf32>
    %24 = vector.extract_strided_slice %1 {offsets = [0, 0], sizes = [15, 4], strides = [1, 1]} : vector<256x4xf32> to vector<15x4xf32>
    %25 = tpu.concatenate %23, %24 in 0 : vector<241x4xf32>, vector<15x4xf32> -> vector<256x4xf32>
    %c0_9 = arith.constant 0 : index
    %c24 = arith.constant 24 : index
    %26 = vector.load %arg16[%c0_9, %c24] : memref<256x288xf32, #tpu.memory_space<vmem>>, vector<256x4xf32>
    tpu.vector_store %arg16[%c0_9, %c24], %25 {strides = array<i32>} : memref<256x288xf32, #tpu.memory_space<vmem>>, vector<256x4xf32>,
    %27 = vector.extract_strided_slice %1 {offsets = [16, 0], sizes = [240, 4], strides = [1, 1]} : vector<256x4xf32> to vector<240x4xf32>
    %28 = vector.extract_strided_slice %1 {offsets = [0, 0], sizes = [16, 4], strides = [1, 1]} : vector<256x4xf32> to vector<16x4xf32>
    %29 = tpu.concatenate %27, %28 in 0 : vector<240x4xf32>, vector<16x4xf32> -> vector<256x4xf32>
    %c0_10 = arith.constant 0 : index
    %c28 = arith.constant 28 : index
    %30 = vector.load %arg16[%c0_10, %c28] : memref<256x288xf32, #tpu.memory_space<vmem>>, vector<256x4xf32>
    tpu.vector_store %arg16[%c0_10, %c28], %29 {strides = array<i32>} : memref<256x288xf32, #tpu.memory_space<vmem>>, vector<256x4xf32>,
    %31 = vector.extract_strided_slice %1 {offsets = [17, 0], sizes = [239, 4], strides = [1, 1]} : vector<256x4xf32> to vector<239x4xf32>
    %32 = vector.extract_strided_slice %1 {offsets = [0, 0], sizes = [17, 4], strides = [1, 1]} : vector<256x4xf32> to vector<17x4xf32>
    %33 = tpu.concatenate %31, %32 in 0 : vector<239x4xf32>, vector<17x4xf32> -> vector<256x4xf32>
    %c0_11 = arith.constant 0 : index
    %c32 = arith.constant 32 : index
    %34 = vector.load %arg16[%c0_11, %c32] : memref<256x288xf32, #tpu.memory_space<vmem>>, vector<256x4xf32>
    tpu.vector_store %arg16[%c0_11, %c32], %33 {strides = array<i32>} : memref<256x288xf32, #tpu.memory_space<vmem>>, vector<256x4xf32>,
    %c0_12 = arith.constant 0 : index
    %c0_13 = arith.constant 0 : index
    %35 = vector.load %arg16[%c0_12, %c0_13] : memref<256x288xf32, #tpu.memory_space<vmem>>, vector<256x36xf32>
    %c0_14 = arith.constant 0 : index
    %c0_15 = arith.constant 0 : index
    %36 = vector.load %arg4[%c0_14, %c0_15] : memref<256x36xf32, #tpu.memory_space<vmem>>, vector<256x36xf32>
    %37 = arith.mulf %35, %36 : vector<256x36xf32>
    %38 = arith.truncf %37 : vector<256x36xf32> to vector<256x36xbf16>
    %c0_16 = arith.constant 0 : index
    %c0_17 = arith.constant 0 : index
    %39 = vector.load %arg2[%c0_16, %c0_17] : memref<36x32xbf16, #tpu.memory_space<vmem>>, vector<36x32xbf16>
    %cst = arith.constant dense<0.000000e+00> : vector<256x32xf32>
    %40 = tpu.matmul %38, %39, %cst {dimension_numbers = #tpu.dot_dimension_numbers<[1], [0], [0], [1], [0, 0, 1, 1], [], []>} : vector<256x36xbf16>, vector<36x32xbf16>, vector<256x32xf32> -> vector<256x32xf32>
    %c0_18 = arith.constant 0 : index
    %c0_19 = arith.constant 0 : index
    %41 = vector.load %arg3[%c0_18, %c0_19] : memref<1x32xf32, #tpu.memory_space<vmem>>, vector<1x32xf32>
    %42 = vector.broadcast %41 : vector<1x32xf32> to vector<256x32xf32>
    %43 = arith.addf %40, %42 : vector<256x32xf32>
    %cst_20 = arith.constant 0.000000e+00 : f32
    %44 = vector.broadcast %cst_20 : f32 to vector<256x32xf32>
    %45 = arith.maximumf %43, %44 : vector<256x32xf32>
    %46 = vector.extract_strided_slice %45 {offsets = [1, 0], sizes = [255, 32], strides = [1, 1]} : vector<256x32xf32> to vector<255x32xf32>
    %47 = vector.extract_strided_slice %45 {offsets = [0, 0], sizes = [1, 32], strides = [1, 1]} : vector<256x32xf32> to vector<1x32xf32>
    %48 = tpu.concatenate %46, %47 in 0 : vector<255x32xf32>, vector<1x32xf32> -> vector<256x32xf32>
    %49 = arith.maximumf %45, %48 : vector<256x32xf32>
    %50 = vector.extract_strided_slice %49 {offsets = [16, 0], sizes = [240, 32], strides = [1, 1]} : vector<256x32xf32> to vector<240x32xf32>
    %51 = vector.extract_strided_slice %49 {offsets = [0, 0], sizes = [16, 32], strides = [1, 1]} : vector<256x32xf32> to vector<16x32xf32>
    %52 = tpu.concatenate %50, %51 in 0 : vector<240x32xf32>, vector<16x32xf32> -> vector<256x32xf32>
    %53 = arith.maximumf %49, %52 : vector<256x32xf32>
    %c0_21 = arith.constant 0 : index
    %c0_22 = arith.constant 0 : index
    %54 = vector.load %arg17[%c0_21, %c0_22] : memref<256x32xf32, #tpu.memory_space<vmem>>, vector<256x32xf32>
    tpu.vector_store %arg17[%c0_21, %c0_22], %53 {strides = array<i32>} : memref<256x32xf32, #tpu.memory_space<vmem>>, vector<256x32xf32>,
    %c0_23 = arith.constant 0 : index
    %c0_24 = arith.constant 0 : index
    %55 = tpu.strided_load %arg17[%c0_23, %c0_24] {strides = array<i32: 2, 1>} : memref<256x32xf32, #tpu.memory_space<vmem>>, vector<8x32xf32>
    %c32_25 = arith.constant 32 : index
    %c0_26 = arith.constant 0 : index
    %56 = tpu.strided_load %arg17[%c32_25, %c0_26] {strides = array<i32: 2, 1>} : memref<256x32xf32, #tpu.memory_space<vmem>>, vector<8x32xf32>
    %c64 = arith.constant 64 : index
    %c0_27 = arith.constant 0 : index
    %57 = tpu.strided_load %arg17[%c64, %c0_27] {strides = array<i32: 2, 1>} : memref<256x32xf32, #tpu.memory_space<vmem>>, vector<8x32xf32>
    %c96 = arith.constant 96 : index
    %c0_28 = arith.constant 0 : index
    %58 = tpu.strided_load %arg17[%c96, %c0_28] {strides = array<i32: 2, 1>} : memref<256x32xf32, #tpu.memory_space<vmem>>, vector<8x32xf32>
    %c128 = arith.constant 128 : index
    %c0_29 = arith.constant 0 : index
    %59 = tpu.strided_load %arg17[%c128, %c0_29] {strides = array<i32: 2, 1>} : memref<256x32xf32, #tpu.memory_space<vmem>>, vector<8x32xf32>
    %c160 = arith.constant 160 : index
    %c0_30 = arith.constant 0 : index
    %60 = tpu.strided_load %arg17[%c160, %c0_30] {strides = array<i32: 2, 1>} : memref<256x32xf32, #tpu.memory_space<vmem>>, vector<8x32xf32>
    %c192 = arith.constant 192 : index
    %c0_31 = arith.constant 0 : index
    %61 = tpu.strided_load %arg17[%c192, %c0_31] {strides = array<i32: 2, 1>} : memref<256x32xf32, #tpu.memory_space<vmem>>, vector<8x32xf32>
    %c224 = arith.constant 224 : index
    %c0_32 = arith.constant 0 : index
    %62 = tpu.strided_load %arg17[%c224, %c0_32] {strides = array<i32: 2, 1>} : memref<256x32xf32, #tpu.memory_space<vmem>>, vector<8x32xf32>
    %63 = tpu.concatenate %55, %56, %57, %58, %59, %60, %61, %62 in 0 : vector<8x32xf32>, vector<8x32xf32>, vector<8x32xf32>, vector<8x32xf32>, vector<8x32xf32>, vector<8x32xf32>, vector<8x32xf32>, vector<8x32xf32> -> vector<64x32xf32>
    %64 = vector.extract_strided_slice %63 {offsets = [55, 0], sizes = [9, 32], strides = [1, 1]} : vector<64x32xf32> to vector<9x32xf32>
    %65 = vector.extract_strided_slice %63 {offsets = [0, 0], sizes = [55, 32], strides = [1, 1]} : vector<64x32xf32> to vector<55x32xf32>
    %66 = tpu.concatenate %64, %65 in 0 : vector<9x32xf32>, vector<55x32xf32> -> vector<64x32xf32>
    %c0_33 = arith.constant 0 : index
    %c0_34 = arith.constant 0 : index
    %67 = vector.load %arg16[%c0_33, %c0_34] : memref<256x288xf32, #tpu.memory_space<vmem>>, vector<64x32xf32>
    tpu.vector_store %arg16[%c0_33, %c0_34], %66 {strides = array<i32>} : memref<256x288xf32, #tpu.memory_space<vmem>>, vector<64x32xf32>,
    %68 = vector.extract_strided_slice %63 {offsets = [56, 0], sizes = [8, 32], strides = [1, 1]} : vector<64x32xf32> to vector<8x32xf32>
    %69 = vector.extract_strided_slice %63 {offsets = [0, 0], sizes = [56, 32], strides = [1, 1]} : vector<64x32xf32> to vector<56x32xf32>
    %70 = tpu.concatenate %68, %69 in 0 : vector<8x32xf32>, vector<56x32xf32> -> vector<64x32xf32>
    %c0_35 = arith.constant 0 : index
    %c32_36 = arith.constant 32 : index
    %71 = vector.load %arg16[%c0_35, %c32_36] : memref<256x288xf32, #tpu.memory_space<vmem>>, vector<64x32xf32>
    tpu.vector_store %arg16[%c0_35, %c32_36], %70 {strides = array<i32>} : memref<256x288xf32, #tpu.memory_space<vmem>>, vector<64x32xf32>,
    %72 = vector.extract_strided_slice %63 {offsets = [57, 0], sizes = [7, 32], strides = [1, 1]} : vector<64x32xf32> to vector<7x32xf32>
    %73 = vector.extract_strided_slice %63 {offsets = [0, 0], sizes = [57, 32], strides = [1, 1]} : vector<64x32xf32> to vector<57x32xf32>
    %74 = tpu.concatenate %72, %73 in 0 : vector<7x32xf32>, vector<57x32xf32> -> vector<64x32xf32>
    %c0_37 = arith.constant 0 : index
    %c64_38 = arith.constant 64 : index
    %75 = vector.load %arg16[%c0_37, %c64_38] : memref<256x288xf32, #tpu.memory_space<vmem>>, vector<64x32xf32>
    tpu.vector_store %arg16[%c0_37, %c64_38], %74 {strides = array<i32>} : memref<256x288xf32, #tpu.memory_space<vmem>>, vector<64x32xf32>,
    %76 = vector.extract_strided_slice %63 {offsets = [63, 0], sizes = [1, 32], strides = [1, 1]} : vector<64x32xf32> to vector<1x32xf32>
    %77 = vector.extract_strided_slice %63 {offsets = [0, 0], sizes = [63, 32], strides = [1, 1]} : vector<64x32xf32> to vector<63x32xf32>
    %78 = tpu.concatenate %76, %77 in 0 : vector<1x32xf32>, vector<63x32xf32> -> vector<64x32xf32>
    %c0_39 = arith.constant 0 : index
    %c96_40 = arith.constant 96 : index
    %79 = vector.load %arg16[%c0_39, %c96_40] : memref<256x288xf32, #tpu.memory_space<vmem>>, vector<64x32xf32>
    tpu.vector_store %arg16[%c0_39, %c96_40], %78 {strides = array<i32>} : memref<256x288xf32, #tpu.memory_space<vmem>>, vector<64x32xf32>,
    %c0_41 = arith.constant 0 : index
    %c128_42 = arith.constant 128 : index
    %80 = vector.load %arg16[%c0_41, %c128_42] : memref<256x288xf32, #tpu.memory_space<vmem>>, vector<64x32xf32>
    tpu.vector_store %arg16[%c0_41, %c128_42], %63 {strides = array<i32>} : memref<256x288xf32, #tpu.memory_space<vmem>>, vector<64x32xf32>,
    %81 = vector.extract_strided_slice %63 {offsets = [1, 0], sizes = [63, 32], strides = [1, 1]} : vector<64x32xf32> to vector<63x32xf32>
    %82 = vector.extract_strided_slice %63 {offsets = [0, 0], sizes = [1, 32], strides = [1, 1]} : vector<64x32xf32> to vector<1x32xf32>
    %83 = tpu.concatenate %81, %82 in 0 : vector<63x32xf32>, vector<1x32xf32> -> vector<64x32xf32>
    %c0_43 = arith.constant 0 : index
    %c160_44 = arith.constant 160 : index
    %84 = vector.load %arg16[%c0_43, %c160_44] : memref<256x288xf32, #tpu.memory_space<vmem>>, vector<64x32xf32>
    tpu.vector_store %arg16[%c0_43, %c160_44], %83 {strides = array<i32>} : memref<256x288xf32, #tpu.memory_space<vmem>>, vector<64x32xf32>,
    %85 = vector.extract_strided_slice %63 {offsets = [7, 0], sizes = [57, 32], strides = [1, 1]} : vector<64x32xf32> to vector<57x32xf32>
    %86 = vector.extract_strided_slice %63 {offsets = [0, 0], sizes = [7, 32], strides = [1, 1]} : vector<64x32xf32> to vector<7x32xf32>
    %87 = tpu.concatenate %85, %86 in 0 : vector<57x32xf32>, vector<7x32xf32> -> vector<64x32xf32>
    %c0_45 = arith.constant 0 : index
    %c192_46 = arith.constant 192 : index
    %88 = vector.load %arg16[%c0_45, %c192_46] : memref<256x288xf32, #tpu.memory_space<vmem>>, vector<64x32xf32>
    tpu.vector_store %arg16[%c0_45, %c192_46], %87 {strides = array<i32>} : memref<256x288xf32, #tpu.memory_space<vmem>>, vector<64x32xf32>,
    %89 = vector.extract_strided_slice %63 {offsets = [8, 0], sizes = [56, 32], strides = [1, 1]} : vector<64x32xf32> to vector<56x32xf32>
    %90 = vector.extract_strided_slice %63 {offsets = [0, 0], sizes = [8, 32], strides = [1, 1]} : vector<64x32xf32> to vector<8x32xf32>
    %91 = tpu.concatenate %89, %90 in 0 : vector<56x32xf32>, vector<8x32xf32> -> vector<64x32xf32>
    %c0_47 = arith.constant 0 : index
    %c224_48 = arith.constant 224 : index
    %92 = vector.load %arg16[%c0_47, %c224_48] : memref<256x288xf32, #tpu.memory_space<vmem>>, vector<64x32xf32>
    tpu.vector_store %arg16[%c0_47, %c224_48], %91 {strides = array<i32>} : memref<256x288xf32, #tpu.memory_space<vmem>>, vector<64x32xf32>,
    %93 = vector.extract_strided_slice %63 {offsets = [9, 0], sizes = [55, 32], strides = [1, 1]} : vector<64x32xf32> to vector<55x32xf32>
    %94 = vector.extract_strided_slice %63 {offsets = [0, 0], sizes = [9, 32], strides = [1, 1]} : vector<64x32xf32> to vector<9x32xf32>
    %95 = tpu.concatenate %93, %94 in 0 : vector<55x32xf32>, vector<9x32xf32> -> vector<64x32xf32>
    %c0_49 = arith.constant 0 : index
    %c256 = arith.constant 256 : index
    %96 = vector.load %arg16[%c0_49, %c256] : memref<256x288xf32, #tpu.memory_space<vmem>>, vector<64x32xf32>
    tpu.vector_store %arg16[%c0_49, %c256], %95 {strides = array<i32>} : memref<256x288xf32, #tpu.memory_space<vmem>>, vector<64x32xf32>,
    %c0_50 = arith.constant 0 : index
    %c0_51 = arith.constant 0 : index
    %97 = vector.load %arg16[%c0_50, %c0_51] : memref<256x288xf32, #tpu.memory_space<vmem>>, vector<64x288xf32>
    %c0_52 = arith.constant 0 : index
    %c0_53 = arith.constant 0 : index
    %98 = vector.load %arg7[%c0_52, %c0_53] : memref<64x288xf32, #tpu.memory_space<vmem>>, vector<64x288xf32>
    %99 = arith.mulf %97, %98 : vector<64x288xf32>
    %100 = arith.truncf %99 : vector<64x288xf32> to vector<64x288xbf16>
    %c0_54 = arith.constant 0 : index
    %c0_55 = arith.constant 0 : index
    %101 = vector.load %arg5[%c0_54, %c0_55] : memref<288x32xbf16, #tpu.memory_space<vmem>>, vector<288x32xbf16>
    %cst_56 = arith.constant dense<0.000000e+00> : vector<64x32xf32>
    %102 = tpu.matmul %100, %101, %cst_56 {dimension_numbers = #tpu.dot_dimension_numbers<[1], [0], [0], [1], [0, 0, 1, 1], [], []>} : vector<64x288xbf16>, vector<288x32xbf16>, vector<64x32xf32> -> vector<64x32xf32>
    %c0_57 = arith.constant 0 : index
    %c0_58 = arith.constant 0 : index
    %103 = vector.load %arg6[%c0_57, %c0_58] : memref<1x32xf32, #tpu.memory_space<vmem>>, vector<1x32xf32>
    %104 = vector.broadcast %103 : vector<1x32xf32> to vector<64x32xf32>
    %105 = arith.addf %102, %104 : vector<64x32xf32>
    %cst_59 = arith.constant 0.000000e+00 : f32
    %106 = vector.broadcast %cst_59 : f32 to vector<64x32xf32>
    %107 = arith.maximumf %105, %106 : vector<64x32xf32>
    %108 = vector.extract_strided_slice %107 {offsets = [1, 0], sizes = [63, 32], strides = [1, 1]} : vector<64x32xf32> to vector<63x32xf32>
    %109 = vector.extract_strided_slice %107 {offsets = [0, 0], sizes = [1, 32], strides = [1, 1]} : vector<64x32xf32> to vector<1x32xf32>
    %110 = tpu.concatenate %108, %109 in 0 : vector<63x32xf32>, vector<1x32xf32> -> vector<64x32xf32>
    %111 = arith.maximumf %107, %110 : vector<64x32xf32>
    %112 = vector.extract_strided_slice %111 {offsets = [8, 0], sizes = [56, 32], strides = [1, 1]} : vector<64x32xf32> to vector<56x32xf32>
    %113 = vector.extract_strided_slice %111 {offsets = [0, 0], sizes = [8, 32], strides = [1, 1]} : vector<64x32xf32> to vector<8x32xf32>
    %114 = tpu.concatenate %112, %113 in 0 : vector<56x32xf32>, vector<8x32xf32> -> vector<64x32xf32>
    %115 = arith.maximumf %111, %114 : vector<64x32xf32>
    %c0_60 = arith.constant 0 : index
    %c0_61 = arith.constant 0 : index
    %116 = vector.load %arg17[%c0_60, %c0_61] : memref<256x32xf32, #tpu.memory_space<vmem>>, vector<64x32xf32>
    tpu.vector_store %arg17[%c0_60, %c0_61], %115 {strides = array<i32>} : memref<256x32xf32, #tpu.memory_space<vmem>>, vector<64x32xf32>,
    %c0_62 = arith.constant 0 : index
    %c0_63 = arith.constant 0 : index
    %117 = tpu.strided_load %arg17[%c0_62, %c0_63] {strides = array<i32: 2, 1>} : memref<256x32xf32, #tpu.memory_space<vmem>>, vector<4x32xf32>
    %c16_64 = arith.constant 16 : index
    %c0_65 = arith.constant 0 : index
    %118 = tpu.strided_load %arg17[%c16_64, %c0_65] {strides = array<i32: 2, 1>} : memref<256x32xf32, #tpu.memory_space<vmem>>, vector<4x32xf32>
    %c32_66 = arith.constant 32 : index
    %c0_67 = arith.constant 0 : index
    %119 = tpu.strided_load %arg17[%c32_66, %c0_67] {strides = array<i32: 2, 1>} : memref<256x32xf32, #tpu.memory_space<vmem>>, vector<4x32xf32>
    %c48 = arith.constant 48 : index
    %c0_68 = arith.constant 0 : index
    %120 = tpu.strided_load %arg17[%c48, %c0_68] {strides = array<i32: 2, 1>} : memref<256x32xf32, #tpu.memory_space<vmem>>, vector<4x32xf32>
    %121 = tpu.concatenate %117, %118, %119, %120 in 0 : vector<4x32xf32>, vector<4x32xf32>, vector<4x32xf32>, vector<4x32xf32> -> vector<16x32xf32>
    %122 = vector.extract_strided_slice %121 {offsets = [11, 0], sizes = [5, 32], strides = [1, 1]} : vector<16x32xf32> to vector<5x32xf32>
    %123 = vector.extract_strided_slice %121 {offsets = [0, 0], sizes = [11, 32], strides = [1, 1]} : vector<16x32xf32> to vector<11x32xf32>
    %124 = tpu.concatenate %122, %123 in 0 : vector<5x32xf32>, vector<11x32xf32> -> vector<16x32xf32>
    %c0_69 = arith.constant 0 : index
    %c0_70 = arith.constant 0 : index
    %125 = vector.load %arg16[%c0_69, %c0_70] : memref<256x288xf32, #tpu.memory_space<vmem>>, vector<16x32xf32>
    tpu.vector_store %arg16[%c0_69, %c0_70], %124 {strides = array<i32>} : memref<256x288xf32, #tpu.memory_space<vmem>>, vector<16x32xf32>,
    %126 = vector.extract_strided_slice %121 {offsets = [12, 0], sizes = [4, 32], strides = [1, 1]} : vector<16x32xf32> to vector<4x32xf32>
    %127 = vector.extract_strided_slice %121 {offsets = [0, 0], sizes = [12, 32], strides = [1, 1]} : vector<16x32xf32> to vector<12x32xf32>
    %128 = tpu.concatenate %126, %127 in 0 : vector<4x32xf32>, vector<12x32xf32> -> vector<16x32xf32>
    %c0_71 = arith.constant 0 : index
    %c32_72 = arith.constant 32 : index
    %129 = vector.load %arg16[%c0_71, %c32_72] : memref<256x288xf32, #tpu.memory_space<vmem>>, vector<16x32xf32>
    tpu.vector_store %arg16[%c0_71, %c32_72], %128 {strides = array<i32>} : memref<256x288xf32, #tpu.memory_space<vmem>>, vector<16x32xf32>,
    %130 = vector.extract_strided_slice %121 {offsets = [13, 0], sizes = [3, 32], strides = [1, 1]} : vector<16x32xf32> to vector<3x32xf32>
    %131 = vector.extract_strided_slice %121 {offsets = [0, 0], sizes = [13, 32], strides = [1, 1]} : vector<16x32xf32> to vector<13x32xf32>
    %132 = tpu.concatenate %130, %131 in 0 : vector<3x32xf32>, vector<13x32xf32> -> vector<16x32xf32>
    %c0_73 = arith.constant 0 : index
    %c64_74 = arith.constant 64 : index
    %133 = vector.load %arg16[%c0_73, %c64_74] : memref<256x288xf32, #tpu.memory_space<vmem>>, vector<16x32xf32>
    tpu.vector_store %arg16[%c0_73, %c64_74], %132 {strides = array<i32>} : memref<256x288xf32, #tpu.memory_space<vmem>>, vector<16x32xf32>,
    %134 = vector.extract_strided_slice %121 {offsets = [15, 0], sizes = [1, 32], strides = [1, 1]} : vector<16x32xf32> to vector<1x32xf32>
    %135 = vector.extract_strided_slice %121 {offsets = [0, 0], sizes = [15, 32], strides = [1, 1]} : vector<16x32xf32> to vector<15x32xf32>
    %136 = tpu.concatenate %134, %135 in 0 : vector<1x32xf32>, vector<15x32xf32> -> vector<16x32xf32>
    %c0_75 = arith.constant 0 : index
    %c96_76 = arith.constant 96 : index
    %137 = vector.load %arg16[%c0_75, %c96_76] : memref<256x288xf32, #tpu.memory_space<vmem>>, vector<16x32xf32>
    tpu.vector_store %arg16[%c0_75, %c96_76], %136 {strides = array<i32>} : memref<256x288xf32, #tpu.memory_space<vmem>>, vector<16x32xf32>,
    %c0_77 = arith.constant 0 : index
    %c128_78 = arith.constant 128 : index
    %138 = vector.load %arg16[%c0_77, %c128_78] : memref<256x288xf32, #tpu.memory_space<vmem>>, vector<16x32xf32>
    tpu.vector_store %arg16[%c0_77, %c128_78], %121 {strides = array<i32>} : memref<256x288xf32, #tpu.memory_space<vmem>>, vector<16x32xf32>,
    %139 = vector.extract_strided_slice %121 {offsets = [1, 0], sizes = [15, 32], strides = [1, 1]} : vector<16x32xf32> to vector<15x32xf32>
    %140 = vector.extract_strided_slice %121 {offsets = [0, 0], sizes = [1, 32], strides = [1, 1]} : vector<16x32xf32> to vector<1x32xf32>
    %141 = tpu.concatenate %139, %140 in 0 : vector<15x32xf32>, vector<1x32xf32> -> vector<16x32xf32>
    %c0_79 = arith.constant 0 : index
    %c160_80 = arith.constant 160 : index
    %142 = vector.load %arg16[%c0_79, %c160_80] : memref<256x288xf32, #tpu.memory_space<vmem>>, vector<16x32xf32>
    tpu.vector_store %arg16[%c0_79, %c160_80], %141 {strides = array<i32>} : memref<256x288xf32, #tpu.memory_space<vmem>>, vector<16x32xf32>,
    %143 = vector.extract_strided_slice %121 {offsets = [3, 0], sizes = [13, 32], strides = [1, 1]} : vector<16x32xf32> to vector<13x32xf32>
    %144 = vector.extract_strided_slice %121 {offsets = [0, 0], sizes = [3, 32], strides = [1, 1]} : vector<16x32xf32> to vector<3x32xf32>
    %145 = tpu.concatenate %143, %144 in 0 : vector<13x32xf32>, vector<3x32xf32> -> vector<16x32xf32>
    %c0_81 = arith.constant 0 : index
    %c192_82 = arith.constant 192 : index
    %146 = vector.load %arg16[%c0_81, %c192_82] : memref<256x288xf32, #tpu.memory_space<vmem>>, vector<16x32xf32>
    tpu.vector_store %arg16[%c0_81, %c192_82], %145 {strides = array<i32>} : memref<256x288xf32, #tpu.memory_space<vmem>>, vector<16x32xf32>,
    %147 = vector.extract_strided_slice %121 {offsets = [4, 0], sizes = [12, 32], strides = [1, 1]} : vector<16x32xf32> to vector<12x32xf32>
    %148 = vector.extract_strided_slice %121 {offsets = [0, 0], sizes = [4, 32], strides = [1, 1]} : vector<16x32xf32> to vector<4x32xf32>
    %149 = tpu.concatenate %147, %148 in 0 : vector<12x32xf32>, vector<4x32xf32> -> vector<16x32xf32>
    %c0_83 = arith.constant 0 : index
    %c224_84 = arith.constant 224 : index
    %150 = vector.load %arg16[%c0_83, %c224_84] : memref<256x288xf32, #tpu.memory_space<vmem>>, vector<16x32xf32>
    tpu.vector_store %arg16[%c0_83, %c224_84], %149 {strides = array<i32>} : memref<256x288xf32, #tpu.memory_space<vmem>>, vector<16x32xf32>,
    %151 = vector.extract_strided_slice %121 {offsets = [5, 0], sizes = [11, 32], strides = [1, 1]} : vector<16x32xf32> to vector<11x32xf32>
    %152 = vector.extract_strided_slice %121 {offsets = [0, 0], sizes = [5, 32], strides = [1, 1]} : vector<16x32xf32> to vector<5x32xf32>
    %153 = tpu.concatenate %151, %152 in 0 : vector<11x32xf32>, vector<5x32xf32> -> vector<16x32xf32>
    %c0_85 = arith.constant 0 : index
    %c256_86 = arith.constant 256 : index
    %154 = vector.load %arg16[%c0_85, %c256_86] : memref<256x288xf32, #tpu.memory_space<vmem>>, vector<16x32xf32>
    tpu.vector_store %arg16[%c0_85, %c256_86], %153 {strides = array<i32>} : memref<256x288xf32, #tpu.memory_space<vmem>>, vector<16x32xf32>,
    %c0_87 = arith.constant 0 : index
    %c0_88 = arith.constant 0 : index
    %155 = vector.load %arg16[%c0_87, %c0_88] : memref<256x288xf32, #tpu.memory_space<vmem>>, vector<16x288xf32>
    %c0_89 = arith.constant 0 : index
    %c0_90 = arith.constant 0 : index
    %156 = vector.load %arg10[%c0_89, %c0_90] : memref<16x288xf32, #tpu.memory_space<vmem>>, vector<16x288xf32>
    %157 = arith.mulf %155, %156 : vector<16x288xf32>
    %158 = arith.truncf %157 : vector<16x288xf32> to vector<16x288xbf16>
    %c0_91 = arith.constant 0 : index
    %c0_92 = arith.constant 0 : index
    %159 = vector.load %arg8[%c0_91, %c0_92] : memref<288x32xbf16, #tpu.memory_space<vmem>>, vector<288x32xbf16>
    %cst_93 = arith.constant dense<0.000000e+00> : vector<16x32xf32>
    %160 = tpu.matmul %158, %159, %cst_93 {dimension_numbers = #tpu.dot_dimension_numbers<[1], [0], [0], [1], [0, 0, 1, 1], [], []>} : vector<16x288xbf16>, vector<288x32xbf16>, vector<16x32xf32> -> vector<16x32xf32>
    %c0_94 = arith.constant 0 : index
    %c0_95 = arith.constant 0 : index
    %161 = vector.load %arg9[%c0_94, %c0_95] : memref<1x32xf32, #tpu.memory_space<vmem>>, vector<1x32xf32>
    %162 = vector.broadcast %161 : vector<1x32xf32> to vector<16x32xf32>
    %163 = arith.addf %160, %162 : vector<16x32xf32>
    %cst_96 = arith.constant 0.000000e+00 : f32
    %164 = vector.broadcast %cst_96 : f32 to vector<16x32xf32>
    %165 = arith.maximumf %163, %164 : vector<16x32xf32>
    %166 = arith.truncf %165 : vector<16x32xf32> to vector<16x32xbf16>
    %c0_97 = arith.constant 0 : index
    %c0_98 = arith.constant 0 : index
    %c0_99 = arith.constant 0 : index
    %167 = vector.load %arg11[%c0_97, %c0_98, %c0_99] : memref<4x32x32xbf16, #tpu.memory_space<vmem>>, vector<1x32x32xbf16>
    %168 = vector.shape_cast %167 : vector<1x32x32xbf16> to vector<32x32xbf16>
    %cst_100 = arith.constant dense<0.000000e+00> : vector<16x32xf32>
    %169 = tpu.matmul %166, %168, %cst_100 {dimension_numbers = #tpu.dot_dimension_numbers<[1], [0], [0], [1], [0, 0, 1, 1], [], []>} : vector<16x32xbf16>, vector<32x32xbf16>, vector<16x32xf32> -> vector<16x32xf32>
    %c0_101 = arith.constant 0 : index
    %c0_102 = arith.constant 0 : index
    %170 = vector.load %arg12[%c0_101, %c0_102] : memref<1x32xf32, #tpu.memory_space<vmem>>, vector<1x32xf32>
    %171 = vector.broadcast %170 : vector<1x32xf32> to vector<16x32xf32>
    %172 = arith.addf %169, %171 : vector<16x32xf32>
    %cst_103 = arith.constant 0.000000e+00 : f32
    %173 = vector.broadcast %cst_103 : f32 to vector<16x32xf32>
    %174 = arith.maximumf %172, %173 : vector<16x32xf32>
    %c1 = arith.constant 1 : index
    %c0_104 = arith.constant 0 : index
    %c0_105 = arith.constant 0 : index
    %175 = vector.load %arg11[%c1, %c0_104, %c0_105] : memref<4x32x32xbf16, #tpu.memory_space<vmem>>, vector<1x32x32xbf16>
    %176 = vector.shape_cast %175 : vector<1x32x32xbf16> to vector<32x32xbf16>
    %cst_106 = arith.constant dense<0.000000e+00> : vector<16x32xf32>
    %177 = tpu.matmul %166, %176, %cst_106 {dimension_numbers = #tpu.dot_dimension_numbers<[1], [0], [0], [1], [0, 0, 1, 1], [], []>} : vector<16x32xbf16>, vector<32x32xbf16>, vector<16x32xf32> -> vector<16x32xf32>
    %c0_107 = arith.constant 0 : index
    %c0_108 = arith.constant 0 : index
    %178 = vector.load %arg12[%c0_107, %c0_108] : memref<1x32xf32, #tpu.memory_space<vmem>>, vector<1x32xf32>
    %179 = vector.broadcast %178 : vector<1x32xf32> to vector<16x32xf32>
    %180 = arith.addf %177, %179 : vector<16x32xf32>
    %cst_109 = arith.constant 0.000000e+00 : f32
    %181 = vector.broadcast %cst_109 : f32 to vector<16x32xf32>
    %182 = arith.maximumf %180, %181 : vector<16x32xf32>
    %c2 = arith.constant 2 : index
    %c0_110 = arith.constant 0 : index
    %c0_111 = arith.constant 0 : index
    %183 = vector.load %arg11[%c2, %c0_110, %c0_111] : memref<4x32x32xbf16, #tpu.memory_space<vmem>>, vector<1x32x32xbf16>
    %184 = vector.shape_cast %183 : vector<1x32x32xbf16> to vector<32x32xbf16>
    %cst_112 = arith.constant dense<0.000000e+00> : vector<16x32xf32>
    %185 = tpu.matmul %166, %184, %cst_112 {dimension_numbers = #tpu.dot_dimension_numbers<[1], [0], [0], [1], [0, 0, 1, 1], [], []>} : vector<16x32xbf16>, vector<32x32xbf16>, vector<16x32xf32> -> vector<16x32xf32>
    %c0_113 = arith.constant 0 : index
    %c0_114 = arith.constant 0 : index
    %186 = vector.load %arg12[%c0_113, %c0_114] : memref<1x32xf32, #tpu.memory_space<vmem>>, vector<1x32xf32>
    %187 = vector.broadcast %186 : vector<1x32xf32> to vector<16x32xf32>
    %188 = arith.addf %185, %187 : vector<16x32xf32>
    %cst_115 = arith.constant 0.000000e+00 : f32
    %189 = vector.broadcast %cst_115 : f32 to vector<16x32xf32>
    %190 = arith.maximumf %188, %189 : vector<16x32xf32>
    %c3 = arith.constant 3 : index
    %c0_116 = arith.constant 0 : index
    %c0_117 = arith.constant 0 : index
    %191 = vector.load %arg11[%c3, %c0_116, %c0_117] : memref<4x32x32xbf16, #tpu.memory_space<vmem>>, vector<1x32x32xbf16>
    %192 = vector.shape_cast %191 : vector<1x32x32xbf16> to vector<32x32xbf16>
    %cst_118 = arith.constant dense<0.000000e+00> : vector<16x32xf32>
    %193 = tpu.matmul %166, %192, %cst_118 {dimension_numbers = #tpu.dot_dimension_numbers<[1], [0], [0], [1], [0, 0, 1, 1], [], []>} : vector<16x32xbf16>, vector<32x32xbf16>, vector<16x32xf32> -> vector<16x32xf32>
    %c0_119 = arith.constant 0 : index
    %c0_120 = arith.constant 0 : index
    %194 = vector.load %arg12[%c0_119, %c0_120] : memref<1x32xf32, #tpu.memory_space<vmem>>, vector<1x32xf32>
    %195 = vector.broadcast %194 : vector<1x32xf32> to vector<16x32xf32>
    %196 = arith.addf %193, %195 : vector<16x32xf32>
    %cst_121 = arith.constant 0.000000e+00 : f32
    %197 = vector.broadcast %cst_121 : f32 to vector<16x32xf32>
    %198 = arith.maximumf %196, %197 : vector<16x32xf32>
    %199 = tpu.concatenate %174, %182, %190, %198 in 0 : vector<16x32xf32>, vector<16x32xf32>, vector<16x32xf32>, vector<16x32xf32> -> vector<64x32xf32>
    %200 = arith.truncf %199 : vector<64x32xf32> to vector<64x32xbf16>
    %c0_122 = arith.constant 0 : index
    %c0_123 = arith.constant 0 : index
    %201 = vector.load %arg13[%c0_122, %c0_123] : memref<32x12xbf16, #tpu.memory_space<vmem>>, vector<32x12xbf16>
    %cst_124 = arith.constant dense<0.000000e+00> : vector<64x12xf32>
    %202 = tpu.matmul %200, %201, %cst_124 {dimension_numbers = #tpu.dot_dimension_numbers<[1], [0], [0], [1], [0, 0, 1, 1], [], []>} : vector<64x32xbf16>, vector<32x12xbf16>, vector<64x12xf32> -> vector<64x12xf32>
    %c0_125 = arith.constant 0 : index
    %c0_126 = arith.constant 0 : index
    %203 = vector.load %arg14[%c0_125, %c0_126] : memref<1x12xf32, #tpu.memory_space<vmem>>, vector<1x12xf32>
    %204 = vector.broadcast %203 : vector<1x12xf32> to vector<64x12xf32>
    %205 = arith.addf %202, %204 : vector<64x12xf32>
    %206 = vector.extract_strided_slice %205 {offsets = [0, 0], sizes = [64, 3], strides = [1, 1]} : vector<64x12xf32> to vector<64x3xf32>
    %cst_127 = arith.constant dense<0xFF800000> : vector<64xf32>
    %207 = vector.multi_reduction <maximumf>, %206, %cst_127 [1] : vector<64x3xf32> to vector<64xf32>
    %208 = vector.shape_cast %207 : vector<64xf32> to vector<64x1xf32>
    %209 = vector.broadcast %208 : vector<64x1xf32> to vector<64x3xf32>
    %210 = arith.subf %206, %209 : vector<64x3xf32>
    %211 = math.exp %210 : vector<64x3xf32>
    %cst_128 = arith.constant dense<0.000000e+00> : vector<64xf32>
    %212 = vector.multi_reduction <add>, %211, %cst_128 [1] : vector<64x3xf32> to vector<64xf32>
    %213 = vector.shape_cast %212 : vector<64xf32> to vector<64x1xf32>
    %214 = vector.broadcast %213 : vector<64x1xf32> to vector<64x3xf32>
    %215 = arith.divf %211, %214 : vector<64x3xf32>
    %c0_129 = arith.constant 0 : index
    %c0_130 = arith.constant 0 : index
    %c0_131 = arith.constant 0 : index
    %216 = vector.load %arg15[%c0_129, %c0_130, %c0_131] : memref<1x64x12xf32, #tpu.memory_space<vmem>>, vector<1x64x3xf32>
    %217 = vector.shape_cast %216 : vector<1x64x3xf32> to vector<64x3xf32>
    %218 = vector.shape_cast %215 : vector<64x3xf32> to vector<1x64x3xf32>
    tpu.vector_store %arg15[%c0_129, %c0_130, %c0_131], %218 {strides = array<i32>} : memref<1x64x12xf32, #tpu.memory_space<vmem>>, vector<1x64x3xf32>,
    %219 = vector.extract_strided_slice %205 {offsets = [0, 3], sizes = [64, 3], strides = [1, 1]} : vector<64x12xf32> to vector<64x3xf32>
    %cst_132 = arith.constant dense<0xFF800000> : vector<64xf32>
    %220 = vector.multi_reduction <maximumf>, %219, %cst_132 [1] : vector<64x3xf32> to vector<64xf32>
    %221 = vector.shape_cast %220 : vector<64xf32> to vector<64x1xf32>
    %222 = vector.broadcast %221 : vector<64x1xf32> to vector<64x3xf32>
    %223 = arith.subf %219, %222 : vector<64x3xf32>
    %224 = math.exp %223 : vector<64x3xf32>
    %cst_133 = arith.constant dense<0.000000e+00> : vector<64xf32>
    %225 = vector.multi_reduction <add>, %224, %cst_133 [1] : vector<64x3xf32> to vector<64xf32>
    %226 = vector.shape_cast %225 : vector<64xf32> to vector<64x1xf32>
    %227 = vector.broadcast %226 : vector<64x1xf32> to vector<64x3xf32>
    %228 = arith.divf %224, %227 : vector<64x3xf32>
    %c0_134 = arith.constant 0 : index
    %c0_135 = arith.constant 0 : index
    %c3_136 = arith.constant 3 : index
    %229 = vector.load %arg15[%c0_134, %c0_135, %c3_136] : memref<1x64x12xf32, #tpu.memory_space<vmem>>, vector<1x64x3xf32>
    %230 = vector.shape_cast %229 : vector<1x64x3xf32> to vector<64x3xf32>
    %231 = vector.shape_cast %228 : vector<64x3xf32> to vector<1x64x3xf32>
    tpu.vector_store %arg15[%c0_134, %c0_135, %c3_136], %231 {strides = array<i32>} : memref<1x64x12xf32, #tpu.memory_space<vmem>>, vector<1x64x3xf32>,
    %232 = vector.extract_strided_slice %205 {offsets = [0, 6], sizes = [64, 3], strides = [1, 1]} : vector<64x12xf32> to vector<64x3xf32>
    %cst_137 = arith.constant dense<0xFF800000> : vector<64xf32>
    %233 = vector.multi_reduction <maximumf>, %232, %cst_137 [1] : vector<64x3xf32> to vector<64xf32>
    %234 = vector.shape_cast %233 : vector<64xf32> to vector<64x1xf32>
    %235 = vector.broadcast %234 : vector<64x1xf32> to vector<64x3xf32>
    %236 = arith.subf %232, %235 : vector<64x3xf32>
    %237 = math.exp %236 : vector<64x3xf32>
    %cst_138 = arith.constant dense<0.000000e+00> : vector<64xf32>
    %238 = vector.multi_reduction <add>, %237, %cst_138 [1] : vector<64x3xf32> to vector<64xf32>
    %239 = vector.shape_cast %238 : vector<64xf32> to vector<64x1xf32>
    %240 = vector.broadcast %239 : vector<64x1xf32> to vector<64x3xf32>
    %241 = arith.divf %237, %240 : vector<64x3xf32>
    %c0_139 = arith.constant 0 : index
    %c0_140 = arith.constant 0 : index
    %c6 = arith.constant 6 : index
    %242 = vector.load %arg15[%c0_139, %c0_140, %c6] : memref<1x64x12xf32, #tpu.memory_space<vmem>>, vector<1x64x3xf32>
    %243 = vector.shape_cast %242 : vector<1x64x3xf32> to vector<64x3xf32>
    %244 = vector.shape_cast %241 : vector<64x3xf32> to vector<1x64x3xf32>
    tpu.vector_store %arg15[%c0_139, %c0_140, %c6], %244 {strides = array<i32>} : memref<1x64x12xf32, #tpu.memory_space<vmem>>, vector<1x64x3xf32>,
    %245 = vector.extract_strided_slice %205 {offsets = [0, 9], sizes = [64, 3], strides = [1, 1]} : vector<64x12xf32> to vector<64x3xf32>
    %cst_141 = arith.constant dense<0xFF800000> : vector<64xf32>
    %246 = vector.multi_reduction <maximumf>, %245, %cst_141 [1] : vector<64x3xf32> to vector<64xf32>
    %247 = vector.shape_cast %246 : vector<64xf32> to vector<64x1xf32>
    %248 = vector.broadcast %247 : vector<64x1xf32> to vector<64x3xf32>
    %249 = arith.subf %245, %248 : vector<64x3xf32>
    %250 = math.exp %249 : vector<64x3xf32>
    %cst_142 = arith.constant dense<0.000000e+00> : vector<64xf32>
    %251 = vector.multi_reduction <add>, %250, %cst_142 [1] : vector<64x3xf32> to vector<64xf32>
    %252 = vector.shape_cast %251 : vector<64xf32> to vector<64x1xf32>
    %253 = vector.broadcast %252 : vector<64x1xf32> to vector<64x3xf32>
    %254 = arith.divf %250, %253 : vector<64x3xf32>
    %c0_143 = arith.constant 0 : index
    %c0_144 = arith.constant 0 : index
    %c9 = arith.constant 9 : index
    %255 = vector.load %arg15[%c0_143, %c0_144, %c9] : memref<1x64x12xf32, #tpu.memory_space<vmem>>, vector<1x64x3xf32>
    %256 = vector.shape_cast %255 : vector<1x64x3xf32> to vector<64x3xf32>
    %257 = vector.shape_cast %254 : vector<64x3xf32> to vector<1x64x3xf32>
    tpu.vector_store %arg15[%c0_143, %c0_144, %c9], %257 {strides = array<i32>} : memref<1x64x12xf32, #tpu.memory_space<vmem>>, vector<1x64x3xf32>,
    return
  }
  func.func @transform_0(%arg0: i32) -> (i32, i32, i32) {
    %c0_i32 = arith.constant 0 : i32
    %c0_i32_0 = arith.constant 0 : i32
    %c0_i32_1 = arith.constant 0 : i32
    return %arg0, %c0_i32, %c0_i32_0 : i32, i32, i32
  }
  func.func @transform_1(%arg0: i32) -> (i32, i32) {
    %c0_i32 = arith.constant 0 : i32
    %c0_i32_0 = arith.constant 0 : i32
    %c0_i32_1 = arith.constant 0 : i32
    return %c0_i32, %c0_i32_0 : i32, i32
  }
  func.func @transform_2(%arg0: i32) -> (i32, i32) {
    %c0_i32 = arith.constant 0 : i32
    %c0_i32_0 = arith.constant 0 : i32
    %c0_i32_1 = arith.constant 0 : i32
    return %c0_i32, %c0_i32_0 : i32, i32
  }
  func.func @transform_3(%arg0: i32) -> (i32, i32) {
    %c0_i32 = arith.constant 0 : i32
    %c0_i32_0 = arith.constant 0 : i32
    %c0_i32_1 = arith.constant 0 : i32
    return %c0_i32, %c0_i32_0 : i32, i32
  }
  func.func @transform_4(%arg0: i32) -> (i32, i32) {
    %c0_i32 = arith.constant 0 : i32
    %c0_i32_0 = arith.constant 0 : i32
    %c0_i32_1 = arith.constant 0 : i32
    return %c0_i32, %c0_i32_0 : i32, i32
  }
  func.func @transform_5(%arg0: i32) -> (i32, i32) {
    %c0_i32 = arith.constant 0 : i32
    %c0_i32_0 = arith.constant 0 : i32
    %c0_i32_1 = arith.constant 0 : i32
    return %c0_i32, %c0_i32_0 : i32, i32
  }
  func.func @transform_6(%arg0: i32) -> (i32, i32) {
    %c0_i32 = arith.constant 0 : i32
    %c0_i32_0 = arith.constant 0 : i32
    %c0_i32_1 = arith.constant 0 : i32
    return %c0_i32, %c0_i32_0 : i32, i32
  }
  func.func @transform_7(%arg0: i32) -> (i32, i32) {
    %c0_i32 = arith.constant 0 : i32
    %c0_i32_0 = arith.constant 0 : i32
    %c0_i32_1 = arith.constant 0 : i32
    return %c0_i32, %c0_i32_0 : i32, i32
  }
  func.func @transform_8(%arg0: i32) -> (i32, i32) {
    %c0_i32 = arith.constant 0 : i32
    %c0_i32_0 = arith.constant 0 : i32
    %c0_i32_1 = arith.constant 0 : i32
    return %c0_i32, %c0_i32_0 : i32, i32
  }
  func.func @transform_9(%arg0: i32) -> (i32, i32) {
    %c0_i32 = arith.constant 0 : i32
    %c0_i32_0 = arith.constant 0 : i32
    %c0_i32_1 = arith.constant 0 : i32
    return %c0_i32, %c0_i32_0 : i32, i32
  }
  func.func @transform_10(%arg0: i32) -> (i32, i32, i32) {
    %c0_i32 = arith.constant 0 : i32
    %c0_i32_0 = arith.constant 0 : i32
    %c0_i32_1 = arith.constant 0 : i32
    %c0_i32_2 = arith.constant 0 : i32
    return %c0_i32, %c0_i32_0, %c0_i32_1 : i32, i32, i32
  }
  func.func @transform_11(%arg0: i32) -> (i32, i32) {
    %c0_i32 = arith.constant 0 : i32
    %c0_i32_0 = arith.constant 0 : i32
    %c0_i32_1 = arith.constant 0 : i32
    return %c0_i32, %c0_i32_0 : i32, i32
  }
  func.func @transform_12(%arg0: i32) -> (i32, i32) {
    %c0_i32 = arith.constant 0 : i32
    %c0_i32_0 = arith.constant 0 : i32
    %c0_i32_1 = arith.constant 0 : i32
    return %c0_i32, %c0_i32_0 : i32, i32
  }
  func.func @transform_13(%arg0: i32) -> (i32, i32) {
    %c0_i32 = arith.constant 0 : i32
    %c0_i32_0 = arith.constant 0 : i32
    %c0_i32_1 = arith.constant 0 : i32
    return %c0_i32, %c0_i32_0 : i32, i32
  }
  func.func @transform_14(%arg0: i32) -> (i32, i32, i32) {
    %c0_i32 = arith.constant 0 : i32
    %c0_i32_0 = arith.constant 0 : i32
    %c0_i32_1 = arith.constant 0 : i32
    return %arg0, %c0_i32, %c0_i32_0 : i32, i32, i32
  }
}

</mosaic_0001>

<llo_original>
// kernel: _forward_jit.1
$region0: #{_forward_jit.1}
  #allocation0 [shape = 'u32[]', space=smem, size = 0x4, offset = 0x4, fixed_abs, tag = 'smem constant byte address 0x4 - core index']
  #allocation1 [shape = 'u32[72,128]{1,0:T(1,128)}', space=vmem, size = 0x9000, scoped, tag = 'internal scratch']
  #allocation2 [shape = 'f32[256,288]{1,0:T(8,128)}', space=vmem, size = 0x60000, scoped, tag = 'scratch operand']
  #allocation3 [shape = 'f32[256,32]{1,0:T(8,128)}', space=vmem, size = 0x20000, scoped, tag = 'scratch operand']
  %s0 = inlined_call_operand.vmem [shape: f32[2,256,4], index: 0, kind: input, shape index: {}]
  %s1 = inlined_call_operand.vmem [shape: bf16[36,32], index: 1, kind: input, shape index: {}]
  %s2 = inlined_call_operand.vmem [shape: f32[1,32], index: 2, kind: input, shape index: {}]
  %s3 = inlined_call_operand.vmem [shape: f32[256,36], index: 3, kind: input, shape index: {}]
  %s4 = inlined_call_operand.vmem [shape: bf16[288,32], index: 4, kind: input, shape index: {}]
  %s5 = inlined_call_operand.vmem [shape: f32[1,32], index: 5, kind: input, shape index: {}]
  %s6 = inlined_call_operand.vmem [shape: f32[64,288], index: 6, kind: input, shape index: {}]
  %s7 = inlined_call_operand.vmem [shape: bf16[288,32], index: 7, kind: input, shape index: {}]
  %s8 = inlined_call_operand.vmem [shape: f32[1,32], index: 8, kind: input, shape index: {}]
  %s9 = inlined_call_operand.vmem [shape: f32[16,288], index: 9, kind: input, shape index: {}]
  %s10 = inlined_call_operand.vmem [shape: bf16[4,32,32], index: 10, kind: input, shape index: {}]
  %s11 = inlined_call_operand.vmem [shape: f32[1,32], index: 11, kind: input, shape index: {}]
  %s12 = inlined_call_operand.vmem [shape: bf16[32,12], index: 12, kind: input, shape index: {}]
  %s13 = inlined_call_operand.vmem [shape: f32[1,12], index: 13, kind: input, shape index: {}]
  %s14 = inlined_call_operand.vmem [shape: f32[2,64,12], index: 14, kind: output, shape index: {}]
  %s15 = sld [smem:[#allocation0]]
  $region89: #{_forward_jit.1} parent=0
    _
  %s17 = ssub.s32 1, %s15
  %s18 = scalar_select 0, %s17, %s15
  loop: start=0, step=1, limit=4
  $region2: #{_forward_jit.1} parent=0 // loop_pre_header
    _
  $region3: #{_forward_jit.1} parent=0 // loop_header
    %s20 = sphi 0, %s24
    %p21 = scmp.ge.s32.totalorder %s20, 4
    %s30 = sphi 0, %s32
    %s33 = sphi 0, %s30
    %s34 = sphi 0, %s33
    %s50 = sphi 0, %s34
    %s54 = sphi 0, %s54
    %s56 = sphi 0, %s54
    %s57 = sphi 0, %s56
    %s71 = sphi 0, %s57
    %s75 = sphi 0, %s75
    %s77 = sphi 0, %s75
    %s78 = sphi 0, %s77
    %s92 = sphi 0, %s78
    %s96 = sphi 0, %s96
    %s98 = sphi 0, %s96
    %s99 = sphi 0, %s98
    %s113 = sphi 0, %s99
    %s117 = sphi 0, %s117
    %s119 = sphi 0, %s117
    %s120 = sphi 0, %s119
    %s134 = sphi 0, %s120
    %s138 = sphi 0, %s138
    %s140 = sphi 0, %s138
    %s141 = sphi 0, %s140
    %s155 = sphi 0, %s141
    %s159 = sphi 0, %s159
    %s161 = sphi 0, %s159
    %s162 = sphi 0, %s161
    %s176 = sphi 0, %s162
    %s180 = sphi 0, %s180
    %s182 = sphi 0, %s180
    %s183 = sphi 0, %s182
    %s197 = sphi 0, %s183
    %s201 = sphi 0, %s201
    %s203 = sphi 0, %s201
    %s204 = sphi 0, %s203
    %s218 = sphi 0, %s204
    %s222 = sphi 0, %s222
    %s224 = sphi 0, %s222
    %s225 = sphi 0, %s224
    %s239 = sphi 0, %s225
    %s243 = sphi 0, %s243
    %s245 = sphi 0, %s243
    %s246 = sphi 0, %s245
    %s260 = sphi 0, %s246
    %s264 = sphi 0, %s264
    %s266 = sphi 0, %s264
    %s267 = sphi 0, %s266
    %s281 = sphi 0, %s267
    %s285 = sphi 0, %s285
    %s287 = sphi 0, %s285
    %s288 = sphi 0, %s287
    %s302 = sphi 0, %s288
    %s306 = sphi 0, %s306
    %s308 = sphi 0, %s306
    %s309 = sphi 0, %s308
    %s323 = sphi 0, %s309
    %s329 = sphi 0, %s331
    %s332 = sphi 0, %s329
    %s333 = sphi 0, %s332
    %s349 = sphi 0, %s333
  $region4: #{_forward_jit.1} parent=0 // loop_header_branch
    %23 = sbr.rel (%p21) target = $region8
  $region5: #{_forward_jit.1} parent=0 // loop_body
    %s25 = ssub.s32 %s20, 1
    %s26 = ssub.s32 %s20, 2
    %s27 = sadd.s32 %s20, 1
    %s28 = ssub.s32 %s20, %s27
    %p29 = scmp.eq.s32.totalorder %s28, 0
    %s31 = sadd.s32 %s30, 1
    %s32 = scalar_select %p29, %s30, %s31
    %p35 = pneg %p29
    %p36 = scmp.eq.s32.totalorder %s20, 1
    %p37 = por %p35, %p36
    %p38 = scmp.ne.s32.totalorder %s30, %s33
    %p39 = scmp.eq.s32.totalorder %s20, 0
    %p40 = por %p38, %p39
    %p41 = scmp.ne.s32.totalorder %s30, %s33
    %p42 = scmp.eq.s32.totalorder %s25, 1
    %p43 = por %p41, %p42
    %p44 = scmp.ne.s32.totalorder %s33, %s34
    %p45 = scmp.eq.s32.totalorder %s25, 0
    %p46 = por %p44, %p45
    %p47 = scmp.ne.s32.totalorder %s33, %s34
    %p48 = scmp.eq.s32.totalorder %s26, 1
    %p49 = por %p47, %p48
    %p51 = scmp.ne.s32.totalorder %s34, %s50
    %p52 = scmp.eq.s32.totalorder %s26, 0
    %p53 = por %p51, %p52
    %s55 = sadd.s32 %s54, 1
    %p58 = scmp.eq.s32.totalorder %s20, 1
    %p59 = scmp.ne.s32.totalorder %s54, %s56
    %p60 = scmp.eq.s32.totalorder %s20, 0
    %p61 = por %p59, %p60
    %p62 = scmp.ne.s32.totalorder %s54, %s56
    %p63 = scmp.eq.s32.totalorder %s25, 1
    %p64 = por %p62, %p63
    %p65 = scmp.ne.s32.totalorder %s56, %s57
    %p66 = scmp.eq.s32.totalorder %s25, 0
    %p67 = por %p65, %p66
    %p68 = scmp.ne.s32.totalorder %s56, %s57
    %p69 = scmp.eq.s32.totalorder %s26, 1
    %p70 = por %p68, %p69
    %p72 = scmp.ne.s32.totalorder %s57, %s71
    %p73 = scmp.eq.s32.totalorder %s26, 0
    %p74 = por %p72, %p73
    %s76 = sadd.s32 %s75, 1
    %p79 = scmp.eq.s32.totalorder %s20, 1
    %p80 = scmp.ne.s32.totalorder %s75, %s77
    %p81 = scmp.eq.s32.totalorder %s20, 0
    %p82 = por %p80, %p81
    %p83 = scmp.ne.s32.totalorder %s75, %s77
    %p84 = scmp.eq.s32.totalorder %s25, 1
    %p85 = por %p83, %p84
    %p86 = scmp.ne.s32.totalorder %s77, %s78
    %p87 = scmp.eq.s32.totalorder %s25, 0
    %p88 = por %p86, %p87
    %p89 = scmp.ne.s32.totalorder %s77, %s78
    %p90 = scmp.eq.s32.totalorder %s26, 1
    %p91 = por %p89, %p90
    %p93 = scmp.ne.s32.totalorder %s78, %s92
    %p94 = scmp.eq.s32.totalorder %s26, 0
    %p95 = por %p93, %p94
    %s97 = sadd.s32 %s96, 1
    %p100 = scmp.eq.s32.totalorder %s20, 1
    %p101 = scmp.ne.s32.totalorder %s96, %s98
    %p102 = scmp.eq.s32.totalorder %s20, 0
    %p103 = por %p101, %p102
    %p104 = scmp.ne.s32.totalorder %s96, %s98
    %p105 = scmp.eq.s32.totalorder %s25, 1
    %p106 = por %p104, %p105
    %p107 = scmp.ne.s32.totalorder %s98, %s99
    %p108 = scmp.eq.s32.totalorder %s25, 0
    %p109 = por %p107, %p108
    %p110 = scmp.ne.s32.totalorder %s98, %s99
    %p111 = scmp.eq.s32.totalorder %s26, 1
    %p112 = por %p110, %p111
    %p114 = scmp.ne.s32.totalorder %s99, %s113
    %p115 = scmp.eq.s32.totalorder %s26, 0
    %p116 = por %p114, %p115
    %s118 = sadd.s32 %s117, 1
    %p121 = scmp.eq.s32.totalorder %s20, 1
    %p122 = scmp.ne.s32.totalorder %s117, %s119
    %p123 = scmp.eq.s32.totalorder %s20, 0
    %p124 = por %p122, %p123
    %p125 = scmp.ne.s32.totalorder %s117, %s119
    %p126 = scmp.eq.s32.totalorder %s25, 1
    %p127 = por %p125, %p126
    %p128 = scmp.ne.s32.totalorder %s119, %s120
    %p129 = scmp.eq.s32.totalorder %s25, 0
    %p130 = por %p128, %p129
    %p131 = scmp.ne.s32.totalorder %s119, %s120
    %p132 = scmp.eq.s32.totalorder %s26, 1
    %p133 = por %p131, %p132
    %p135 = scmp.ne.s32.totalorder %s120, %s134
    %p136 = scmp.eq.s32.totalorder %s26, 0
    %p137 = por %p135, %p136
    %s139 = sadd.s32 %s138, 1
    %p142 = scmp.eq.s32.totalorder %s20, 1
    %p143 = scmp.ne.s32.totalorder %s138, %s140
    %p144 = scmp.eq.s32.totalorder %s20, 0
    %p145 = por %p143, %p144
    %p146 = scmp.ne.s32.totalorder %s138, %s140
    %p147 = scmp.eq.s32.totalorder %s25, 1
    %p148 = por %p146, %p147
    %p149 = scmp.ne.s32.totalorder %s140, %s141
    %p150 = scmp.eq.s32.totalorder %s25, 0
    %p151 = por %p149, %p150
    %p152 = scmp.ne.s32.totalorder %s140, %s141
    %p153 = scmp.eq.s32.totalorder %s26, 1
    %p154 = por %p152, %p153
    %p156 = scmp.ne.s32.totalorder %s141, %s155
    %p157 = scmp.eq.s32.totalorder %s26, 0
    %p158 = por %p156, %p157
    %s160 = sadd.s32 %s159, 1
    %p163 = scmp.eq.s32.totalorder %s20, 1
    %p164 = scmp.ne.s32.totalorder %s159, %s161
    %p165 = scmp.eq.s32.totalorder %s20, 0
    %p166 = por %p164, %p165
    %p167 = scmp.ne.s32.totalorder %s159, %s161
    %p168 = scmp.eq.s32.totalorder %s25, 1
    %p169 = por %p167, %p168
    %p170 = scmp.ne.s32.totalorder %s161, %s162
    %p171 = scmp.eq.s32.totalorder %s25, 0
    %p172 = por %p170, %p171
    %p173 = scmp.ne.s32.totalorder %s161, %s162
    %p174 = scmp.eq.s32.totalorder %s26, 1
    %p175 = por %p173, %p174
    %p177 = scmp.ne.s32.totalorder %s162, %s176
    %p178 = scmp.eq.s32.totalorder %s26, 0
    %p179 = por %p177, %p178
    %s181 = sadd.s32 %s180, 1
    %p184 = scmp.eq.s32.totalorder %s20, 1
    %p185 = scmp.ne.s32.totalorder %s180, %s182
    %p186 = scmp.eq.s32.totalorder %s20, 0
    %p187 = por %p185, %p186
    %p188 = scmp.ne.s32.totalorder %s180, %s182
    %p189 = scmp.eq.s32.totalorder %s25, 1
    %p190 = por %p188, %p189
    %p191 = scmp.ne.s32.totalorder %s182, %s183
    %p192 = scmp.eq.s32.totalorder %s25, 0
    %p193 = por %p191, %p192
    %p194 = scmp.ne.s32.totalorder %s182, %s183
    %p195 = scmp.eq.s32.totalorder %s26, 1
    %p196 = por %p194, %p195
    %p198 = scmp.ne.s32.totalorder %s183, %s197
    %p199 = scmp.eq.s32.totalorder %s26, 0
    %p200 = por %p198, %p199
    %s202 = sadd.s32 %s201, 1
    %p205 = scmp.eq.s32.totalorder %s20, 1
    %p206 = scmp.ne.s32.totalorder %s201, %s203
    %p207 = scmp.eq.s32.totalorder %s20, 0
    %p208 = por %p206, %p207
    %p209 = scmp.ne.s32.totalorder %s201, %s203
    %p210 = scmp.eq.s32.totalorder %s25, 1
    %p211 = por %p209, %p210
    %p212 = scmp.ne.s32.totalorder %s203, %s204
    %p213 = scmp.eq.s32.totalorder %s25, 0
    %p214 = por %p212, %p213
    %p215 = scmp.ne.s32.totalorder %s203, %s204
    %p216 = scmp.eq.s32.totalorder %s26, 1
    %p217 = por %p215, %p216
    %p219 = scmp.ne.s32.totalorder %s204, %s218
    %p220 = scmp.eq.s32.totalorder %s26, 0
    %p221 = por %p219, %p220
    %s223 = sadd.s32 %s222, 1
    %p226 = scmp.eq.s32.totalorder %s20, 1
    %p227 = scmp.ne.s32.totalorder %s222, %s224
    %p228 = scmp.eq.s32.totalorder %s20, 0
    %p229 = por %p227, %p228
    %p230 = scmp.ne.s32.totalorder %s222, %s224
    %p231 = scmp.eq.s32.totalorder %s25, 1
    %p232 = por %p230, %p231
    %p233 = scmp.ne.s32.totalorder %s224, %s225
    %p234 = scmp.eq.s32.totalorder %s25, 0
    %p235 = por %p233, %p234
    %p236 = scmp.ne.s32.totalorder %s224, %s225
    %p237 = scmp.eq.s32.totalorder %s26, 1
    %p238 = por %p236, %p237
    %p240 = scmp.ne.s32.totalorder %s225, %s239
    %p241 = scmp.eq.s32.totalorder %s26, 0
    %p242 = por %p240, %p241
    %s244 = sadd.s32 %s243, 1
    %p247 = scmp.eq.s32.totalorder %s20, 1
    %p248 = scmp.ne.s32.totalorder %s243, %s245
    %p249 = scmp.eq.s32.totalorder %s20, 0
    %p250 = por %p248, %p249
    %p251 = scmp.ne.s32.totalorder %s243, %s245
    %p252 = scmp.eq.s32.totalorder %s25, 1
    %p253 = por %p251, %p252
    %p254 = scmp.ne.s32.totalorder %s245, %s246
    %p255 = scmp.eq.s32.totalorder %s25, 0
    %p256 = por %p254, %p255
    %p257 = scmp.ne.s32.totalorder %s245, %s246
    %p258 = scmp.eq.s32.totalorder %s26, 1
    %p259 = por %p257, %p258
    %p261 = scmp.ne.s32.totalorder %s246, %s260
    %p262 = scmp.eq.s32.totalorder %s26, 0
    %p263 = por %p261, %p262
    %s265 = sadd.s32 %s264, 1
    %p268 = scmp.eq.s32.totalorder %s20, 1
    %p269 = scmp.ne.s32.totalorder %s264, %s266
    %p270 = scmp.eq.s32.totalorder %s20, 0
    %p271 = por %p269, %p270
    %p272 = scmp.ne.s32.totalorder %s264, %s266
    %p273 = scmp.eq.s32.totalorder %s25, 1
    %p274 = por %p272, %p273
    %p275 = scmp.ne.s32.totalorder %s266, %s267
    %p276 = scmp.eq.s32.totalorder %s25, 0
    %p277 = por %p275, %p276
    %p278 = scmp.ne.s32.totalorder %s266, %s267
    %p279 = scmp.eq.s32.totalorder %s26, 1
    %p280 = por %p278, %p279
    %p282 = scmp.ne.s32.totalorder %s267, %s281
    %p283 = scmp.eq.s32.totalorder %s26, 0
    %p284 = por %p282, %p283
    %s286 = sadd.s32 %s285, 1
    %p289 = scmp.eq.s32.totalorder %s20, 1
    %p290 = scmp.ne.s32.totalorder %s285, %s287
    %p291 = scmp.eq.s32.totalorder %s20, 0
    %p292 = por %p290, %p291
    %p293 = scmp.ne.s32.totalorder %s285, %s287
    %p294 = scmp.eq.s32.totalorder %s25, 1
    %p295 = por %p293, %p294
    %p296 = scmp.ne.s32.totalorder %s287, %s288
    %p297 = scmp.eq.s32.totalorder %s25, 0
    %p298 = por %p296, %p297
    %p299 = scmp.ne.s32.totalorder %s287, %s288
    %p300 = scmp.eq.s32.totalorder %s26, 1
    %p301 = por %p299, %p300
    %p303 = scmp.ne.s32.totalorder %s288, %s302
    %p304 = scmp.eq.s32.totalorder %s26, 0
    %p305 = por %p303, %p304
    %s307 = sadd.s32 %s306, 1
    %p310 = scmp.eq.s32.totalorder %s20, 1
    %p311 = scmp.ne.s32.totalorder %s306, %s308
    %p312 = scmp.eq.s32.totalorder %s20, 0
    %p313 = por %p311, %p312
    %p314 = scmp.ne.s32.totalorder %s306, %s308
    %p315 = scmp.eq.s32.totalorder %s25, 1
    %p316 = por %p314, %p315
    %p317 = scmp.ne.s32.totalorder %s308, %s309
    %p318 = scmp.eq.s32.totalorder %s25, 0
    %p319 = por %p317, %p318
    %p320 = scmp.ne.s32.totalorder %s308, %s309
    %p321 = scmp.eq.s32.totalorder %s26, 1
    %p322 = por %p320, %p321
    %p324 = scmp.ne.s32.totalorder %s309, %s323
    %p325 = scmp.eq.s32.totalorder %s26, 0
    %p326 = por %p324, %p325
    %s327 = ssub.s32 %s20, %s27
    %p328 = scmp.eq.s32.totalorder %s327, 0
    %s330 = sadd.s32 %s329, 1
    %s331 = scalar_select %p328, %s329, %s330
    %p334 = pneg %p328
    %p335 = scmp.eq.s32.totalorder %s20, 1
    %p336 = por %p334, %p335
    %p337 = scmp.ne.s32.totalorder %s329, %s332
    %p338 = scmp.eq.s32.totalorder %s20, 0
    %p339 = por %p337, %p338
    %p340 = scmp.ne.s32.totalorder %s329, %s332
    %p341 = scmp.eq.s32.totalorder %s25, 1
    %p342 = por %p340, %p341
    %p343 = scmp.ne.s32.totalorder %s332, %s333
    %p344 = scmp.eq.s32.totalorder %s25, 0
    %p345 = por %p343, %p344
    %p346 = scmp.ne.s32.totalorder %s332, %s333
    %p347 = scmp.eq.s32.totalorder %s26, 1
    %p348 = por %p346, %p347
    %p350 = scmp.ne.s32.totalorder %s333, %s349
    %p351 = scmp.eq.s32.totalorder %s26, 0
    %p352 = por %p350, %p351
    %p353 = scmp.le.s32.totalorder 1, %s20
    %p354 = scmp.lt.s32.totalorder %s20, 3
    %p355 = pnand %p353, %p354
    %p356 = pneg %p355
    // Predicated region
    $region9: #{_forward_jit.1} parent=5 // pred_check
      _
    $region10: #{_forward_jit.1} parent=5 // pred_check_branch
      %358 = sbr.rel (%p355) target = $region12
    $region11: #{_forward_jit.1} parent=5 // pred_region
      %s359 = ssub.s32 %s20, 1
      // Predicated region
      $region13: #{_forward_jit.1} parent=11 // pred_check
        %p360 = pneg %p67
      $region14: #{_forward_jit.1} parent=11 // pred_check_branch
        %362 = sbr.rel (%p360) target = $region16
      $region15: #{_forward_jit.1} parent=11 // pred_region
        _
      $region16: #{_forward_jit.1} parent=11 // pred_fallthru
        _
      // Predicated region
      $region17: #{_forward_jit.1} parent=11 // pred_check
        %p363 = pneg %p88
      $region18: #{_forward_jit.1} parent=11 // pred_check_branch
        %365 = sbr.rel (%p363) target = $region20
      $region19: #{_forward_jit.1} parent=11 // pred_region
        _
      $region20: #{_forward_jit.1} parent=11 // pred_fallthru
        _
      // Predicated region
      $region21: #{_forward_jit.1} parent=11 // pred_check
        %p366 = pneg %p109
      $region22: #{_forward_jit.1} parent=11 // pred_check_branch
        %368 = sbr.rel (%p366) target = $region24
      $region23: #{_forward_jit.1} parent=11 // pred_region
        _
      $region24: #{_forward_jit.1} parent=11 // pred_fallthru
        _
      // Predicated region
      $region25: #{_forward_jit.1} parent=11 // pred_check
        %p369 = pneg %p130
      $region26: #{_forward_jit.1} parent=11 // pred_check_branch
        %371 = sbr.rel (%p369) target = $region28
      $region27: #{_forward_jit.1} parent=11 // pred_region
        _
      $region28: #{_forward_jit.1} parent=11 // pred_fallthru
        _
      // Predicated region
      $region29: #{_forward_jit.1} parent=11 // pred_check
        %p372 = pneg %p151
      $region30: #{_forward_jit.1} parent=11 // pred_check_branch
        %374 = sbr.rel (%p372) target = $region32
      $region31: #{_forward_jit.1} parent=11 // pred_region
        _
      $region32: #{_forward_jit.1} parent=11 // pred_fallthru
        _
      // Predicated region
      $region33: #{_forward_jit.1} parent=11 // pred_check
        %p375 = pneg %p172
      $region34: #{_forward_jit.1} parent=11 // pred_check_branch
        %377 = sbr.rel (%p375) target = $region36
      $region35: #{_forward_jit.1} parent=11 // pred_region
        _
      $region36: #{_forward_jit.1} parent=11 // pred_fallthru
        _
      // Predicated region
      $region37: #{_forward_jit.1} parent=11 // pred_check
        %p378 = pneg %p193
      $region38: #{_forward_jit.1} parent=11 // pred_check_branch
        %380 = sbr.rel (%p378) target = $region40
      $region39: #{_forward_jit.1} parent=11 // pred_region
        _
      $region40: #{_forward_jit.1} parent=11 // pred_fallthru
        _
      // Predicated region
      $region41: #{_forward_jit.1} parent=11 // pred_check
        %p381 = pneg %p214
      $region42: #{_forward_jit.1} parent=11 // pred_check_branch
        %383 = sbr.rel (%p381) target = $region44
      $region43: #{_forward_jit.1} parent=11 // pred_region
        _
      $region44: #{_forward_jit.1} parent=11 // pred_fallthru
        _
      // Predicated region
      $region45: #{_forward_jit.1} parent=11 // pred_check
        %p384 = pneg %p235
      $region46: #{_forward_jit.1} parent=11 // pred_check_branch
        %386 = sbr.rel (%p384) target = $region48
      $region47: #{_forward_jit.1} parent=11 // pred_region
        _
      $region48: #{_forward_jit.1} parent=11 // pred_fallthru
        _
      // Predicated region
      $region49: #{_forward_jit.1} parent=11 // pred_check
        %p387 = pneg %p256
      $region50: #{_forward_jit.1} parent=11 // pred_check_branch
        %389 = sbr.rel (%p387) target = $region52
      $region51: #{_forward_jit.1} parent=11 // pred_region
        _
      $region52: #{_forward_jit.1} parent=11 // pred_fallthru
        _
      // Predicated region
      $region53: #{_forward_jit.1} parent=11 // pred_check
        %p390 = pneg %p277
      $region54: #{_forward_jit.1} parent=11 // pred_check_branch
        %392 = sbr.rel (%p390) target = $region56
      $region55: #{_forward_jit.1} parent=11 // pred_region
        _
      $region56: #{_forward_jit.1} parent=11 // pred_fallthru
        _
      // Predicated region
      $region57: #{_forward_jit.1} parent=11 // pred_check
        %p393 = pneg %p298
      $region58: #{_forward_jit.1} parent=11 // pred_check_branch
        %395 = sbr.rel (%p393) target = $region60
      $region59: #{_forward_jit.1} parent=11 // pred_region
        _
      $region60: #{_forward_jit.1} parent=11 // pred_fallthru
        _
      // Predicated region
      $region61: #{_forward_jit.1} parent=11 // pred_check
        %p396 = pneg %p319
      $region62: #{_forward_jit.1} parent=11 // pred_check_branch
        %398 = sbr.rel (%p396) target = $region64
      $region63: #{_forward_jit.1} parent=11 // pred_region
        _
      $region64: #{_forward_jit.1} parent=11 // pred_fallthru
        _
    $region12: #{_forward_jit.1} parent=5 // pred_fallthru
      _
    %p399 = scmp.lt.s32.totalorder %s20, 2
    // Predicated region
    $region65: #{_forward_jit.1} parent=5 // pred_check
      %p400 = pneg %p399
    $region66: #{_forward_jit.1} parent=5 // pred_check_branch
      %402 = sbr.rel (%p400) target = $region68
    $region67: #{_forward_jit.1} parent=5 // pred_region
      // Predicated region
      $region69: #{_forward_jit.1} parent=67 // pred_check
        %p403 = pneg %p40
      $region70: #{_forward_jit.1} parent=67 // pred_check_branch
        %405 = sbr.rel (%p403) target = $region72
      $region71: #{_forward_jit.1} parent=67 // pred_region
        %p406 = scmp.lt.s32.totalorder %s20, 1
        %s407 = scalar_select %p406, %s20, 1
        %s408 = smul.addr %s407, 32
        %s409 = smul.addr %s408, 8
        %s410 = scalar_lea.vmem %s0, %s409
      $region72: #{_forward_jit.1} parent=67 // pred_fallthru
        _
    $region68: #{_forward_jit.1} parent=5 // pred_fallthru
      _
    %p411 = scmp.le.s32.totalorder 1, %s20
    %p412 = scmp.lt.s32.totalorder %s20, 3
    %p413 = pnand %p411, %p412
    %p414 = pneg %p413
    // Predicated region
    $region73: #{_forward_jit.1} parent=5 // pred_check
      _
    $region74: #{_forward_jit.1} parent=5 // pred_check_branch
      %416 = sbr.rel (%p413) target = $region76
    $region75: #{_forward_jit.1} parent=5 // pred_region
      %s417 = ssub.s32 %s20, 1
      %p418 = scmp.lt.s32.totalorder %s25, 1
      %s419 = scalar_select %p418, %s25, 1
      %s420 = smul.addr %s419, 32
      %s421 = smul.addr %s420, 8
      %s422 = scalar_lea.vmem %s0, %s421
      %p423 = pneg %p46
      %p424 = pneg %p43
      %p425 = pneg %p67
      %p426 = pneg %p64
      %p427 = pneg %p88
      %p428 = pneg %p85
      %p429 = pneg %p109
      %p430 = pneg %p106
      %p431 = pneg %p130
      %p432 = pneg %p127
      %p433 = pneg %p151
      %p434 = pneg %p148
      %p435 = pneg %p172
      %p436 = pneg %p169
      %p437 = pneg %p193
      %p438 = pneg %p190
      %p439 = pneg %p214
      %p440 = pneg %p211
      %p441 = pneg %p235
      %p442 = pneg %p232
      %p443 = pneg %p256
      %p444 = pneg %p253
      %p445 = pneg %p277
      %p446 = pneg %p274
      %p447 = pneg %p298
      %p448 = pneg %p295
      %p449 = pneg %p319
      %p450 = pneg %p316
      %p451 = pneg %p345
      %p452 = pneg %p342
      %p453 = scmp.lt.s32.totalorder %s25, 1
      %s454 = scalar_select %p453, %s25, 1
      %s455 = smul.addr %s454, 8
      %s456 = smul.addr %s455, 8
      %s457 = scalar_lea.vmem %s14, %s456
      %p458 = scmp.lt.s32.totalorder %s25, 1
      %s459 = scalar_select %p458, %s25, 1
      %s460 = smul.addr %s459, 32
      %s461 = smul.addr %s460, 8
      %s462 = scalar_lea.vmem %s0, %s461
      %p463 = scmp.lt.s32.totalorder %s25, 1
      %s464 = scalar_select %p463, %s25, 1
      %s465 = smul.addr %s464, 8
      %s466 = smul.addr %s465, 8
      %s467 = scalar_lea.vmem %s14, %s466
      %v469 = vld [vmem:[%s462] sm:$0xff]
      %v470 = vld [vmem:[%s462 + $0x8] sm:$0xff]
      %v471 = vld [vmem:[%s462 + $0x10] sm:$0xff]
      %v472 = vld [vmem:[%s462 + $0x18] sm:$0xff]
      %v473 = vld [vmem:[%s462 + $0x20] sm:$0xff]
      %v474 = vld [vmem:[%s462 + $0x28] sm:$0xff]
      %v475 = vld [vmem:[%s462 + $0x30] sm:$0xff]
      %v476 = vld [vmem:[%s462 + $0x38] sm:$0xff]
      %v477 = vld [vmem:[%s462 + $0x40] sm:$0xff]
      %v478 = vld [vmem:[%s462 + $0x48] sm:$0xff]
      %v479 = vld [vmem:[%s462 + $0x50] sm:$0xff]
      %v480 = vld [vmem:[%s462 + $0x58] sm:$0xff]
      %v481 = vld [vmem:[%s462 + $0x60] sm:$0xff]
      %v482 = vld [vmem:[%s462 + $0x68] sm:$0xff]
      %v483 = vld [vmem:[%s462 + $0x70] sm:$0xff]
      %v484 = vld [vmem:[%s462 + $0x78] sm:$0xff]
      %v485 = vld [vmem:[%s462 + $0x80] sm:$0xff]
      %v486 = vld [vmem:[%s462 + $0x88] sm:$0xff]
      %v487 = vld [vmem:[%s462 + $0x90] sm:$0xff]
      %v488 = vld [vmem:[%s462 + $0x98] sm:$0xff]
      %v489 = vld [vmem:[%s462 + $0xa0] sm:$0xff]
      %v490 = vld [vmem:[%s462 + $0xa8] sm:$0xff]
      %v491 = vld [vmem:[%s462 + $0xb0] sm:$0xff]
      %v492 = vld [vmem:[%s462 + $0xb8] sm:$0xff]
      %v493 = vld [vmem:[%s462 + $0xc0] sm:$0xff]
      %v494 = vld [vmem:[%s462 + $0xc8] sm:$0xff]
      %v495 = vld [vmem:[%s462 + $0xd0] sm:$0xff]
      %v496 = vld [vmem:[%s462 + $0xd8] sm:$0xff]
      %v497 = vld [vmem:[%s462 + $0xe0] sm:$0xff]
      %v498 = vld [vmem:[%s462 + $0xe8] sm:$0xff]
      %v499 = vld [vmem:[%s462 + $0xf0] sm:$0xff]
      %v500 = vld [vmem:[%s462 + $0xf8] sm:$0xff]
      %vm504 = vcmask 1040384
      %v505 = vrot.slane %v498, 7
      %v506 = vrot.slane %v499, 7
      %v507 = vsel %vm504, %v505, %v506
      %v508 = vrot.slane %v500, 7
      %v509 = vsel %vm504, %v506, %v508
      %v542 = vrot.slane %v469, 7
      %v543 = vrot.slane %v470, 7
      %v544 = vsel %vm504, %v542, %v543
      %v545 = vrot.slane %v471, 7
      %v546 = vsel %vm504, %v543, %v545
      %v547 = vrot.slane %v472, 7
      %v548 = vsel %vm504, %v545, %v547
      %v549 = vrot.slane %v473, 7
      %v550 = vsel %vm504, %v547, %v549
      %v551 = vrot.slane %v474, 7
      %v552 = vsel %vm504, %v549, %v551
      %v553 = vrot.slane %v475, 7
      %v554 = vsel %vm504, %v551, %v553
      %v555 = vrot.slane %v476, 7
      %v556 = vsel %vm504, %v553, %v555
      %v557 = vrot.slane %v477, 7
      %v558 = vsel %vm504, %v555, %v557
      %v559 = vrot.slane %v478, 7
      %v560 = vsel %vm504, %v557, %v559
      %v561 = vrot.slane %v479, 7
      %v562 = vsel %vm504, %v559, %v561
      %v563 = vrot.slane %v480, 7
      %v564 = vsel %vm504, %v561, %v563
      %v565 = vrot.slane %v481, 7
      %v566 = vsel %vm504, %v563, %v565
      %v567 = vrot.slane %v482, 7
      %v568 = vsel %vm504, %v565, %v567
      %v569 = vrot.slane %v483, 7
      %v570 = vsel %vm504, %v567, %v569
      %v571 = vrot.slane %v484, 7
      %v572 = vsel %vm504, %v569, %v571
      %v573 = vrot.slane %v485, 7
      %v574 = vsel %vm504, %v571, %v573
      %v575 = vrot.slane %v486, 7
      %v576 = vsel %vm504, %v573, %v575
      %v577 = vrot.slane %v487, 7
      %v578 = vsel %vm504, %v575, %v577
      %v579 = vrot.slane %v488, 7
      %v580 = vsel %vm504, %v577, %v579
      %v581 = vrot.slane %v489, 7
      %v582 = vsel %vm504, %v579, %v581
      %v583 = vrot.slane %v490, 7
      %v584 = vsel %vm504, %v581, %v583
      %v585 = vrot.slane %v491, 7
      %v586 = vsel %vm504, %v583, %v585
      %v587 = vrot.slane %v492, 7
      %v588 = vsel %vm504, %v585, %v587
      %v589 = vrot.slane %v493, 7
      %v590 = vsel %vm504, %v587, %v589
      %v591 = vrot.slane %v494, 7
      %v592 = vsel %vm504, %v589, %v591
      %v593 = vrot.slane %v495, 7
      %v594 = vsel %vm504, %v591, %v593
      %v595 = vrot.slane %v496, 7
      %v596 = vsel %vm504, %v593, %v595
      %v597 = vrot.slane %v497, 7
      %v598 = vsel %vm504, %v595, %v597
      %v599 = vsel %vm504, %v597, %v505
      %v630 = vsel %vm504, %v508, %v542
      %vm631 = vcmask 31744
      %632 = vst.msk [vmem:[#allocation2] sm:$0xff] %vm631, %v507
      %633 = vst.msk [vmem:[#allocation2 + $0x18] sm:$0xff] %vm631, %v509
      %634 = vst.msk [vmem:[#allocation2 + $0x30] sm:$0xff] %vm631, %v630
      %635 = vst.msk [vmem:[#allocation2 + $0x48] sm:$0xff] %vm631, %v544
      %636 = vst.msk [vmem:[#allocation2 + $0x60] sm:$0xff] %vm631, %v546
      %637 = vst.msk [vmem:[#allocation2 + $0x78] sm:$0xff] %vm631, %v548
      %638 = vst.msk [vmem:[#allocation2 + $0x90] sm:$0xff] %vm631, %v550
      %639 = vst.msk [vmem:[#allocation2 + $0xa8] sm:$0xff] %vm631, %v552
      %640 = vst.msk [vmem:[#allocation2 + $0xc0] sm:$0xff] %vm631, %v554
      %641 = vst.msk [vmem:[#allocation2 + $0xd8] sm:$0xff] %vm631, %v556
      %642 = vst.msk [vmem:[#allocation2 + $0xf0] sm:$0xff] %vm631, %v558
      %643 = vst.msk [vmem:[#allocation2 + $0x108] sm:$0xff] %vm631, %v560
      %644 = vst.msk [vmem:[#allocation2 + $0x120] sm:$0xff] %vm631, %v562
      %645 = vst.msk [vmem:[#allocation2 + $0x138] sm:$0xff] %vm631, %v564
      %646 = vst.msk [vmem:[#allocation2 + $0x150] sm:$0xff] %vm631, %v566
      %647 = vst.msk [vmem:[#allocation2 + $0x168] sm:$0xff] %vm631, %v568
      %648 = vst.msk [vmem:[#allocation2 + $0x180] sm:$0xff] %vm631, %v570
      %649 = vst.msk [vmem:[#allocation2 + $0x198] sm:$0xff] %vm631, %v572
      %650 = vst.msk [vmem:[#allocation2 + $0x1b0] sm:$0xff] %vm631, %v574
      %651 = vst.msk [vmem:[#allocation2 + $0x1c8] sm:$0xff] %vm631, %v576
      %652 = vst.msk [vmem:[#allocation2 + $0x1e0] sm:$0xff] %vm631, %v578
      %653 = vst.msk [vmem:[#allocation2 + $0x1f8] sm:$0xff] %vm631, %v580
      %654 = vst.msk [vmem:[#allocation2 + $0x210] sm:$0xff] %vm631, %v582
      %655 = vst.msk [vmem:[#allocation2 + $0x228] sm:$0xff] %vm631, %v584
      %656 = vst.msk [vmem:[#allocation2 + $0x240] sm:$0xff] %vm631, %v586
      %657 = vst.msk [vmem:[#allocation2 + $0x258] sm:$0xff] %vm631, %v588
      %658 = vst.msk [vmem:[#allocation2 + $0x270] sm:$0xff] %vm631, %v590
      %659 = vst.msk [vmem:[#allocation2 + $0x288] sm:$0xff] %vm631, %v592
      %660 = vst.msk [vmem:[#allocation2 + $0x2a0] sm:$0xff] %vm631, %v594
      %661 = vst.msk [vmem:[#allocation2 + $0x2b8] sm:$0xff] %vm631, %v596
      %662 = vst.msk [vmem:[#allocation2 + $0x2d0] sm:$0xff] %vm631, %v598
      %663 = vst.msk [vmem:[#allocation2 + $0x2e8] sm:$0xff] %vm631, %v599
      %664 = vrot.lane.b32.xlu0 %v499, 4
      %v665 = vpop.permute.xlu0 %664
      %666 = vrot.lane.b32.xlu0 %v500, 4
      %v667 = vpop.permute.xlu0 %666
      %668 = vrot.lane.b32.xlu0 %v469, 4
      %v669 = vpop.permute.xlu0 %668
      %670 = vrot.lane.b32.xlu0 %v470, 4
      %v671 = vpop.permute.xlu0 %670
      %672 = vrot.lane.b32.xlu0 %v471, 4
      %v673 = vpop.permute.xlu0 %672
      %674 = vrot.lane.b32.xlu0 %v472, 4
      %v675 = vpop.permute.xlu0 %674
      %676 = vrot.lane.b32.xlu0 %v473, 4
      %v677 = vpop.permute.xlu0 %676
      %678 = vrot.lane.b32.xlu0 %v474, 4
      %v679 = vpop.permute.xlu0 %678
      %680 = vrot.lane.b32.xlu0 %v475, 4
      %v681 = vpop.permute.xlu0 %680
      %682 = vrot.lane.b32.xlu0 %v476, 4
      %v683 = vpop.permute.xlu0 %682
      %684 = vrot.lane.b32.xlu0 %v477, 4
      %v685 = vpop.permute.xlu0 %684
      %686 = vrot.lane.b32.xlu0 %v478, 4
      %v687 = vpop.permute.xlu0 %686
      %688 = vrot.lane.b32.xlu0 %v479, 4
      %v689 = vpop.permute.xlu0 %688
      %690 = vrot.lane.b32.xlu0 %v480, 4
      %v691 = vpop.permute.xlu0 %690
      %692 = vrot.lane.b32.xlu0 %v481, 4
      %v693 = vpop.permute.xlu0 %692
      %694 = vrot.lane.b32.xlu0 %v482, 4
      %v695 = vpop.permute.xlu0 %694
      %696 = vrot.lane.b32.xlu0 %v483, 4
      %v697 = vpop.permute.xlu0 %696
      %698 = vrot.lane.b32.xlu0 %v484, 4
      %v699 = vpop.permute.xlu0 %698
      %700 = vrot.lane.b32.xlu0 %v485, 4
      %v701 = vpop.permute.xlu0 %700
      %702 = vrot.lane.b32.xlu0 %v486, 4
      %v703 = vpop.permute.xlu0 %702
      %704 = vrot.lane.b32.xlu0 %v487, 4
      %v705 = vpop.permute.xlu0 %704
      %706 = vrot.lane.b32.xlu0 %v488, 4
      %v707 = vpop.permute.xlu0 %706
      %708 = vrot.lane.b32.xlu0 %v489, 4
      %v709 = vpop.permute.xlu0 %708
      %710 = vrot.lane.b32.xlu0 %v490, 4
      %v711 = vpop.permute.xlu0 %710
      %712 = vrot.lane.b32.xlu0 %v491, 4
      %v713 = vpop.permute.xlu0 %712
      %714 = vrot.lane.b32.xlu0 %v492, 4
      %v715 = vpop.permute.xlu0 %714
      %716 = vrot.lane.b32.xlu0 %v493, 4
      %v717 = vpop.permute.xlu0 %716
      %718 = vrot.lane.b32.xlu0 %v494, 4
      %v719 = vpop.permute.xlu0 %718
      %720 = vrot.lane.b32.xlu0 %v495, 4
      %v721 = vpop.permute.xlu0 %720
      %722 = vrot.lane.b32.xlu0 %v496, 4
      %v723 = vpop.permute.xlu0 %722
      %724 = vrot.lane.b32.xlu0 %v497, 4
      %v725 = vpop.permute.xlu0 %724
      %726 = vrot.lane.b32.xlu0 %v498, 4
      %v727 = vpop.permute.xlu0 %726
      %vm760 = vcmask 64544
      %761 = vst.msk [vmem:[#allocation2] sm:$0xff] %vm760, %v665
      %762 = vst.msk [vmem:[#allocation2 + $0x18] sm:$0xff] %vm760, %v667
      %763 = vst.msk [vmem:[#allocation2 + $0x30] sm:$0xff] %vm760, %v669
      %764 = vst.msk [vmem:[#allocation2 + $0x48] sm:$0xff] %vm760, %v671
      %765 = vst.msk [vmem:[#allocation2 + $0x60] sm:$0xff] %vm760, %v673
      %766 = vst.msk [vmem:[#allocation2 + $0x78] sm:$0xff] %vm760, %v675
      %767 = vst.msk [vmem:[#allocation2 + $0x90] sm:$0xff] %vm760, %v677
      %768 = vst.msk [vmem:[#allocation2 + $0xa8] sm:$0xff] %vm760, %v679
      %769 = vst.msk [vmem:[#allocation2 + $0xc0] sm:$0xff] %vm760, %v681
      %770 = vst.msk [vmem:[#allocation2 + $0xd8] sm:$0xff] %vm760, %v683
      %771 = vst.msk [vmem:[#allocation2 + $0xf0] sm:$0xff] %vm760, %v685
      %772 = vst.msk [vmem:[#allocation2 + $0x108] sm:$0xff] %vm760, %v687
      %773 = vst.msk [vmem:[#allocation2 + $0x120] sm:$0xff] %vm760, %v689
      %774 = vst.msk [vmem:[#allocation2 + $0x138] sm:$0xff] %vm760, %v691
      %775 = vst.msk [vmem:[#allocation2 + $0x150] sm:$0xff] %vm760, %v693
      %776 = vst.msk [vmem:[#allocation2 + $0x168] sm:$0xff] %vm760, %v695
      %777 = vst.msk [vmem:[#allocation2 + $0x180] sm:$0xff] %vm760, %v697
      %778 = vst.msk [vmem:[#allocation2 + $0x198] sm:$0xff] %vm760, %v699
      %779 = vst.msk [vmem:[#allocation2 + $0x1b0] sm:$0xff] %vm760, %v701
      %780 = vst.msk [vmem:[#allocation2 + $0x1c8] sm:$0xff] %vm760, %v703
      %781 = vst.msk [vmem:[#allocation2 + $0x1e0] sm:$0xff] %vm760, %v705
      %782 = vst.msk [vmem:[#allocation2 + $0x1f8] sm:$0xff] %vm760, %v707
      %783 = vst.msk [vmem:[#allocation2 + $0x210] sm:$0xff] %vm760, %v709
      %784 = vst.msk [vmem:[#allocation2 + $0x228] sm:$0xff] %vm760, %v711
      %785 = vst.msk [vmem:[#allocation2 + $0x240] sm:$0xff] %vm760, %v713
      %786 = vst.msk [vmem:[#allocation2 + $0x258] sm:$0xff] %vm760, %v715
      %787 = vst.msk [vmem:[#allocation2 + $0x270] sm:$0xff] %vm760, %v717
      %788 = vst.msk [vmem:[#allocation2 + $0x288] sm:$0xff] %vm760, %v719
      %789 = vst.msk [vmem:[#allocation2 + $0x2a0] sm:$0xff] %vm760, %v721
      %790 = vst.msk [vmem:[#allocation2 + $0x2b8] sm:$0xff] %vm760, %v723
      %791 = vst.msk [vmem:[#allocation2 + $0x2d0] sm:$0xff] %vm760, %v725
      %792 = vst.msk [vmem:[#allocation2 + $0x2e8] sm:$0xff] %vm760, %v727
      %vm793 = vcmask 1046528
      %v794 = vrot.slane %v499, 1
      %v795 = vrot.slane %v500, 1
      %v796 = vsel %vm793, %v794, %v795
      %v798 = vrot.slane %v469, 1
      %v799 = vrot.slane %v470, 1
      %v800 = vsel %vm793, %v798, %v799
      %v801 = vrot.slane %v471, 1
      %v802 = vsel %vm793, %v799, %v801
      %v803 = vrot.slane %v472, 1
      %v804 = vsel %vm793, %v801, %v803
      %v805 = vrot.slane %v473, 1
      %v806 = vsel %vm793, %v803, %v805
      %v807 = vrot.slane %v474, 1
      %v808 = vsel %vm793, %v805, %v807
      %v809 = vrot.slane %v475, 1
      %v810 = vsel %vm793, %v807, %v809
      %v811 = vrot.slane %v476, 1
      %v812 = vsel %vm793, %v809, %v811
      %v813 = vrot.slane %v477, 1
      %v814 = vsel %vm793, %v811, %v813
      %v815 = vrot.slane %v478, 1
      %v816 = vsel %vm793, %v813, %v815
      %v817 = vrot.slane %v479, 1
      %v818 = vsel %vm793, %v815, %v817
      %v819 = vrot.slane %v480, 1
      %v820 = vsel %vm793, %v817, %v819
      %v821 = vrot.slane %v481, 1
      %v822 = vsel %vm793, %v819, %v821
      %v823 = vrot.slane %v482, 1
      %v824 = vsel %vm793, %v821, %v823
      %v825 = vrot.slane %v483, 1
      %v826 = vsel %vm793, %v823, %v825
      %v827 = vrot.slane %v484, 1
      %v828 = vsel %vm793, %v825, %v827
      %v829 = vrot.slane %v485, 1
      %v830 = vsel %vm793, %v827, %v829
      %v831 = vrot.slane %v486, 1
      %v832 = vsel %vm793, %v829, %v831
      %v833 = vrot.slane %v487, 1
      %v834 = vsel %vm793, %v831, %v833
      %v835 = vrot.slane %v488, 1
      %v836 = vsel %vm793, %v833, %v835
      %v837 = vrot.slane %v489, 1
      %v838 = vsel %vm793, %v835, %v837
      %v839 = vrot.slane %v490, 1
      %v840 = vsel %vm793, %v837, %v839
      %v841 = vrot.slane %v491, 1
      %v842 = vsel %vm793, %v839, %v841
      %v843 = vrot.slane %v492, 1
      %v844 = vsel %vm793, %v841, %v843
      %v845 = vrot.slane %v493, 1
      %v846 = vsel %vm793, %v843, %v845
      %v847 = vrot.slane %v494, 1
      %v848 = vsel %vm793, %v845, %v847
      %v849 = vrot.slane %v495, 1
      %v850 = vsel %vm793, %v847, %v849
      %v851 = vrot.slane %v496, 1
      %v852 = vsel %vm793, %v849, %v851
      %v853 = vrot.slane %v497, 1
      %v854 = vsel %vm793, %v851, %v853
      %v855 = vrot.slane %v498, 1
      %v856 = vsel %vm793, %v853, %v855
      %v857 = vsel %vm793, %v855, %v794
      %v859 = vsel %vm793, %v795, %v798
      %861 = vrot.lane.b32.xlu0 %v796, 8
      %v862 = vpop.permute.xlu0 %861
      %863 = vrot.lane.b32.xlu0 %v859, 8
      %v864 = vpop.permute.xlu0 %863
      %865 = vrot.lane.b32.xlu0 %v800, 8
      %v866 = vpop.permute.xlu0 %865
      %867 = vrot.lane.b32.xlu0 %v802, 8
      %v868 = vpop.permute.xlu0 %867
      %869 = vrot.lane.b32.xlu0 %v804, 8
      %v870 = vpop.permute.xlu0 %869
      %871 = vrot.lane.b32.xlu0 %v806, 8
      %v872 = vpop.permute.xlu0 %871
      %873 = vrot.lane.b32.xlu0 %v808, 8
      %v874 = vpop.permute.xlu0 %873
      %875 = vrot.lane.b32.xlu0 %v810, 8
      %v876 = vpop.permute.xlu0 %875
      %877 = vrot.lane.b32.xlu0 %v812, 8
      %v878 = vpop.permute.xlu0 %877
      %879 = vrot.lane.b32.xlu0 %v814, 8
      %v880 = vpop.permute.xlu0 %879
      %881 = vrot.lane.b32.xlu0 %v816, 8
      %v882 = vpop.permute.xlu0 %881
      %883 = vrot.lane.b32.xlu0 %v818, 8
      %v884 = vpop.permute.xlu0 %883
      %885 = vrot.lane.b32.xlu0 %v820, 8
      %v886 = vpop.permute.xlu0 %885
      %887 = vrot.lane.b32.xlu0 %v822, 8
      %v888 = vpop.permute.xlu0 %887
      %889 = vrot.lane.b32.xlu0 %v824, 8
      %v890 = vpop.permute.xlu0 %889
      %891 = vrot.lane.b32.xlu0 %v826, 8
      %v892 = vpop.permute.xlu0 %891
      %893 = vrot.lane.b32.xlu0 %v828, 8
      %v894 = vpop.permute.xlu0 %893
      %895 = vrot.lane.b32.xlu0 %v830, 8
      %v896 = vpop.permute.xlu0 %895
      %897 = vrot.lane.b32.xlu0 %v832, 8
      %v898 = vpop.permute.xlu0 %897
      %899 = vrot.lane.b32.xlu0 %v834, 8
      %v900 = vpop.permute.xlu0 %899
      %901 = vrot.lane.b32.xlu0 %v836, 8
      %v902 = vpop.permute.xlu0 %901
      %903 = vrot.lane.b32.xlu0 %v838, 8
      %v904 = vpop.permute.xlu0 %903
      %905 = vrot.lane.b32.xlu0 %v840, 8
      %v906 = vpop.permute.xlu0 %905
      %907 = vrot.lane.b32.xlu0 %v842, 8
      %v908 = vpop.permute.xlu0 %907
      %909 = vrot.lane.b32.xlu0 %v844, 8
      %v910 = vpop.permute.xlu0 %909
      %911 = vrot.lane.b32.xlu0 %v846, 8
      %v912 = vpop.permute.xlu0 %911
      %913 = vrot.lane.b32.xlu0 %v848, 8
      %v914 = vpop.permute.xlu0 %913
      %915 = vrot.lane.b32.xlu0 %v850, 8
      %v916 = vpop.permute.xlu0 %915
      %917 = vrot.lane.b32.xlu0 %v852, 8
      %v918 = vpop.permute.xlu0 %917
      %919 = vrot.lane.b32.xlu0 %v854, 8
      %v920 = vpop.permute.xlu0 %919
      %921 = vrot.lane.b32.xlu0 %v856, 8
      %v922 = vpop.permute.xlu0 %921
      %923 = vrot.lane.b32.xlu0 %v857, 8
      %v924 = vpop.permute.xlu0 %923
      %vm957 = vcmask 97344
      %958 = vst.msk [vmem:[#allocation2] sm:$0xff] %vm957, %v862
      %959 = vst.msk [vmem:[#allocation2 + $0x18] sm:$0xff] %vm957, %v864
      %960 = vst.msk [vmem:[#allocation2 + $0x30] sm:$0xff] %vm957, %v866
      %961 = vst.msk [vmem:[#allocation2 + $0x48] sm:$0xff] %vm957, %v868
      %962 = vst.msk [vmem:[#allocation2 + $0x60] sm:$0xff] %vm957, %v870
      %963 = vst.msk [vmem:[#allocation2 + $0x78] sm:$0xff] %vm957, %v872
      %964 = vst.msk [vmem:[#allocation2 + $0x90] sm:$0xff] %vm957, %v874
      %965 = vst.msk [vmem:[#allocation2 + $0xa8] sm:$0xff] %vm957, %v876
      %966 = vst.msk [vmem:[#allocation2 + $0xc0] sm:$0xff] %vm957, %v878
      %967 = vst.msk [vmem:[#allocation2 + $0xd8] sm:$0xff] %vm957, %v880
      %968 = vst.msk [vmem:[#allocation2 + $0xf0] sm:$0xff] %vm957, %v882
      %969 = vst.msk [vmem:[#allocation2 + $0x108] sm:$0xff] %vm957, %v884
      %970 = vst.msk [vmem:[#allocation2 + $0x120] sm:$0xff] %vm957, %v886
      %971 = vst.msk [vmem:[#allocation2 + $0x138] sm:$0xff] %vm957, %v888
      %972 = vst.msk [vmem:[#allocation2 + $0x150] sm:$0xff] %vm957, %v890
      %973 = vst.msk [vmem:[#allocation2 + $0x168] sm:$0xff] %vm957, %v892
      %974 = vst.msk [vmem:[#allocation2 + $0x180] sm:$0xff] %vm957, %v894
      %975 = vst.msk [vmem:[#allocation2 + $0x198] sm:$0xff] %vm957, %v896
      %976 = vst.msk [vmem:[#allocation2 + $0x1b0] sm:$0xff] %vm957, %v898
      %977 = vst.msk [vmem:[#allocation2 + $0x1c8] sm:$0xff] %vm957, %v900
      %978 = vst.msk [vmem:[#allocation2 + $0x1e0] sm:$0xff] %vm957, %v902
      %979 = vst.msk [vmem:[#allocation2 + $0x1f8] sm:$0xff] %vm957, %v904
      %980 = vst.msk [vmem:[#allocation2 + $0x210] sm:$0xff] %vm957, %v906
      %981 = vst.msk [vmem:[#allocation2 + $0x228] sm:$0xff] %vm957, %v908
      %982 = vst.msk [vmem:[#allocation2 + $0x240] sm:$0xff] %vm957, %v910
      %983 = vst.msk [vmem:[#allocation2 + $0x258] sm:$0xff] %vm957, %v912
      %984 = vst.msk [vmem:[#allocation2 + $0x270] sm:$0xff] %vm957, %v914
      %985 = vst.msk [vmem:[#allocation2 + $0x288] sm:$0xff] %vm957, %v916
      %986 = vst.msk [vmem:[#allocation2 + $0x2a0] sm:$0xff] %vm957, %v918
      %987 = vst.msk [vmem:[#allocation2 + $0x2b8] sm:$0xff] %vm957, %v920
      %988 = vst.msk [vmem:[#allocation2 + $0x2d0] sm:$0xff] %vm957, %v922
      %989 = vst.msk [vmem:[#allocation2 + $0x2e8] sm:$0xff] %vm957, %v924
      %991 = vrot.lane.b32.xlu0 %v630, 12
      %v992 = vpop.permute.xlu0 %991
      %993 = vrot.lane.b32.xlu0 %v544, 12
      %v994 = vpop.permute.xlu0 %993
      %995 = vrot.lane.b32.xlu0 %v546, 12
      %v996 = vpop.permute.xlu0 %995
      %997 = vrot.lane.b32.xlu0 %v548, 12
      %v998 = vpop.permute.xlu0 %997
      %999 = vrot.lane.b32.xlu0 %v550, 12
      %v1000 = vpop.permute.xlu0 %999
      %1001 = vrot.lane.b32.xlu0 %v552, 12
      %v1002 = vpop.permute.xlu0 %1001
      %1003 = vrot.lane.b32.xlu0 %v554, 12
      %v1004 = vpop.permute.xlu0 %1003
      %1005 = vrot.lane.b32.xlu0 %v556, 12
      %v1006 = vpop.permute.xlu0 %1005
      %1007 = vrot.lane.b32.xlu0 %v558, 12
      %v1008 = vpop.permute.xlu0 %1007
      %1009 = vrot.lane.b32.xlu0 %v560, 12
      %v1010 = vpop.permute.xlu0 %1009
      %1011 = vrot.lane.b32.xlu0 %v562, 12
      %v1012 = vpop.permute.xlu0 %1011
      %1013 = vrot.lane.b32.xlu0 %v564, 12
      %v1014 = vpop.permute.xlu0 %1013
      %1015 = vrot.lane.b32.xlu0 %v566, 12
      %v1016 = vpop.permute.xlu0 %1015
      %1017 = vrot.lane.b32.xlu0 %v568, 12
      %v1018 = vpop.permute.xlu0 %1017
      %1019 = vrot.lane.b32.xlu0 %v570, 12
      %v1020 = vpop.permute.xlu0 %1019
      %1021 = vrot.lane.b32.xlu0 %v572, 12
      %v1022 = vpop.permute.xlu0 %1021
      %1023 = vrot.lane.b32.xlu0 %v574, 12
      %v1024 = vpop.permute.xlu0 %1023
      %1025 = vrot.lane.b32.xlu0 %v576, 12
      %v1026 = vpop.permute.xlu0 %1025
      %1027 = vrot.lane.b32.xlu0 %v578, 12
      %v1028 = vpop.permute.xlu0 %1027
      %1029 = vrot.lane.b32.xlu0 %v580, 12
      %v1030 = vpop.permute.xlu0 %1029
      %1031 = vrot.lane.b32.xlu0 %v582, 12
      %v1032 = vpop.permute.xlu0 %1031
      %1033 = vrot.lane.b32.xlu0 %v584, 12
      %v1034 = vpop.permute.xlu0 %1033
      %1035 = vrot.lane.b32.xlu0 %v586, 12
      %v1036 = vpop.permute.xlu0 %1035
      %1037 = vrot.lane.b32.xlu0 %v588, 12
      %v1038 = vpop.permute.xlu0 %1037
      %1039 = vrot.lane.b32.xlu0 %v590, 12
      %v1040 = vpop.permute.xlu0 %1039
      %1041 = vrot.lane.b32.xlu0 %v592, 12
      %v1042 = vpop.permute.xlu0 %1041
      %1043 = vrot.lane.b32.xlu0 %v594, 12
      %v1044 = vpop.permute.xlu0 %1043
      %1045 = vrot.lane.b32.xlu0 %v596, 12
      %v1046 = vpop.permute.xlu0 %1045
      %1047 = vrot.lane.b32.xlu0 %v598, 12
      %v1048 = vpop.permute.xlu0 %1047
      %1049 = vrot.lane.b32.xlu0 %v599, 12
      %v1050 = vpop.permute.xlu0 %1049
      %1051 = vrot.lane.b32.xlu0 %v507, 12
      %v1052 = vpop.permute.xlu0 %1051
      %1053 = vrot.lane.b32.xlu0 %v509, 12
      %v1054 = vpop.permute.xlu0 %1053
      %vm1087 = vcmask 130144
      %1088 = vst.msk [vmem:[#allocation2] sm:$0xff] %vm1087, %v992
      %1089 = vst.msk [vmem:[#allocation2 + $0x18] sm:$0xff] %vm1087, %v994
      %1090 = vst.msk [vmem:[#allocation2 + $0x30] sm:$0xff] %vm1087, %v996
      %1091 = vst.msk [vmem:[#allocation2 + $0x48] sm:$0xff] %vm1087, %v998
      %1092 = vst.msk [vmem:[#allocation2 + $0x60] sm:$0xff] %vm1087, %v1000
      %1093 = vst.msk [vmem:[#allocation2 + $0x78] sm:$0xff] %vm1087, %v1002
      %1094 = vst.msk [vmem:[#allocation2 + $0x90] sm:$0xff] %vm1087, %v1004
      %1095 = vst.msk [vmem:[#allocation2 + $0xa8] sm:$0xff] %vm1087, %v1006
      %1096 = vst.msk [vmem:[#allocation2 + $0xc0] sm:$0xff] %vm1087, %v1008
      %1097 = vst.msk [vmem:[#allocation2 + $0xd8] sm:$0xff] %vm1087, %v1010
      %1098 = vst.msk [vmem:[#allocation2 + $0xf0] sm:$0xff] %vm1087, %v1012
      %1099 = vst.msk [vmem:[#allocation2 + $0x108] sm:$0xff] %vm1087, %v1014
      %1100 = vst.msk [vmem:[#allocation2 + $0x120] sm:$0xff] %vm1087, %v1016
      %1101 = vst.msk [vmem:[#allocation2 + $0x138] sm:$0xff] %vm1087, %v1018
      %1102 = vst.msk [vmem:[#allocation2 + $0x150] sm:$0xff] %vm1087, %v1020
      %1103 = vst.msk [vmem:[#allocation2 + $0x168] sm:$0xff] %vm1087, %v1022
      %1104 = vst.msk [vmem:[#allocation2 + $0x180] sm:$0xff] %vm1087, %v1024
      %1105 = vst.msk [vmem:[#allocation2 + $0x198] sm:$0xff] %vm1087, %v1026
      %1106 = vst.msk [vmem:[#allocation2 + $0x1b0] sm:$0xff] %vm1087, %v1028
      %1107 = vst.msk [vmem:[#allocation2 + $0x1c8] sm:$0xff] %vm1087, %v1030
      %1108 = vst.msk [vmem:[#allocation2 + $0x1e0] sm:$0xff] %vm1087, %v1032
      %1109 = vst.msk [vmem:[#allocation2 + $0x1f8] sm:$0xff] %vm1087, %v1034
      %1110 = vst.msk [vmem:[#allocation2 + $0x210] sm:$0xff] %vm1087, %v1036
      %1111 = vst.msk [vmem:[#allocation2 + $0x228] sm:$0xff] %vm1087, %v1038
      %1112 = vst.msk [vmem:[#allocation2 + $0x240] sm:$0xff] %vm1087, %v1040
      %1113 = vst.msk [vmem:[#allocation2 + $0x258] sm:$0xff] %vm1087, %v1042
      %1114 = vst.msk [vmem:[#allocation2 + $0x270] sm:$0xff] %vm1087, %v1044
      %1115 = vst.msk [vmem:[#allocation2 + $0x288] sm:$0xff] %vm1087, %v1046
      %1116 = vst.msk [vmem:[#allocation2 + $0x2a0] sm:$0xff] %vm1087, %v1048
      %1117 = vst.msk [vmem:[#allocation2 + $0x2b8] sm:$0xff] %vm1087, %v1050
      %1118 = vst.msk [vmem:[#allocation2 + $0x2d0] sm:$0xff] %vm1087, %v1052
      %1119 = vst.msk [vmem:[#allocation2 + $0x2e8] sm:$0xff] %vm1087, %v1054
      %1120 = vrot.lane.b32.xlu0 %v469, 16
      %v1121 = vpop.permute.xlu0 %1120
      %1122 = vrot.lane.b32.xlu0 %v470, 16
      %v1123 = vpop.permute.xlu0 %1122
      %1124 = vrot.lane.b32.xlu0 %v471, 16
      %v1125 = vpop.permute.xlu0 %1124
      %1126 = vrot.lane.b32.xlu0 %v472, 16
      %v1127 = vpop.permute.xlu0 %1126
      %1128 = vrot.lane.b32.xlu0 %v473, 16
      %v1129 = vpop.permute.xlu0 %1128
      %1130 = vrot.lane.b32.xlu0 %v474, 16
      %v1131 = vpop.permute.xlu0 %1130
      %1132 = vrot.lane.b32.xlu0 %v475, 16
      %v1133 = vpop.permute.xlu0 %1132
      %1134 = vrot.lane.b32.xlu0 %v476, 16
      %v1135 = vpop.permute.xlu0 %1134
      %1136 = vrot.lane.b32.xlu0 %v477, 16
      %v1137 = vpop.permute.xlu0 %1136
      %1138 = vrot.lane.b32.xlu0 %v478, 16
      %v1139 = vpop.permute.xlu0 %1138
      %1140 = vrot.lane.b32.xlu0 %v479, 16
      %v1141 = vpop.permute.xlu0 %1140
      %1142 = vrot.lane.b32.xlu0 %v480, 16
      %v1143 = vpop.permute.xlu0 %1142
      %1144 = vrot.lane.b32.xlu0 %v481, 16
      %v1145 = vpop.permute.xlu0 %1144
      %1146 = vrot.lane.b32.xlu0 %v482, 16
      %v1147 = vpop.permute.xlu0 %1146
      %1148 = vrot.lane.b32.xlu0 %v483, 16
      %v1149 = vpop.permute.xlu0 %1148
      %1150 = vrot.lane.b32.xlu0 %v484, 16
      %v1151 = vpop.permute.xlu0 %1150
      %1152 = vrot.lane.b32.xlu0 %v485, 16
      %v1153 = vpop.permute.xlu0 %1152
      %1154 = vrot.lane.b32.xlu0 %v486, 16
      %v1155 = vpop.permute.xlu0 %1154
      %1156 = vrot.lane.b32.xlu0 %v487, 16
      %v1157 = vpop.permute.xlu0 %1156
      %1158 = vrot.lane.b32.xlu0 %v488, 16
      %v1159 = vpop.permute.xlu0 %1158
      %1160 = vrot.lane.b32.xlu0 %v489, 16
      %v1161 = vpop.permute.xlu0 %1160
      %1162 = vrot.lane.b32.xlu0 %v490, 16
      %v1163 = vpop.permute.xlu0 %1162
      %1164 = vrot.lane.b32.xlu0 %v491, 16
      %v1165 = vpop.permute.xlu0 %1164
      %1166 = vrot.lane.b32.xlu0 %v492, 16
      %v1167 = vpop.permute.xlu0 %1166
      %1168 = vrot.lane.b32.xlu0 %v493, 16
      %v1169 = vpop.permute.xlu0 %1168
      %1170 = vrot.lane.b32.xlu0 %v494, 16
      %v1171 = vpop.permute.xlu0 %1170
      %1172 = vrot.lane.b32.xlu0 %v495, 16
      %v1173 = vpop.permute.xlu0 %1172
      %1174 = vrot.lane.b32.xlu0 %v496, 16
      %v1175 = vpop.permute.xlu0 %1174
      %1176 = vrot.lane.b32.xlu0 %v497, 16
      %v1177 = vpop.permute.xlu0 %1176
      %1178 = vrot.lane.b32.xlu0 %v498, 16
      %v1179 = vpop.permute.xlu0 %1178
      %1180 = vrot.lane.b32.xlu0 %v499, 16
      %v1181 = vpop.permute.xlu0 %1180
      %1182 = vrot.lane.b32.xlu0 %v500, 16
      %v1183 = vpop.permute.xlu0 %1182
      %vm1216 = vcmask 162944
      %1217 = vst.msk [vmem:[#allocation2] sm:$0xff] %vm1216, %v1121
      %1218 = vst.msk [vmem:[#allocation2 + $0x18] sm:$0xff] %vm1216, %v1123
      %1219 = vst.msk [vmem:[#allocation2 + $0x30] sm:$0xff] %vm1216, %v1125
      %1220 = vst.msk [vmem:[#allocation2 + $0x48] sm:$0xff] %vm1216, %v1127
      %1221 = vst.msk [vmem:[#allocation2 + $0x60] sm:$0xff] %vm1216, %v1129
      %1222 = vst.msk [vmem:[#allocation2 + $0x78] sm:$0xff] %vm1216, %v1131
      %1223 = vst.msk [vmem:[#allocation2 + $0x90] sm:$0xff] %vm1216, %v1133
      %1224 = vst.msk [vmem:[#allocation2 + $0xa8] sm:$0xff] %vm1216, %v1135
      %1225 = vst.msk [vmem:[#allocation2 + $0xc0] sm:$0xff] %vm1216, %v1137
      %1226 = vst.msk [vmem:[#allocation2 + $0xd8] sm:$0xff] %vm1216, %v1139
      %1227 = vst.msk [vmem:[#allocation2 + $0xf0] sm:$0xff] %vm1216, %v1141
      %1228 = vst.msk [vmem:[#allocation2 + $0x108] sm:$0xff] %vm1216, %v1143
      %1229 = vst.msk [vmem:[#allocation2 + $0x120] sm:$0xff] %vm1216, %v1145
      %1230 = vst.msk [vmem:[#allocation2 + $0x138] sm:$0xff] %vm1216, %v1147
      %1231 = vst.msk [vmem:[#allocation2 + $0x150] sm:$0xff] %vm1216, %v1149
      %1232 = vst.msk [vmem:[#allocation2 + $0x168] sm:$0xff] %vm1216, %v1151
      %1233 = vst.msk [vmem:[#allocation2 + $0x180] sm:$0xff] %vm1216, %v1153
      %1234 = vst.msk [vmem:[#allocation2 + $0x198] sm:$0xff] %vm1216, %v1155
      %1235 = vst.msk [vmem:[#allocation2 + $0x1b0] sm:$0xff] %vm1216, %v1157
      %1236 = vst.msk [vmem:[#allocation2 + $0x1c8] sm:$0xff] %vm1216, %v1159
      %1237 = vst.msk [vmem:[#allocation2 + $0x1e0] sm:$0xff] %vm1216, %v1161
      %1238 = vst.msk [vmem:[#allocation2 + $0x1f8] sm:$0xff] %vm1216, %v1163
      %1239 = vst.msk [vmem:[#allocation2 + $0x210] sm:$0xff] %vm1216, %v1165
      %1240 = vst.msk [vmem:[#allocation2 + $0x228] sm:$0xff] %vm1216, %v1167
      %1241 = vst.msk [vmem:[#allocation2 + $0x240] sm:$0xff] %vm1216, %v1169
      %1242 = vst.msk [vmem:[#allocation2 + $0x258] sm:$0xff] %vm1216, %v1171
      %1243 = vst.msk [vmem:[#allocation2 + $0x270] sm:$0xff] %vm1216, %v1173
      %1244 = vst.msk [vmem:[#allocation2 + $0x288] sm:$0xff] %vm1216, %v1175
      %1245 = vst.msk [vmem:[#allocation2 + $0x2a0] sm:$0xff] %vm1216, %v1177
      %1246 = vst.msk [vmem:[#allocation2 + $0x2b8] sm:$0xff] %vm1216, %v1179
      %1247 = vst.msk [vmem:[#allocation2 + $0x2d0] sm:$0xff] %vm1216, %v1181
      %1248 = vst.msk [vmem:[#allocation2 + $0x2e8] sm:$0xff] %vm1216, %v1183
      %1249 = vrot.lane.b32.xlu0 %v800, 20
      %v1250 = vpop.permute.xlu0 %1249
      %1251 = vrot.lane.b32.xlu0 %v802, 20
      %v1252 = vpop.permute.xlu0 %1251
      %1253 = vrot.lane.b32.xlu0 %v804, 20
      %v1254 = vpop.permute.xlu0 %1253
      %1255 = vrot.lane.b32.xlu0 %v806, 20
      %v1256 = vpop.permute.xlu0 %1255
      %1257 = vrot.lane.b32.xlu0 %v808, 20
      %v1258 = vpop.permute.xlu0 %1257
      %1259 = vrot.lane.b32.xlu0 %v810, 20
      %v1260 = vpop.permute.xlu0 %1259
      %1261 = vrot.lane.b32.xlu0 %v812, 20
      %v1262 = vpop.permute.xlu0 %1261
      %1263 = vrot.lane.b32.xlu0 %v814, 20
      %v1264 = vpop.permute.xlu0 %1263
      %1265 = vrot.lane.b32.xlu0 %v816, 20
      %v1266 = vpop.permute.xlu0 %1265
      %1267 = vrot.lane.b32.xlu0 %v818, 20
      %v1268 = vpop.permute.xlu0 %1267
      %1269 = vrot.lane.b32.xlu0 %v820, 20
      %v1270 = vpop.permute.xlu0 %1269
      %1271 = vrot.lane.b32.xlu0 %v822, 20
      %v1272 = vpop.permute.xlu0 %1271
      %1273 = vrot.lane.b32.xlu0 %v824, 20
      %v1274 = vpop.permute.xlu0 %1273
      %1275 = vrot.lane.b32.xlu0 %v826, 20
      %v1276 = vpop.permute.xlu0 %1275
      %1277 = vrot.lane.b32.xlu0 %v828, 20
      %v1278 = vpop.permute.xlu0 %1277
      %1279 = vrot.lane.b32.xlu0 %v830, 20
      %v1280 = vpop.permute.xlu0 %1279
      %1281 = vrot.lane.b32.xlu0 %v832, 20
      %v1282 = vpop.permute.xlu0 %1281
      %1283 = vrot.lane.b32.xlu0 %v834, 20
      %v1284 = vpop.permute.xlu0 %1283
      %1285 = vrot.lane.b32.xlu0 %v836, 20
      %v1286 = vpop.permute.xlu0 %1285
      %1287 = vrot.lane.b32.xlu0 %v838, 20
      %v1288 = vpop.permute.xlu0 %1287
      %1289 = vrot.lane.b32.xlu0 %v840, 20
      %v1290 = vpop.permute.xlu0 %1289
      %1291 = vrot.lane.b32.xlu0 %v842, 20
      %v1292 = vpop.permute.xlu0 %1291
      %1293 = vrot.lane.b32.xlu0 %v844, 20
      %v1294 = vpop.permute.xlu0 %1293
      %1295 = vrot.lane.b32.xlu0 %v846, 20
      %v1296 = vpop.permute.xlu0 %1295
      %1297 = vrot.lane.b32.xlu0 %v848, 20
      %v1298 = vpop.permute.xlu0 %1297
      %1299 = vrot.lane.b32.xlu0 %v850, 20
      %v1300 = vpop.permute.xlu0 %1299
      %1301 = vrot.lane.b32.xlu0 %v852, 20
      %v1302 = vpop.permute.xlu0 %1301
      %1303 = vrot.lane.b32.xlu0 %v854, 20
      %v1304 = vpop.permute.xlu0 %1303
      %1305 = vrot.lane.b32.xlu0 %v856, 20
      %v1306 = vpop.permute.xlu0 %1305
      %1307 = vrot.lane.b32.xlu0 %v857, 20
      %v1308 = vpop.permute.xlu0 %1307
      %1309 = vrot.lane.b32.xlu0 %v796, 20
      %v1310 = vpop.permute.xlu0 %1309
      %1311 = vrot.lane.b32.xlu0 %v859, 20
      %v1312 = vpop.permute.xlu0 %1311
      %vm1345 = vcmask 195744
      %1346 = vst.msk [vmem:[#allocation2] sm:$0xff] %vm1345, %v1250
      %1347 = vst.msk [vmem:[#allocation2 + $0x18] sm:$0xff] %vm1345, %v1252
      %1348 = vst.msk [vmem:[#allocation2 + $0x30] sm:$0xff] %vm1345, %v1254
      %1349 = vst.msk [vmem:[#allocation2 + $0x48] sm:$0xff] %vm1345, %v1256
      %1350 = vst.msk [vmem:[#allocation2 + $0x60] sm:$0xff] %vm1345, %v1258
      %1351 = vst.msk [vmem:[#allocation2 + $0x78] sm:$0xff] %vm1345, %v1260
      %1352 = vst.msk [vmem:[#allocation2 + $0x90] sm:$0xff] %vm1345, %v1262
      %1353 = vst.msk [vmem:[#allocation2 + $0xa8] sm:$0xff] %vm1345, %v1264
      %1354 = vst.msk [vmem:[#allocation2 + $0xc0] sm:$0xff] %vm1345, %v1266
      %1355 = vst.msk [vmem:[#allocation2 + $0xd8] sm:$0xff] %vm1345, %v1268
      %1356 = vst.msk [vmem:[#allocation2 + $0xf0] sm:$0xff] %vm1345, %v1270
      %1357 = vst.msk [vmem:[#allocation2 + $0x108] sm:$0xff] %vm1345, %v1272
      %1358 = vst.msk [vmem:[#allocation2 + $0x120] sm:$0xff] %vm1345, %v1274
      %1359 = vst.msk [vmem:[#allocation2 + $0x138] sm:$0xff] %vm1345, %v1276
      %1360 = vst.msk [vmem:[#allocation2 + $0x150] sm:$0xff] %vm1345, %v1278
      %1361 = vst.msk [vmem:[#allocation2 + $0x168] sm:$0xff] %vm1345, %v1280
      %1362 = vst.msk [vmem:[#allocation2 + $0x180] sm:$0xff] %vm1345, %v1282
      %1363 = vst.msk [vmem:[#allocation2 + $0x198] sm:$0xff] %vm1345, %v1284
      %1364 = vst.msk [vmem:[#allocation2 + $0x1b0] sm:$0xff] %vm1345, %v1286
      %1365 = vst.msk [vmem:[#allocation2 + $0x1c8] sm:$0xff] %vm1345, %v1288
      %1366 = vst.msk [vmem:[#allocation2 + $0x1e0] sm:$0xff] %vm1345, %v1290
      %1367 = vst.msk [vmem:[#allocation2 + $0x1f8] sm:$0xff] %vm1345, %v1292
      %1368 = vst.msk [vmem:[#allocation2 + $0x210] sm:$0xff] %vm1345, %v1294
      %1369 = vst.msk [vmem:[#allocation2 + $0x228] sm:$0xff] %vm1345, %v1296
      %1370 = vst.msk [vmem:[#allocation2 + $0x240] sm:$0xff] %vm1345, %v1298
      %1371 = vst.msk [vmem:[#allocation2 + $0x258] sm:$0xff] %vm1345, %v1300
      %1372 = vst.msk [vmem:[#allocation2 + $0x270] sm:$0xff] %vm1345, %v1302
      %1373 = vst.msk [vmem:[#allocation2 + $0x288] sm:$0xff] %vm1345, %v1304
      %1374 = vst.msk [vmem:[#allocation2 + $0x2a0] sm:$0xff] %vm1345, %v1306
      %1375 = vst.msk [vmem:[#allocation2 + $0x2b8] sm:$0xff] %vm1345, %v1308
      %1376 = vst.msk [vmem:[#allocation2 + $0x2d0] sm:$0xff] %vm1345, %v1310
      %1377 = vst.msk [vmem:[#allocation2 + $0x2e8] sm:$0xff] %vm1345, %v1312
      %1378 = vrot.lane.b32.xlu0 %v546, 24
      %v1379 = vpop.permute.xlu0 %1378
      %1380 = vrot.lane.b32.xlu0 %v548, 24
      %v1381 = vpop.permute.xlu0 %1380
      %1382 = vrot.lane.b32.xlu0 %v550, 24
      %v1383 = vpop.permute.xlu0 %1382
      %1384 = vrot.lane.b32.xlu0 %v552, 24
      %v1385 = vpop.permute.xlu0 %1384
      %1386 = vrot.lane.b32.xlu0 %v554, 24
      %v1387 = vpop.permute.xlu0 %1386
      %1388 = vrot.lane.b32.xlu0 %v556, 24
      %v1389 = vpop.permute.xlu0 %1388
      %1390 = vrot.lane.b32.xlu0 %v558, 24
      %v1391 = vpop.permute.xlu0 %1390
      %1392 = vrot.lane.b32.xlu0 %v560, 24
      %v1393 = vpop.permute.xlu0 %1392
      %1394 = vrot.lane.b32.xlu0 %v562, 24
      %v1395 = vpop.permute.xlu0 %1394
      %1396 = vrot.lane.b32.xlu0 %v564, 24
      %v1397 = vpop.permute.xlu0 %1396
      %1398 = vrot.lane.b32.xlu0 %v566, 24
      %v1399 = vpop.permute.xlu0 %1398
      %1400 = vrot.lane.b32.xlu0 %v568, 24
      %v1401 = vpop.permute.xlu0 %1400
      %1402 = vrot.lane.b32.xlu0 %v570, 24
      %v1403 = vpop.permute.xlu0 %1402
      %1404 = vrot.lane.b32.xlu0 %v572, 24
      %v1405 = vpop.permute.xlu0 %1404
      %1406 = vrot.lane.b32.xlu0 %v574, 24
      %v1407 = vpop.permute.xlu0 %1406
      %1408 = vrot.lane.b32.xlu0 %v576, 24
      %v1409 = vpop.permute.xlu0 %1408
      %1410 = vrot.lane.b32.xlu0 %v578, 24
      %v1411 = vpop.permute.xlu0 %1410
      %1412 = vrot.lane.b32.xlu0 %v580, 24
      %v1413 = vpop.permute.xlu0 %1412
      %1414 = vrot.lane.b32.xlu0 %v582, 24
      %v1415 = vpop.permute.xlu0 %1414
      %1416 = vrot.lane.b32.xlu0 %v584, 24
      %v1417 = vpop.permute.xlu0 %1416
      %1418 = vrot.lane.b32.xlu0 %v586, 24
      %v1419 = vpop.permute.xlu0 %1418
      %1420 = vrot.lane.b32.xlu0 %v588, 24
      %v1421 = vpop.permute.xlu0 %1420
      %1422 = vrot.lane.b32.xlu0 %v590, 24
      %v1423 = vpop.permute.xlu0 %1422
      %1424 = vrot.lane.b32.xlu0 %v592, 24
      %v1425 = vpop.permute.xlu0 %1424
      %1426 = vrot.lane.b32.xlu0 %v594, 24
      %v1427 = vpop.permute.xlu0 %1426
      %1428 = vrot.lane.b32.xlu0 %v596, 24
      %v1429 = vpop.permute.xlu0 %1428
      %1430 = vrot.lane.b32.xlu0 %v598, 24
      %v1431 = vpop.permute.xlu0 %1430
      %1432 = vrot.lane.b32.xlu0 %v599, 24
      %v1433 = vpop.permute.xlu0 %1432
      %1434 = vrot.lane.b32.xlu0 %v507, 24
      %v1435 = vpop.permute.xlu0 %1434
      %1436 = vrot.lane.b32.xlu0 %v509, 24
      %v1437 = vpop.permute.xlu0 %1436
      %1438 = vrot.lane.b32.xlu0 %v630, 24
      %v1439 = vpop.permute.xlu0 %1438
      %1440 = vrot.lane.b32.xlu0 %v544, 24
      %v1441 = vpop.permute.xlu0 %1440
      %vm1474 = vcmask 228544
      %1475 = vst.msk [vmem:[#allocation2] sm:$0xff] %vm1474, %v1379
      %1476 = vst.msk [vmem:[#allocation2 + $0x18] sm:$0xff] %vm1474, %v1381
      %1477 = vst.msk [vmem:[#allocation2 + $0x30] sm:$0xff] %vm1474, %v1383
      %1478 = vst.msk [vmem:[#allocation2 + $0x48] sm:$0xff] %vm1474, %v1385
      %1479 = vst.msk [vmem:[#allocation2 + $0x60] sm:$0xff] %vm1474, %v1387
      %1480 = vst.msk [vmem:[#allocation2 + $0x78] sm:$0xff] %vm1474, %v1389
      %1481 = vst.msk [vmem:[#allocation2 + $0x90] sm:$0xff] %vm1474, %v1391
      %1482 = vst.msk [vmem:[#allocation2 + $0xa8] sm:$0xff] %vm1474, %v1393
      %1483 = vst.msk [vmem:[#allocation2 + $0xc0] sm:$0xff] %vm1474, %v1395
      %1484 = vst.msk [vmem:[#allocation2 + $0xd8] sm:$0xff] %vm1474, %v1397
      %1485 = vst.msk [vmem:[#allocation2 + $0xf0] sm:$0xff] %vm1474, %v1399
      %1486 = vst.msk [vmem:[#allocation2 + $0x108] sm:$0xff] %vm1474, %v1401
      %1487 = vst.msk [vmem:[#allocation2 + $0x120] sm:$0xff] %vm1474, %v1403
      %1488 = vst.msk [vmem:[#allocation2 + $0x138] sm:$0xff] %vm1474, %v1405
      %1489 = vst.msk [vmem:[#allocation2 + $0x150] sm:$0xff] %vm1474, %v1407
      %1490 = vst.msk [vmem:[#allocation2 + $0x168] sm:$0xff] %vm1474, %v1409
      %1491 = vst.msk [vmem:[#allocation2 + $0x180] sm:$0xff] %vm1474, %v1411
      %1492 = vst.msk [vmem:[#allocation2 + $0x198] sm:$0xff] %vm1474, %v1413
      %1493 = vst.msk [vmem:[#allocation2 + $0x1b0] sm:$0xff] %vm1474, %v1415
      %1494 = vst.msk [vmem:[#allocation2 + $0x1c8] sm:$0xff] %vm1474, %v1417
      %1495 = vst.msk [vmem:[#allocation2 + $0x1e0] sm:$0xff] %vm1474, %v1419
      %1496 = vst.msk [vmem:[#allocation2 + $0x1f8] sm:$0xff] %vm1474, %v1421
      %1497 = vst.msk [vmem:[#allocation2 + $0x210] sm:$0xff] %vm1474, %v1423
      %1498 = vst.msk [vmem:[#allocation2 + $0x228] sm:$0xff] %vm1474, %v1425
      %1499 = vst.msk [vmem:[#allocation2 + $0x240] sm:$0xff] %vm1474, %v1427
      %1500 = vst.msk [vmem:[#allocation2 + $0x258] sm:$0xff] %vm1474, %v1429
      %1501 = vst.msk [vmem:[#allocation2 + $0x270] sm:$0xff] %vm1474, %v1431
      %1502 = vst.msk [vmem:[#allocation2 + $0x288] sm:$0xff] %vm1474, %v1433
      %1503 = vst.msk [vmem:[#allocation2 + $0x2a0] sm:$0xff] %vm1474, %v1435
      %1504 = vst.msk [vmem:[#allocation2 + $0x2b8] sm:$0xff] %vm1474, %v1437
      %1505 = vst.msk [vmem:[#allocation2 + $0x2d0] sm:$0xff] %vm1474, %v1439
      %1506 = vst.msk [vmem:[#allocation2 + $0x2e8] sm:$0xff] %vm1474, %v1441
      %1507 = vrot.lane.b32.xlu0 %v471, 28
      %v1508 = vpop.permute.xlu0 %1507
      %1509 = vrot.lane.b32.xlu0 %v472, 28
      %v1510 = vpop.permute.xlu0 %1509
      %1511 = vrot.lane.b32.xlu0 %v473, 28
      %v1512 = vpop.permute.xlu0 %1511
      %1513 = vrot.lane.b32.xlu0 %v474, 28
      %v1514 = vpop.permute.xlu0 %1513
      %1515 = vrot.lane.b32.xlu0 %v475, 28
      %v1516 = vpop.permute.xlu0 %1515
      %1517 = vrot.lane.b32.xlu0 %v476, 28
      %v1518 = vpop.permute.xlu0 %1517
      %1519 = vrot.lane.b32.xlu0 %v477, 28
      %v1520 = vpop.permute.xlu0 %1519
      %1521 = vrot.lane.b32.xlu0 %v478, 28
      %v1522 = vpop.permute.xlu0 %1521
      %1523 = vrot.lane.b32.xlu0 %v479, 28
      %v1524 = vpop.permute.xlu0 %1523
      %1525 = vrot.lane.b32.xlu0 %v480, 28
      %v1526 = vpop.permute.xlu0 %1525
      %1527 = vrot.lane.b32.xlu0 %v481, 28
      %v1528 = vpop.permute.xlu0 %1527
      %1529 = vrot.lane.b32.xlu0 %v482, 28
      %v1530 = vpop.permute.xlu0 %1529
      %1531 = vrot.lane.b32.xlu0 %v483, 28
      %v1532 = vpop.permute.xlu0 %1531
      %1533 = vrot.lane.b32.xlu0 %v484, 28
      %v1534 = vpop.permute.xlu0 %1533
      %1535 = vrot.lane.b32.xlu0 %v485, 28
      %v1536 = vpop.permute.xlu0 %1535
      %1537 = vrot.lane.b32.xlu0 %v486, 28
      %v1538 = vpop.permute.xlu0 %1537
      %1539 = vrot.lane.b32.xlu0 %v487, 28
      %v1540 = vpop.permute.xlu0 %1539
      %1541 = vrot.lane.b32.xlu0 %v488, 28
      %v1542 = vpop.permute.xlu0 %1541
      %1543 = vrot.lane.b32.xlu0 %v489, 28
      %v1544 = vpop.permute.xlu0 %1543
      %1545 = vrot.lane.b32.xlu0 %v490, 28
      %v1546 = vpop.permute.xlu0 %1545
      %1547 = vrot.lane.b32.xlu0 %v491, 28
      %v1548 = vpop.permute.xlu0 %1547
      %1549 = vrot.lane.b32.xlu0 %v492, 28
      %v1550 = vpop.permute.xlu0 %1549
      %1551 = vrot.lane.b32.xlu0 %v493, 28
      %v1552 = vpop.permute.xlu0 %1551
      %1553 = vrot.lane.b32.xlu0 %v494, 28
      %v1554 = vpop.permute.xlu0 %1553
      %1555 = vrot.lane.b32.xlu0 %v495, 28
      %v1556 = vpop.permute.xlu0 %1555
      %1557 = vrot.lane.b32.xlu0 %v496, 28
      %v1558 = vpop.permute.xlu0 %1557
      %1559 = vrot.lane.b32.xlu0 %v497, 28
      %v1560 = vpop.permute.xlu0 %1559
      %1561 = vrot.lane.b32.xlu0 %v498, 28
      %v1562 = vpop.permute.xlu0 %1561
      %1563 = vrot.lane.b32.xlu0 %v499, 28
      %v1564 = vpop.permute.xlu0 %1563
      %1565 = vrot.lane.b32.xlu0 %v500, 28
      %v1566 = vpop.permute.xlu0 %1565
      %1567 = vrot.lane.b32.xlu0 %v469, 28
      %v1568 = vpop.permute.xlu0 %1567
      %1569 = vrot.lane.b32.xlu0 %v470, 28
      %v1570 = vpop.permute.xlu0 %1569
      %vm1603 = vcmask 261344
      %1604 = vst.msk [vmem:[#allocation2] sm:$0xff] %vm1603, %v1508
      %1605 = vst.msk [vmem:[#allocation2 + $0x18] sm:$0xff] %vm1603, %v1510
      %1606 = vst.msk [vmem:[#allocation2 + $0x30] sm:$0xff] %vm1603, %v1512
      %1607 = vst.msk [vmem:[#allocation2 + $0x48] sm:$0xff] %vm1603, %v1514
      %1608 = vst.msk [vmem:[#allocation2 + $0x60] sm:$0xff] %vm1603, %v1516
      %1609 = vst.msk [vmem:[#allocation2 + $0x78] sm:$0xff] %vm1603, %v1518
      %1610 = vst.msk [vmem:[#allocation2 + $0x90] sm:$0xff] %vm1603, %v1520
      %1611 = vst.msk [vmem:[#allocation2 + $0xa8] sm:$0xff] %vm1603, %v1522
      %1612 = vst.msk [vmem:[#allocation2 + $0xc0] sm:$0xff] %vm1603, %v1524
      %1613 = vst.msk [vmem:[#allocation2 + $0xd8] sm:$0xff] %vm1603, %v1526
      %1614 = vst.msk [vmem:[#allocation2 + $0xf0] sm:$0xff] %vm1603, %v1528
      %1615 = vst.msk [vmem:[#allocation2 + $0x108] sm:$0xff] %vm1603, %v1530
      %1616 = vst.msk [vmem:[#allocation2 + $0x120] sm:$0xff] %vm1603, %v1532
      %1617 = vst.msk [vmem:[#allocation2 + $0x138] sm:$0xff] %vm1603, %v1534
      %1618 = vst.msk [vmem:[#allocation2 + $0x150] sm:$0xff] %vm1603, %v1536
      %1619 = vst.msk [vmem:[#allocation2 + $0x168] sm:$0xff] %vm1603, %v1538
      %1620 = vst.msk [vmem:[#allocation2 + $0x180] sm:$0xff] %vm1603, %v1540
      %1621 = vst.msk [vmem:[#allocation2 + $0x198] sm:$0xff] %vm1603, %v1542
      %1622 = vst.msk [vmem:[#allocation2 + $0x1b0] sm:$0xff] %vm1603, %v1544
      %1623 = vst.msk [vmem:[#allocation2 + $0x1c8] sm:$0xff] %vm1603, %v1546
      %1624 = vst.msk [vmem:[#allocation2 + $0x1e0] sm:$0xff] %vm1603, %v1548
      %1625 = vst.msk [vmem:[#allocation2 + $0x1f8] sm:$0xff] %vm1603, %v1550
      %1626 = vst.msk [vmem:[#allocation2 + $0x210] sm:$0xff] %vm1603, %v1552
      %1627 = vst.msk [vmem:[#allocation2 + $0x228] sm:$0xff] %vm1603, %v1554
      %1628 = vst.msk [vmem:[#allocation2 + $0x240] sm:$0xff] %vm1603, %v1556
      %1629 = vst.msk [vmem:[#allocation2 + $0x258] sm:$0xff] %vm1603, %v1558
      %1630 = vst.msk [vmem:[#allocation2 + $0x270] sm:$0xff] %vm1603, %v1560
      %1631 = vst.msk [vmem:[#allocation2 + $0x288] sm:$0xff] %vm1603, %v1562
      %1632 = vst.msk [vmem:[#allocation2 + $0x2a0] sm:$0xff] %vm1603, %v1564
      %1633 = vst.msk [vmem:[#allocation2 + $0x2b8] sm:$0xff] %vm1603, %v1566
      %1634 = vst.msk [vmem:[#allocation2 + $0x2d0] sm:$0xff] %vm1603, %v1568
      %1635 = vst.msk [vmem:[#allocation2 + $0x2e8] sm:$0xff] %vm1603, %v1570
      %1636 = vrot.lane.b32.xlu0 %v804, 32
      %v1637 = vpop.permute.xlu0 %1636
      %1638 = vrot.lane.b32.xlu0 %v806, 32
      %v1639 = vpop.permute.xlu0 %1638
      %1640 = vrot.lane.b32.xlu0 %v808, 32
      %v1641 = vpop.permute.xlu0 %1640
      %1642 = vrot.lane.b32.xlu0 %v810, 32
      %v1643 = vpop.permute.xlu0 %1642
      %1644 = vrot.lane.b32.xlu0 %v812, 32
      %v1645 = vpop.permute.xlu0 %1644
      %1646 = vrot.lane.b32.xlu0 %v814, 32
      %v1647 = vpop.permute.xlu0 %1646
      %1648 = vrot.lane.b32.xlu0 %v816, 32
      %v1649 = vpop.permute.xlu0 %1648
      %1650 = vrot.lane.b32.xlu0 %v818, 32
      %v1651 = vpop.permute.xlu0 %1650
      %1652 = vrot.lane.b32.xlu0 %v820, 32
      %v1653 = vpop.permute.xlu0 %1652
      %1654 = vrot.lane.b32.xlu0 %v822, 32
      %v1655 = vpop.permute.xlu0 %1654
      %1656 = vrot.lane.b32.xlu0 %v824, 32
      %v1657 = vpop.permute.xlu0 %1656
      %1658 = vrot.lane.b32.xlu0 %v826, 32
      %v1659 = vpop.permute.xlu0 %1658
      %1660 = vrot.lane.b32.xlu0 %v828, 32
      %v1661 = vpop.permute.xlu0 %1660
      %1662 = vrot.lane.b32.xlu0 %v830, 32
      %v1663 = vpop.permute.xlu0 %1662
      %1664 = vrot.lane.b32.xlu0 %v832, 32
      %v1665 = vpop.permute.xlu0 %1664
      %1666 = vrot.lane.b32.xlu0 %v834, 32
      %v1667 = vpop.permute.xlu0 %1666
      %1668 = vrot.lane.b32.xlu0 %v836, 32
      %v1669 = vpop.permute.xlu0 %1668
      %1670 = vrot.lane.b32.xlu0 %v838, 32
      %v1671 = vpop.permute.xlu0 %1670
      %1672 = vrot.lane.b32.xlu0 %v840, 32
      %v1673 = vpop.permute.xlu0 %1672
      %1674 = vrot.lane.b32.xlu0 %v842, 32
      %v1675 = vpop.permute.xlu0 %1674
      %1676 = vrot.lane.b32.xlu0 %v844, 32
      %v1677 = vpop.permute.xlu0 %1676
      %1678 = vrot.lane.b32.xlu0 %v846, 32
      %v1679 = vpop.permute.xlu0 %1678
      %1680 = vrot.lane.b32.xlu0 %v848, 32
      %v1681 = vpop.permute.xlu0 %1680
      %1682 = vrot.lane.b32.xlu0 %v850, 32
      %v1683 = vpop.permute.xlu0 %1682
      %1684 = vrot.lane.b32.xlu0 %v852, 32
      %v1685 = vpop.permute.xlu0 %1684
      %1686 = vrot.lane.b32.xlu0 %v854, 32
      %v1687 = vpop.permute.xlu0 %1686
      %1688 = vrot.lane.b32.xlu0 %v856, 32
      %v1689 = vpop.permute.xlu0 %1688
      %1690 = vrot.lane.b32.xlu0 %v857, 32
      %v1691 = vpop.permute.xlu0 %1690
      %1692 = vrot.lane.b32.xlu0 %v796, 32
      %v1693 = vpop.permute.xlu0 %1692
      %1694 = vrot.lane.b32.xlu0 %v859, 32
      %v1695 = vpop.permute.xlu0 %1694
      %1696 = vrot.lane.b32.xlu0 %v800, 32
      %v1697 = vpop.permute.xlu0 %1696
      %1698 = vrot.lane.b32.xlu0 %v802, 32
      %v1699 = vpop.permute.xlu0 %1698
      %vm1732 = vcmask 294144
      %1733 = vst.msk [vmem:[#allocation2] sm:$0xff] %vm1732, %v1637
      %1734 = vst.msk [vmem:[#allocation2 + $0x18] sm:$0xff] %vm1732, %v1639
      %1735 = vst.msk [vmem:[#allocation2 + $0x30] sm:$0xff] %vm1732, %v1641
      %1736 = vst.msk [vmem:[#allocation2 + $0x48] sm:$0xff] %vm1732, %v1643
      %1737 = vst.msk [vmem:[#allocation2 + $0x60] sm:$0xff] %vm1732, %v1645
      %1738 = vst.msk [vmem:[#allocation2 + $0x78] sm:$0xff] %vm1732, %v1647
      %1739 = vst.msk [vmem:[#allocation2 + $0x90] sm:$0xff] %vm1732, %v1649
      %1740 = vst.msk [vmem:[#allocation2 + $0xa8] sm:$0xff] %vm1732, %v1651
      %1741 = vst.msk [vmem:[#allocation2 + $0xc0] sm:$0xff] %vm1732, %v1653
      %1742 = vst.msk [vmem:[#allocation2 + $0xd8] sm:$0xff] %vm1732, %v1655
      %1743 = vst.msk [vmem:[#allocation2 + $0xf0] sm:$0xff] %vm1732, %v1657
      %1744 = vst.msk [vmem:[#allocation2 + $0x108] sm:$0xff] %vm1732, %v1659
      %1745 = vst.msk [vmem:[#allocation2 + $0x120] sm:$0xff] %vm1732, %v1661
      %1746 = vst.msk [vmem:[#allocation2 + $0x138] sm:$0xff] %vm1732, %v1663
      %1747 = vst.msk [vmem:[#allocation2 + $0x150] sm:$0xff] %vm1732, %v1665
      %1748 = vst.msk [vmem:[#allocation2 + $0x168] sm:$0xff] %vm1732, %v1667
      %1749 = vst.msk [vmem:[#allocation2 + $0x180] sm:$0xff] %vm1732, %v1669
      %1750 = vst.msk [vmem:[#allocation2 + $0x198] sm:$0xff] %vm1732, %v1671
      %1751 = vst.msk [vmem:[#allocation2 + $0x1b0] sm:$0xff] %vm1732, %v1673
      %1752 = vst.msk [vmem:[#allocation2 + $0x1c8] sm:$0xff] %vm1732, %v1675
      %1753 = vst.msk [vmem:[#allocation2 + $0x1e0] sm:$0xff] %vm1732, %v1677
      %1754 = vst.msk [vmem:[#allocation2 + $0x1f8] sm:$0xff] %vm1732, %v1679
      %1755 = vst.msk [vmem:[#allocation2 + $0x210] sm:$0xff] %vm1732, %v1681
      %1756 = vst.msk [vmem:[#allocation2 + $0x228] sm:$0xff] %vm1732, %v1683
      %1757 = vst.msk [vmem:[#allocation2 + $0x240] sm:$0xff] %vm1732, %v1685
      %1758 = vst.msk [vmem:[#allocation2 + $0x258] sm:$0xff] %vm1732, %v1687
      %1759 = vst.msk [vmem:[#allocation2 + $0x270] sm:$0xff] %vm1732, %v1689
      %1760 = vst.msk [vmem:[#allocation2 + $0x288] sm:$0xff] %vm1732, %v1691
      %1761 = vst.msk [vmem:[#allocation2 + $0x2a0] sm:$0xff] %vm1732, %v1693
      %1762 = vst.msk [vmem:[#allocation2 + $0x2b8] sm:$0xff] %vm1732, %v1695
      %1763 = vst.msk [vmem:[#allocation2 + $0x2d0] sm:$0xff] %vm1732, %v1697
      %1764 = vst.msk [vmem:[#allocation2 + $0x2e8] sm:$0xff] %vm1732, %v1699
      %v1765 = vld [vmem:[#allocation2] sm:$0xff]
      %v1766 = vld [vmem:[#allocation2 + $0x18] sm:$0xff]
      %v1767 = vld [vmem:[#allocation2 + $0x30] sm:$0xff]
      %v1768 = vld [vmem:[#allocation2 + $0x48] sm:$0xff]
      %v1769 = vld [vmem:[#allocation2 + $0x60] sm:$0xff]
      %v1770 = vld [vmem:[#allocation2 + $0x78] sm:$0xff]
      %v1771 = vld [vmem:[#allocation2 + $0x90] sm:$0xff]
      %v1772 = vld [vmem:[#allocation2 + $0xa8] sm:$0xff]
      %v1773 = vld [vmem:[#allocation2 + $0xc0] sm:$0xff]
      %v1774 = vld [vmem:[#allocation2 + $0xd8] sm:$0xff]
      %v1775 = vld [vmem:[#allocation2 + $0xf0] sm:$0xff]
      %v1776 = vld [vmem:[#allocation2 + $0x108] sm:$0xff]
      %v1777 = vld [vmem:[#allocation2 + $0x120] sm:$0xff]
      %v1778 = vld [vmem:[#allocation2 + $0x138] sm:$0xff]
      %v1779 = vld [vmem:[#allocation2 + $0x150] sm:$0xff]
      %v1780 = vld [vmem:[#allocation2 + $0x168] sm:$0xff]
      %v1781 = vld [vmem:[#allocation2 + $0x180] sm:$0xff]
      %v1782 = vld [vmem:[#allocation2 + $0x198] sm:$0xff]
      %v1783 = vld [vmem:[#allocation2 + $0x1b0] sm:$0xff]
      %v1784 = vld [vmem:[#allocation2 + $0x1c8] sm:$0xff]
      %v1785 = vld [vmem:[#allocation2 + $0x1e0] sm:$0xff]
      %v1786 = vld [vmem:[#allocation2 + $0x1f8] sm:$0xff]
      %v1787 = vld [vmem:[#allocation2 + $0x210] sm:$0xff]
      %v1788 = vld [vmem:[#allocation2 + $0x228] sm:$0xff]
      %v1789 = vld [vmem:[#allocation2 + $0x240] sm:$0xff]
      %v1790 = vld [vmem:[#allocation2 + $0x258] sm:$0xff]
      %v1791 = vld [vmem:[#allocation2 + $0x270] sm:$0xff]
      %v1792 = vld [vmem:[#allocation2 + $0x288] sm:$0xff]
      %v1793 = vld [vmem:[#allocation2 + $0x2a0] sm:$0xff]
      %v1794 = vld [vmem:[#allocation2 + $0x2b8] sm:$0xff]
      %v1795 = vld [vmem:[#allocation2 + $0x2d0] sm:$0xff]
      %v1796 = vld [vmem:[#allocation2 + $0x2e8] sm:$0xff]
      %v1797 = vld [vmem:[%s3] sm:$0xff]
      %v1798 = vld [vmem:[%s3 + $0x8] sm:$0xff]
      %v1799 = vld [vmem:[%s3 + $0x10] sm:$0xff]
      %v1800 = vld [vmem:[%s3 + $0x18] sm:$0xff]
      %v1801 = vld [vmem:[%s3 + $0x20] sm:$0xff]
      %v1802 = vld [vmem:[%s3 + $0x28] sm:$0xff]
      %v1803 = vld [vmem:[%s3 + $0x30] sm:$0xff]
      %v1804 = vld [vmem:[%s3 + $0x38] sm:$0xff]
      %v1805 = vld [vmem:[%s3 + $0x40] sm:$0xff]
      %v1806 = vld [vmem:[%s3 + $0x48] sm:$0xff]
      %v1807 = vld [vmem:[%s3 + $0x50] sm:$0xff]
      %v1808 = vld [vmem:[%s3 + $0x58] sm:$0xff]
      %v1809 = vld [vmem:[%s3 + $0x60] sm:$0xff]
      %v1810 = vld [vmem:[%s3 + $0x68] sm:$0xff]
      %v1811 = vld [vmem:[%s3 + $0x70] sm:$0xff]
      %v1812 = vld [vmem:[%s3 + $0x78] sm:$0xff]
      %v1813 = vld [vmem:[%s3 + $0x80] sm:$0xff]
      %v1814 = vld [vmem:[%s3 + $0x88] sm:$0xff]
      %v1815 = vld [vmem:[%s3 + $0x90] sm:$0xff]
      %v1816 = vld [vmem:[%s3 + $0x98] sm:$0xff]
      %v1817 = vld [vmem:[%s3 + $0xa0] sm:$0xff]
      %v1818 = vld [vmem:[%s3 + $0xa8] sm:$0xff]
      %v1819 = vld [vmem:[%s3 + $0xb0] sm:$0xff]
      %v1820 = vld [vmem:[%s3 + $0xb8] sm:$0xff]
      %v1821 = vld [vmem:[%s3 + $0xc0] sm:$0xff]
      %v1822 = vld [vmem:[%s3 + $0xc8] sm:$0xff]
      %v1823 = vld [vmem:[%s3 + $0xd0] sm:$0xff]
      %v1824 = vld [vmem:[%s3 + $0xd8] sm:$0xff]
      %v1825 = vld [vmem:[%s3 + $0xe0] sm:$0xff]
      %v1826 = vld [vmem:[%s3 + $0xe8] sm:$0xff]
      %v1827 = vld [vmem:[%s3 + $0xf0] sm:$0xff]
      %v1828 = vld [vmem:[%s3 + $0xf8] sm:$0xff]
      %v1829 = vmul.f32 %v1765, %v1797
      %v1830 = vmul.f32 %v1766, %v1798
      %v1831 = vmul.f32 %v1767, %v1799
      %v1832 = vmul.f32 %v1768, %v1800
      %v1833 = vmul.f32 %v1769, %v1801
      %v1834 = vmul.f32 %v1770, %v1802
      %v1835 = vmul.f32 %v1771, %v1803
      %v1836 = vmul.f32 %v1772, %v1804
      %v1837 = vmul.f32 %v1773, %v1805
      %v1838 = vmul.f32 %v1774, %v1806
      %v1839 = vmul.f32 %v1775, %v1807
      %v1840 = vmul.f32 %v1776, %v1808
      %v1841 = vmul.f32 %v1777, %v1809
      %v1842 = vmul.f32 %v1778, %v1810
      %v1843 = vmul.f32 %v1779, %v1811
      %v1844 = vmul.f32 %v1780, %v1812
      %v1845 = vmul.f32 %v1781, %v1813
      %v1846 = vmul.f32 %v1782, %v1814
      %v1847 = vmul.f32 %v1783, %v1815
      %v1848 = vmul.f32 %v1784, %v1816
      %v1849 = vmul.f32 %v1785, %v1817
      %v1850 = vmul.f32 %v1786, %v1818
      %v1851 = vmul.f32 %v1787, %v1819
      %v1852 = vmul.f32 %v1788, %v1820
      %v1853 = vmul.f32 %v1789, %v1821
      %v1854 = vmul.f32 %v1790, %v1822
      %v1855 = vmul.f32 %v1791, %v1823
      %v1856 = vmul.f32 %v1792, %v1824
      %v1857 = vmul.f32 %v1793, %v1825
      %v1858 = vmul.f32 %v1794, %v1826
      %v1859 = vmul.f32 %v1795, %v1827
      %v1860 = vmul.f32 %v1796, %v1828
      %v1861 = vpack.c.bf16 %v1830, %v1829
      %v1862 = vpack.c.bf16 %v1832, %v1831
      %v1863 = vpack.c.bf16 %v1834, %v1833
      %v1864 = vpack.c.bf16 %v1836, %v1835
      %v1865 = vpack.c.bf16 %v1838, %v1837
      %v1866 = vpack.c.bf16 %v1840, %v1839
      %v1867 = vpack.c.bf16 %v1842, %v1841
      %v1868 = vpack.c.bf16 %v1844, %v1843
      %v1869 = vpack.c.bf16 %v1846, %v1845
      %v1870 = vpack.c.bf16 %v1848, %v1847
      %v1871 = vpack.c.bf16 %v1850, %v1849
      %v1872 = vpack.c.bf16 %v1852, %v1851
      %v1873 = vpack.c.bf16 %v1854, %v1853
      %v1874 = vpack.c.bf16 %v1856, %v1855
      %v1875 = vpack.c.bf16 %v1858, %v1857
      %v1876 = vpack.c.bf16 %v1860, %v1859
      %v1877 = vld [vmem:[%s1] sm:$0xf]
      %v1878 = vld [vmem:[%s1 + $0x4] sm:$0xf]
      %v1879 = vld [vmem:[%s1 + $0x8] sm:$0xf]
      %v1880 = vld [vmem:[%s1 + $0xc] sm:$0xf]
      %v1881 = vld [vmem:[%s1 + $0x10] sm:$0x3]
      %v1882 = vld [vmem:[%s2] sm:$0x1]
      %v1884 = vperm.slane %v1882, 0
      %v1891 = vunpack.c.l.b16 %v1877
      %v1892 = vunpack.c.l.b16 %v1878
      %v1893 = vunpack.c.l.b16 %v1879
      %v1894 = vunpack.c.l.b16 %v1880
      %v1895 = vunpack.c.l.b16 %v1881
      %v1896 = vpack.c.b16 %v1892, %v1891
      %v1897 = vpack.c.b16 %v1894, %v1893
      %v1898 = vpack.c.b16 %v1895, %v1895
      %vm1901 = vcmask 293888
      %v1903 = vsel %vm1901, %v1861, 0
      %v1906 = vsel %vm1901, %v1862, 0
      %v1909 = vsel %vm1901, %v1863, 0
      %v1912 = vsel %vm1901, %v1864, 0
      %v1915 = vsel %vm1901, %v1865, 0
      %v1918 = vsel %vm1901, %v1866, 0
      %v1921 = vsel %vm1901, %v1867, 0
      %v1924 = vsel %vm1901, %v1868, 0
      %v1927 = vsel %vm1901, %v1869, 0
      %v1930 = vsel %vm1901, %v1870, 0
      %v1933 = vsel %vm1901, %v1871, 0
      %v1936 = vsel %vm1901, %v1872, 0
      %v1939 = vsel %vm1901, %v1873, 0
      %v1942 = vsel %vm1901, %v1874, 0
      %v1945 = vsel %vm1901, %v1875, 0
      %v1948 = vsel %vm1901, %v1876, 0
      %vm1950 = vcmask 1041408
      %v1952 = vsel %vm1950, %v1898, 0
      %1954 = vmatpush.bf16.msra.mxu0 0
      %1955 = vmatpush.bf16.msra.mxu0 0
      %1956 = vmatpush.bf16.msra.mxu0 0
      %1957 = vmatpush.bf16.msra.mxu0 0
      %1958 = vmatpush.bf16.msra.mxu0 0
      %1959 = vmatpush.bf16.msra.mxu0 %v1952
      %1960 = vmatpush.bf16.msra.mxu0 %v1897
      %1961 = vmatpush.bf16.msra.mxu0 %v1896
      %1962 = vmatmul.bf16.gmra.mxu0 %v1903
      %v1963 = vpop.f32.mrf.mxu0
      %v1964 = vadd.f32 %v1884, %v1963
      %v1965 = vpop.f32.mrf.mxu0
      %v1966 = vadd.f32 %v1884, %v1965
      %1967 = vmatmul.bf16.gmra.mxu0 %v1906
      %v1968 = vpop.f32.mrf.mxu0
      %v1969 = vadd.f32 %v1884, %v1968
      %v1970 = vpop.f32.mrf.mxu0
      %v1971 = vadd.f32 %v1884, %v1970
      %1972 = vmatmul.bf16.gmra.mxu0 %v1909
      %v1973 = vpop.f32.mrf.mxu0
      %v1974 = vadd.f32 %v1884, %v1973
      %v1975 = vpop.f32.mrf.mxu0
      %v1976 = vadd.f32 %v1884, %v1975
      %1977 = vmatmul.bf16.gmra.mxu0 %v1912
      %v1978 = vpop.f32.mrf.mxu0
      %v1979 = vadd.f32 %v1884, %v1978
      %v1980 = vpop.f32.mrf.mxu0
      %v1981 = vadd.f32 %v1884, %v1980
      %1982 = vmatmul.bf16.gmra.mxu0 %v1915
      %v1983 = vpop.f32.mrf.mxu0
      %v1984 = vadd.f32 %v1884, %v1983
      %v1985 = vpop.f32.mrf.mxu0
      %v1986 = vadd.f32 %v1884, %v1985
      %1987 = vmatmul.bf16.gmra.mxu0 %v1918
      %v1988 = vpop.f32.mrf.mxu0
      %v1989 = vadd.f32 %v1884, %v1988
      %v1990 = vpop.f32.mrf.mxu0
      %v1991 = vadd.f32 %v1884, %v1990
      %1992 = vmatmul.bf16.gmra.mxu0 %v1921
      %v1993 = vpop.f32.mrf.mxu0
      %v1994 = vadd.f32 %v1884, %v1993
      %v1995 = vpop.f32.mrf.mxu0
      %v1996 = vadd.f32 %v1884, %v1995
      %1997 = vmatmul.bf16.gmra.mxu0 %v1924
      %v1998 = vpop.f32.mrf.mxu0
      %v1999 = vadd.f32 %v1884, %v1998
      %v2000 = vpop.f32.mrf.mxu0
      %v2001 = vadd.f32 %v1884, %v2000
      %2002 = vmatmul.bf16.gmra.mxu0 %v1927
      %v2003 = vpop.f32.mrf.mxu0
      %v2004 = vadd.f32 %v1884, %v2003
      %v2005 = vpop.f32.mrf.mxu0
      %v2006 = vadd.f32 %v1884, %v2005
      %2007 = vmatmul.bf16.gmra.mxu0 %v1930
      %v2008 = vpop.f32.mrf.mxu0
      %v2009 = vadd.f32 %v1884, %v2008
      %v2010 = vpop.f32.mrf.mxu0
      %v2011 = vadd.f32 %v1884, %v2010
      %2012 = vmatmul.bf16.gmra.mxu0 %v1933
      %v2013 = vpop.f32.mrf.mxu0
      %v2014 = vadd.f32 %v1884, %v2013
      %v2015 = vpop.f32.mrf.mxu0
      %v2016 = vadd.f32 %v1884, %v2015
      %2017 = vmatmul.bf16.gmra.mxu0 %v1936
      %v2018 = vpop.f32.mrf.mxu0
      %v2019 = vadd.f32 %v1884, %v2018
      %v2020 = vpop.f32.mrf.mxu0
      %v2021 = vadd.f32 %v1884, %v2020
      %2022 = vmatmul.bf16.gmra.mxu0 %v1939
      %v2023 = vpop.f32.mrf.mxu0
      %v2024 = vadd.f32 %v1884, %v2023
      %v2025 = vpop.f32.mrf.mxu0
      %v2026 = vadd.f32 %v1884, %v2025
      %2027 = vmatmul.bf16.gmra.mxu0 %v1942
      %v2028 = vpop.f32.mrf.mxu0
      %v2029 = vadd.f32 %v1884, %v2028
      %v2030 = vpop.f32.mrf.mxu0
      %v2031 = vadd.f32 %v1884, %v2030
      %2032 = vmatmul.bf16.gmra.mxu0 %v1945
      %v2033 = vpop.f32.mrf.mxu0
      %v2034 = vadd.f32 %v1884, %v2033
      %v2035 = vpop.f32.mrf.mxu0
      %v2036 = vadd.f32 %v1884, %v2035
      %2037 = vmatmul.bf16.gmra.mxu0 %v1948
      %v2038 = vpop.f32.mrf.mxu0
      %v2039 = vadd.f32 %v1884, %v2038
      %v2040 = vpop.f32.mrf.mxu0
      %v2041 = vadd.f32 %v1884, %v2040
      %2042 = vdwg.mxu0
      %v2043 = vmax.f32 %v1964, 0.0
      %v2044 = vmax.f32 %v1966, 0.0
      %v2045 = vmax.f32 %v1969, 0.0
      %v2046 = vmax.f32 %v1971, 0.0
      %v2047 = vmax.f32 %v1974, 0.0
      %v2048 = vmax.f32 %v1976, 0.0
      %v2049 = vmax.f32 %v1979, 0.0
      %v2050 = vmax.f32 %v1981, 0.0
      %v2051 = vmax.f32 %v1984, 0.0
      %v2052 = vmax.f32 %v1986, 0.0
      %v2053 = vmax.f32 %v1989, 0.0
      %v2054 = vmax.f32 %v1991, 0.0
      %v2055 = vmax.f32 %v1994, 0.0
      %v2056 = vmax.f32 %v1996, 0.0
      %v2057 = vmax.f32 %v1999, 0.0
      %v2058 = vmax.f32 %v2001, 0.0
      %v2059 = vmax.f32 %v2004, 0.0
      %v2060 = vmax.f32 %v2006, 0.0
      %v2061 = vmax.f32 %v2009, 0.0
      %v2062 = vmax.f32 %v2011, 0.0
      %v2063 = vmax.f32 %v2014, 0.0
      %v2064 = vmax.f32 %v2016, 0.0
      %v2065 = vmax.f32 %v2019, 0.0
      %v2066 = vmax.f32 %v2021, 0.0
      %v2067 = vmax.f32 %v2024, 0.0
      %v2068 = vmax.f32 %v2026, 0.0
      %v2069 = vmax.f32 %v2029, 0.0
      %v2070 = vmax.f32 %v2031, 0.0
      %v2071 = vmax.f32 %v2034, 0.0
      %v2072 = vmax.f32 %v2036, 0.0
      %v2073 = vmax.f32 %v2039, 0.0
      %v2074 = vmax.f32 %v2041, 0.0
      %v2107 = vrot.slane %v2043, 1
      %v2108 = vrot.slane %v2044, 1
      %v2109 = vsel %vm793, %v2107, %v2108
      %v2110 = vrot.slane %v2045, 1
      %v2111 = vsel %vm793, %v2108, %v2110
      %v2112 = vrot.slane %v2046, 1
      %v2113 = vsel %vm793, %v2110, %v2112
      %v2114 = vrot.slane %v2047, 1
      %v2115 = vsel %vm793, %v2112, %v2114
      %v2116 = vrot.slane %v2048, 1
      %v2117 = vsel %vm793, %v2114, %v2116
      %v2118 = vrot.slane %v2049, 1
      %v2119 = vsel %vm793, %v2116, %v2118
      %v2120 = vrot.slane %v2050, 1
      %v2121 = vsel %vm793, %v2118, %v2120
      %v2122 = vrot.slane %v2051, 1
      %v2123 = vsel %vm793, %v2120, %v2122
      %v2124 = vrot.slane %v2052, 1
      %v2125 = vsel %vm793, %v2122, %v2124
      %v2126 = vrot.slane %v2053, 1
      %v2127 = vsel %vm793, %v2124, %v2126
      %v2128 = vrot.slane %v2054, 1
      %v2129 = vsel %vm793, %v2126, %v2128
      %v2130 = vrot.slane %v2055, 1
      %v2131 = vsel %vm793, %v2128, %v2130
      %v2132 = vrot.slane %v2056, 1
      %v2133 = vsel %vm793, %v2130, %v2132
      %v2134 = vrot.slane %v2057, 1
      %v2135 = vsel %vm793, %v2132, %v2134
      %v2136 = vrot.slane %v2058, 1
      %v2137 = vsel %vm793, %v2134, %v2136
      %v2138 = vrot.slane %v2059, 1
      %v2139 = vsel %vm793, %v2136, %v2138
      %v2140 = vrot.slane %v2060, 1
      %v2141 = vsel %vm793, %v2138, %v2140
      %v2142 = vrot.slane %v2061, 1
      %v2143 = vsel %vm793, %v2140, %v2142
      %v2144 = vrot.slane %v2062, 1
      %v2145 = vsel %vm793, %v2142, %v2144
      %v2146 = vrot.slane %v2063, 1
      %v2147 = vsel %vm793, %v2144, %v2146
      %v2148 = vrot.slane %v2064, 1
      %v2149 = vsel %vm793, %v2146, %v2148
      %v2150 = vrot.slane %v2065, 1
      %v2151 = vsel %vm793, %v2148, %v2150
      %v2152 = vrot.slane %v2066, 1
      %v2153 = vsel %vm793, %v2150, %v2152
      %v2154 = vrot.slane %v2067, 1
      %v2155 = vsel %vm793, %v2152, %v2154
      %v2156 = vrot.slane %v2068, 1
      %v2157 = vsel %vm793, %v2154, %v2156
      %v2158 = vrot.slane %v2069, 1
      %v2159 = vsel %vm793, %v2156, %v2158
      %v2160 = vrot.slane %v2070, 1
      %v2161 = vsel %vm793, %v2158, %v2160
      %v2162 = vrot.slane %v2071, 1
      %v2163 = vsel %vm793, %v2160, %v2162
      %v2164 = vrot.slane %v2072, 1
      %v2165 = vsel %vm793, %v2162, %v2164
      %v2166 = vrot.slane %v2073, 1
      %v2167 = vsel %vm793, %v2164, %v2166
      %v2168 = vrot.slane %v2074, 1
      %v2169 = vsel %vm793, %v2166, %v2168
      %v2203 = vsel %vm793, %v2168, %v2107
      %v2204 = vmax.f32 %v2043, %v2109
      %v2205 = vmax.f32 %v2044, %v2111
      %v2206 = vmax.f32 %v2045, %v2113
      %v2207 = vmax.f32 %v2046, %v2115
      %v2208 = vmax.f32 %v2047, %v2117
      %v2209 = vmax.f32 %v2048, %v2119
      %v2210 = vmax.f32 %v2049, %v2121
      %v2211 = vmax.f32 %v2050, %v2123
      %v2212 = vmax.f32 %v2051, %v2125
      %v2213 = vmax.f32 %v2052, %v2127
      %v2214 = vmax.f32 %v2053, %v2129
      %v2215 = vmax.f32 %v2054, %v2131
      %v2216 = vmax.f32 %v2055, %v2133
      %v2217 = vmax.f32 %v2056, %v2135
      %v2218 = vmax.f32 %v2057, %v2137
      %v2219 = vmax.f32 %v2058, %v2139
      %v2220 = vmax.f32 %v2059, %v2141
      %v2221 = vmax.f32 %v2060, %v2143
      %v2222 = vmax.f32 %v2061, %v2145
      %v2223 = vmax.f32 %v2062, %v2147
      %v2224 = vmax.f32 %v2063, %v2149
      %v2225 = vmax.f32 %v2064, %v2151
      %v2226 = vmax.f32 %v2065, %v2153
      %v2227 = vmax.f32 %v2066, %v2155
      %v2228 = vmax.f32 %v2067, %v2157
      %v2229 = vmax.f32 %v2068, %v2159
      %v2230 = vmax.f32 %v2069, %v2161
      %v2231 = vmax.f32 %v2070, %v2163
      %v2232 = vmax.f32 %v2071, %v2165
      %v2233 = vmax.f32 %v2072, %v2167
      %v2234 = vmax.f32 %v2073, %v2169
      %v2235 = vmax.f32 %v2074, %v2203
      %v2236 = vmax.f32 %v2204, %v2206
      %v2237 = vmax.f32 %v2205, %v2207
      %v2238 = vmax.f32 %v2206, %v2208
      %v2239 = vmax.f32 %v2207, %v2209
      %v2240 = vmax.f32 %v2208, %v2210
      %v2241 = vmax.f32 %v2209, %v2211
      %v2242 = vmax.f32 %v2210, %v2212
      %v2243 = vmax.f32 %v2211, %v2213
      %v2244 = vmax.f32 %v2212, %v2214
      %v2245 = vmax.f32 %v2213, %v2215
      %v2246 = vmax.f32 %v2214, %v2216
      %v2247 = vmax.f32 %v2215, %v2217
      %v2248 = vmax.f32 %v2216, %v2218
      %v2249 = vmax.f32 %v2217, %v2219
      %v2250 = vmax.f32 %v2218, %v2220
      %v2251 = vmax.f32 %v2219, %v2221
      %v2252 = vmax.f32 %v2220, %v2222
      %v2253 = vmax.f32 %v2221, %v2223
      %v2254 = vmax.f32 %v2222, %v2224
      %v2255 = vmax.f32 %v2223, %v2225
      %v2256 = vmax.f32 %v2224, %v2226
      %v2257 = vmax.f32 %v2225, %v2227
      %v2258 = vmax.f32 %v2226, %v2228
      %v2259 = vmax.f32 %v2227, %v2229
      %v2260 = vmax.f32 %v2228, %v2230
      %v2261 = vmax.f32 %v2229, %v2231
      %v2262 = vmax.f32 %v2230, %v2232
      %v2263 = vmax.f32 %v2231, %v2233
      %v2264 = vmax.f32 %v2232, %v2234
      %v2265 = vmax.f32 %v2233, %v2235
      %v2266 = vmax.f32 %v2234, %v2204
      %v2267 = vmax.f32 %v2235, %v2205
      %vm2268 = vcmask 261120
      %2269 = vst.msk [vmem:[#allocation3] sm:$0xff] %vm2268, %v2236
      %2270 = vst.msk [vmem:[#allocation3 + $0x8] sm:$0xff] %vm2268, %v2237
      %2271 = vst.msk [vmem:[#allocation3 + $0x10] sm:$0xff] %vm2268, %v2238
      %2272 = vst.msk [vmem:[#allocation3 + $0x18] sm:$0xff] %vm2268, %v2239
      %2273 = vst.msk [vmem:[#allocation3 + $0x20] sm:$0xff] %vm2268, %v2240
      %2274 = vst.msk [vmem:[#allocation3 + $0x28] sm:$0xff] %vm2268, %v2241
      %2275 = vst.msk [vmem:[#allocation3 + $0x30] sm:$0xff] %vm2268, %v2242
      %2276 = vst.msk [vmem:[#allocation3 + $0x38] sm:$0xff] %vm2268, %v2243
      %2277 = vst.msk [vmem:[#allocation3 + $0x40] sm:$0xff] %vm2268, %v2244
      %2278 = vst.msk [vmem:[#allocation3 + $0x48] sm:$0xff] %vm2268, %v2245
      %2279 = vst.msk [vmem:[#allocation3 + $0x50] sm:$0xff] %vm2268, %v2246
      %2280 = vst.msk [vmem:[#allocation3 + $0x58] sm:$0xff] %vm2268, %v2247
      %2281 = vst.msk [vmem:[#allocation3 + $0x60] sm:$0xff] %vm2268, %v2248
      %2282 = vst.msk [vmem:[#allocation3 + $0x68] sm:$0xff] %vm2268, %v2249
      %2283 = vst.msk [vmem:[#allocation3 + $0x70] sm:$0xff] %vm2268, %v2250
      %2284 = vst.msk [vmem:[#allocation3 + $0x78] sm:$0xff] %vm2268, %v2251
      %2285 = vst.msk [vmem:[#allocation3 + $0x80] sm:$0xff] %vm2268, %v2252
      %2286 = vst.msk [vmem:[#allocation3 + $0x88] sm:$0xff] %vm2268, %v2253
      %2287 = vst.msk [vmem:[#allocation3 + $0x90] sm:$0xff] %vm2268, %v2254
      %2288 = vst.msk [vmem:[#allocation3 + $0x98] sm:$0xff] %vm2268, %v2255
      %2289 = vst.msk [vmem:[#allocation3 + $0xa0] sm:$0xff] %vm2268, %v2256
      %2290 = vst.msk [vmem:[#allocation3 + $0xa8] sm:$0xff] %vm2268, %v2257
      %2291 = vst.msk [vmem:[#allocation3 + $0xb0] sm:$0xff] %vm2268, %v2258
      %2292 = vst.msk [vmem:[#allocation3 + $0xb8] sm:$0xff] %vm2268, %v2259
      %2293 = vst.msk [vmem:[#allocation3 + $0xc0] sm:$0xff] %vm2268, %v2260
      %2294 = vst.msk [vmem:[#allocation3 + $0xc8] sm:$0xff] %vm2268, %v2261
      %2295 = vst.msk [vmem:[#allocation3 + $0xd0] sm:$0xff] %vm2268, %v2262
      %2296 = vst.msk [vmem:[#allocation3 + $0xd8] sm:$0xff] %vm2268, %v2263
      %2297 = vst.msk [vmem:[#allocation3 + $0xe0] sm:$0xff] %vm2268, %v2264
      %2298 = vst.msk [vmem:[#allocation3 + $0xe8] sm:$0xff] %vm2268, %v2265
      %2299 = vst.msk [vmem:[#allocation3 + $0xf0] sm:$0xff] %vm2268, %v2266
      %2300 = vst.msk [vmem:[#allocation3 + $0xf8] sm:$0xff] %vm2268, %v2267
      %v2301 = vld [vmem:[#allocation3] ss:$2 sm:$0xff]
      %s2302 = scalar_lea.vmem [#allocation3], 32
      %v2303 = vld [vmem:[%s2302] ss:$2 sm:$0xff]
      %s2304 = scalar_lea.vmem [#allocation3], 64
      %v2305 = vld [vmem:[%s2304] ss:$2 sm:$0xff]
      %s2306 = scalar_lea.vmem [#allocation3], 96
      %v2307 = vld [vmem:[%s2306] ss:$2 sm:$0xff]
      %s2308 = scalar_lea.vmem [#allocation3], 128
      %v2309 = vld [vmem:[%s2308] ss:$2 sm:$0xff]
      %s2310 = scalar_lea.vmem [#allocation3], 160
      %v2311 = vld [vmem:[%s2310] ss:$2 sm:$0xff]
      %s2312 = scalar_lea.vmem [#allocation3], 192
      %v2313 = vld [vmem:[%s2312] ss:$2 sm:$0xff]
      %s2314 = scalar_lea.vmem [#allocation3], 224
      %v2315 = vld [vmem:[%s2314] ss:$2 sm:$0xff]
      %v2318 = vrot.slane %v2313, 7
      %v2319 = vrot.slane %v2315, 7
      %v2320 = vsel %vm504, %v2318, %v2319
      %v2329 = vrot.slane %v2301, 7
      %v2330 = vrot.slane %v2303, 7
      %v2331 = vsel %vm504, %v2329, %v2330
      %v2332 = vrot.slane %v2305, 7
      %v2333 = vsel %vm504, %v2330, %v2332
      %v2334 = vrot.slane %v2307, 7
      %v2335 = vsel %vm504, %v2332, %v2334
      %v2336 = vrot.slane %v2309, 7
      %v2337 = vsel %vm504, %v2334, %v2336
      %v2338 = vrot.slane %v2311, 7
      %v2339 = vsel %vm504, %v2336, %v2338
      %v2340 = vsel %vm504, %v2338, %v2318
      %v2348 = vsel %vm504, %v2319, %v2329
      %2349 = vst.msk [vmem:[#allocation2] sm:$0xff] %vm2268, %v2320
      %2350 = vst.msk [vmem:[#allocation2 + $0x18] sm:$0xff] %vm2268, %v2348
      %2351 = vst.msk [vmem:[#allocation2 + $0x30] sm:$0xff] %vm2268, %v2331
      %2352 = vst.msk [vmem:[#allocation2 + $0x48] sm:$0xff] %vm2268, %v2333
      %2353 = vst.msk [vmem:[#allocation2 + $0x60] sm:$0xff] %vm2268, %v2335
      %2354 = vst.msk [vmem:[#allocation2 + $0x78] sm:$0xff] %vm2268, %v2337
      %2355 = vst.msk [vmem:[#allocation2 + $0x90] sm:$0xff] %vm2268, %v2339
      %2356 = vst.msk [vmem:[#allocation2 + $0xa8] sm:$0xff] %vm2268, %v2340
      %2357 = vrot.lane.b32.xlu0 %v2315, 32
      %v2358 = vpop.permute.xlu0 %2357
      %2359 = vrot.lane.b32.xlu0 %v2301, 32
      %v2360 = vpop.permute.xlu0 %2359
      %2361 = vrot.lane.b32.xlu0 %v2303, 32
      %v2362 = vpop.permute.xlu0 %2361
      %2363 = vrot.lane.b32.xlu0 %v2305, 32
      %v2364 = vpop.permute.xlu0 %2363
      %2365 = vrot.lane.b32.xlu0 %v2307, 32
      %v2366 = vpop.permute.xlu0 %2365
      %2367 = vrot.lane.b32.xlu0 %v2309, 32
      %v2368 = vpop.permute.xlu0 %2367
      %2369 = vrot.lane.b32.xlu0 %v2311, 32
      %v2370 = vpop.permute.xlu0 %2369
      %2371 = vrot.lane.b32.xlu0 %v2313, 32
      %v2372 = vpop.permute.xlu0 %2371
      %vm2381 = vcmask 523520
      %2382 = vst.msk [vmem:[#allocation2] sm:$0xff] %vm2381, %v2358
      %2383 = vst.msk [vmem:[#allocation2 + $0x18] sm:$0xff] %vm2381, %v2360
      %2384 = vst.msk [vmem:[#allocation2 + $0x30] sm:$0xff] %vm2381, %v2362
      %2385 = vst.msk [vmem:[#allocation2 + $0x48] sm:$0xff] %vm2381, %v2364
      %2386 = vst.msk [vmem:[#allocation2 + $0x60] sm:$0xff] %vm2381, %v2366
      %2387 = vst.msk [vmem:[#allocation2 + $0x78] sm:$0xff] %vm2381, %v2368
      %2388 = vst.msk [vmem:[#allocation2 + $0x90] sm:$0xff] %vm2381, %v2370
      %2389 = vst.msk [vmem:[#allocation2 + $0xa8] sm:$0xff] %vm2381, %v2372
      %v2390 = vrot.slane %v2315, 1
      %v2392 = vrot.slane %v2301, 1
      %v2393 = vrot.slane %v2303, 1
      %v2394 = vsel %vm793, %v2392, %v2393
      %v2395 = vrot.slane %v2305, 1
      %v2396 = vsel %vm793, %v2393, %v2395
      %v2397 = vrot.slane %v2307, 1
      %v2398 = vsel %vm793, %v2395, %v2397
      %v2399 = vrot.slane %v2309, 1
      %v2400 = vsel %vm793, %v2397, %v2399
      %v2401 = vrot.slane %v2311, 1
      %v2402 = vsel %vm793, %v2399, %v2401
      %v2403 = vrot.slane %v2313, 1
      %v2404 = vsel %vm793, %v2401, %v2403
      %v2405 = vsel %vm793, %v2403, %v2390
      %v2407 = vsel %vm793, %v2390, %v2392
      %2409 = vrot.lane.b32.xlu0 %v2407, 64
      %v2410 = vpop.permute.xlu0 %2409
      %2411 = vrot.lane.b32.xlu0 %v2394, 64
      %v2412 = vpop.permute.xlu0 %2411
      %2413 = vrot.lane.b32.xlu0 %v2396, 64
      %v2414 = vpop.permute.xlu0 %2413
      %2415 = vrot.lane.b32.xlu0 %v2398, 64
      %v2416 = vpop.permute.xlu0 %2415
      %2417 = vrot.lane.b32.xlu0 %v2400, 64
      %v2418 = vpop.permute.xlu0 %2417
      %2419 = vrot.lane.b32.xlu0 %v2402, 64
      %v2420 = vpop.permute.xlu0 %2419
      %2421 = vrot.lane.b32.xlu0 %v2404, 64
      %v2422 = vpop.permute.xlu0 %2421
      %2423 = vrot.lane.b32.xlu0 %v2405, 64
      %v2424 = vpop.permute.xlu0 %2423
      %vm2433 = vcmask 785920
      %2434 = vst.msk [vmem:[#allocation2] sm:$0xff] %vm2433, %v2410
      %2435 = vst.msk [vmem:[#allocation2 + $0x18] sm:$0xff] %vm2433, %v2412
      %2436 = vst.msk [vmem:[#allocation2 + $0x30] sm:$0xff] %vm2433, %v2414
      %2437 = vst.msk [vmem:[#allocation2 + $0x48] sm:$0xff] %vm2433, %v2416
      %2438 = vst.msk [vmem:[#allocation2 + $0x60] sm:$0xff] %vm2433, %v2418
      %2439 = vst.msk [vmem:[#allocation2 + $0x78] sm:$0xff] %vm2433, %v2420
      %2440 = vst.msk [vmem:[#allocation2 + $0x90] sm:$0xff] %vm2433, %v2422
      %2441 = vst.msk [vmem:[#allocation2 + $0xa8] sm:$0xff] %vm2433, %v2424
      %2443 = vrot.lane.b32.xlu0 %v2348, 96
      %v2444 = vpop.permute.xlu0 %2443
      %2445 = vrot.lane.b32.xlu0 %v2331, 96
      %v2446 = vpop.permute.xlu0 %2445
      %2447 = vrot.lane.b32.xlu0 %v2333, 96
      %v2448 = vpop.permute.xlu0 %2447
      %2449 = vrot.lane.b32.xlu0 %v2335, 96
      %v2450 = vpop.permute.xlu0 %2449
      %2451 = vrot.lane.b32.xlu0 %v2337, 96
      %v2452 = vpop.permute.xlu0 %2451
      %2453 = vrot.lane.b32.xlu0 %v2339, 96
      %v2454 = vpop.permute.xlu0 %2453
      %2455 = vrot.lane.b32.xlu0 %v2340, 96
      %v2456 = vpop.permute.xlu0 %2455
      %2457 = vrot.lane.b32.xlu0 %v2320, 96
      %v2458 = vpop.permute.xlu0 %2457
      %vm2467 = vcmask 1048320
      %2468 = vst.msk [vmem:[#allocation2] sm:$0xff] %vm2467, %v2444
      %2469 = vst.msk [vmem:[#allocation2 + $0x18] sm:$0xff] %vm2467, %v2446
      %2470 = vst.msk [vmem:[#allocation2 + $0x30] sm:$0xff] %vm2467, %v2448
      %2471 = vst.msk [vmem:[#allocation2 + $0x48] sm:$0xff] %vm2467, %v2450
      %2472 = vst.msk [vmem:[#allocation2 + $0x60] sm:$0xff] %vm2467, %v2452
      %2473 = vst.msk [vmem:[#allocation2 + $0x78] sm:$0xff] %vm2467, %v2454
      %2474 = vst.msk [vmem:[#allocation2 + $0x90] sm:$0xff] %vm2467, %v2456
      %2475 = vst.msk [vmem:[#allocation2 + $0xa8] sm:$0xff] %vm2467, %v2458
      %2476 = vst.msk [vmem:[#allocation2 + $0x8] sm:$0xff] %vm2268, %v2301
      %2477 = vst.msk [vmem:[#allocation2 + $0x20] sm:$0xff] %vm2268, %v2303
      %2478 = vst.msk [vmem:[#allocation2 + $0x38] sm:$0xff] %vm2268, %v2305
      %2479 = vst.msk [vmem:[#allocation2 + $0x50] sm:$0xff] %vm2268, %v2307
      %2480 = vst.msk [vmem:[#allocation2 + $0x68] sm:$0xff] %vm2268, %v2309
      %2481 = vst.msk [vmem:[#allocation2 + $0x80] sm:$0xff] %vm2268, %v2311
      %2482 = vst.msk [vmem:[#allocation2 + $0x98] sm:$0xff] %vm2268, %v2313
      %2483 = vst.msk [vmem:[#allocation2 + $0xb0] sm:$0xff] %vm2268, %v2315
      %2484 = vrot.lane.b32.xlu0 %v2394, 32
      %v2485 = vpop.permute.xlu0 %2484
      %2486 = vrot.lane.b32.xlu0 %v2396, 32
      %v2487 = vpop.permute.xlu0 %2486
      %2488 = vrot.lane.b32.xlu0 %v2398, 32
      %v2489 = vpop.permute.xlu0 %2488
      %2490 = vrot.lane.b32.xlu0 %v2400, 32
      %v2491 = vpop.permute.xlu0 %2490
      %2492 = vrot.lane.b32.xlu0 %v2402, 32
      %v2493 = vpop.permute.xlu0 %2492
      %2494 = vrot.lane.b32.xlu0 %v2404, 32
      %v2495 = vpop.permute.xlu0 %2494
      %2496 = vrot.lane.b32.xlu0 %v2405, 32
      %v2497 = vpop.permute.xlu0 %2496
      %2498 = vrot.lane.b32.xlu0 %v2407, 32
      %v2499 = vpop.permute.xlu0 %2498
      %2508 = vst.msk [vmem:[#allocation2 + $0x8] sm:$0xff] %vm2381, %v2485
      %2509 = vst.msk [vmem:[#allocation2 + $0x20] sm:$0xff] %vm2381, %v2487
      %2510 = vst.msk [vmem:[#allocation2 + $0x38] sm:$0xff] %vm2381, %v2489
      %2511 = vst.msk [vmem:[#allocation2 + $0x50] sm:$0xff] %vm2381, %v2491
      %2512 = vst.msk [vmem:[#allocation2 + $0x68] sm:$0xff] %vm2381, %v2493
      %2513 = vst.msk [vmem:[#allocation2 + $0x80] sm:$0xff] %vm2381, %v2495
      %2514 = vst.msk [vmem:[#allocation2 + $0x98] sm:$0xff] %vm2381, %v2497
      %2515 = vst.msk [vmem:[#allocation2 + $0xb0] sm:$0xff] %vm2381, %v2499
      %2516 = vrot.lane.b32.xlu0 %v2331, 64
      %v2517 = vpop.permute.xlu0 %2516
      %2518 = vrot.lane.b32.xlu0 %v2333, 64
      %v2519 = vpop.permute.xlu0 %2518
      %2520 = vrot.lane.b32.xlu0 %v2335, 64
      %v2521 = vpop.permute.xlu0 %2520
      %2522 = vrot.lane.b32.xlu0 %v2337, 64
      %v2523 = vpop.permute.xlu0 %2522
      %2524 = vrot.lane.b32.xlu0 %v2339, 64
      %v2525 = vpop.permute.xlu0 %2524
      %2526 = vrot.lane.b32.xlu0 %v2340, 64
      %v2527 = vpop.permute.xlu0 %2526
      %2528 = vrot.lane.b32.xlu0 %v2320, 64
      %v2529 = vpop.permute.xlu0 %2528
      %2530 = vrot.lane.b32.xlu0 %v2348, 64
      %v2531 = vpop.permute.xlu0 %2530
      %2540 = vst.msk [vmem:[#allocation2 + $0x8] sm:$0xff] %vm2433, %v2517
      %2541 = vst.msk [vmem:[#allocation2 + $0x20] sm:$0xff] %vm2433, %v2519
      %2542 = vst.msk [vmem:[#allocation2 + $0x38] sm:$0xff] %vm2433, %v2521
      %2543 = vst.msk [vmem:[#allocation2 + $0x50] sm:$0xff] %vm2433, %v2523
      %2544 = vst.msk [vmem:[#allocation2 + $0x68] sm:$0xff] %vm2433, %v2525
      %2545 = vst.msk [vmem:[#allocation2 + $0x80] sm:$0xff] %vm2433, %v2527
      %2546 = vst.msk [vmem:[#allocation2 + $0x98] sm:$0xff] %vm2433, %v2529
      %2547 = vst.msk [vmem:[#allocation2 + $0xb0] sm:$0xff] %vm2433, %v2531
      %2548 = vrot.lane.b32.xlu0 %v2303, 96
      %v2549 = vpop.permute.xlu0 %2548
      %2550 = vrot.lane.b32.xlu0 %v2305, 96
      %v2551 = vpop.permute.xlu0 %2550
      %2552 = vrot.lane.b32.xlu0 %v2307, 96
      %v2553 = vpop.permute.xlu0 %2552
      %2554 = vrot.lane.b32.xlu0 %v2309, 96
      %v2555 = vpop.permute.xlu0 %2554
      %2556 = vrot.lane.b32.xlu0 %v2311, 96
      %v2557 = vpop.permute.xlu0 %2556
      %2558 = vrot.lane.b32.xlu0 %v2313, 96
      %v2559 = vpop.permute.xlu0 %2558
      %2560 = vrot.lane.b32.xlu0 %v2315, 96
      %v2561 = vpop.permute.xlu0 %2560
      %2562 = vrot.lane.b32.xlu0 %v2301, 96
      %v2563 = vpop.permute.xlu0 %2562
      %2572 = vst.msk [vmem:[#allocation2 + $0x8] sm:$0xff] %vm2467, %v2549
      %2573 = vst.msk [vmem:[#allocation2 + $0x20] sm:$0xff] %vm2467, %v2551
      %2574 = vst.msk [vmem:[#allocation2 + $0x38] sm:$0xff] %vm2467, %v2553
      %2575 = vst.msk [vmem:[#allocation2 + $0x50] sm:$0xff] %vm2467, %v2555
      %2576 = vst.msk [vmem:[#allocation2 + $0x68] sm:$0xff] %vm2467, %v2557
      %2577 = vst.msk [vmem:[#allocation2 + $0x80] sm:$0xff] %vm2467, %v2559
      %2578 = vst.msk [vmem:[#allocation2 + $0x98] sm:$0xff] %vm2467, %v2561
      %2579 = vst.msk [vmem:[#allocation2 + $0xb0] sm:$0xff] %vm2467, %v2563
      %2587 = vst.msk [vmem:[#allocation2 + $0x10] sm:$0xff] %vm2268, %v2396
      %2588 = vst.msk [vmem:[#allocation2 + $0x28] sm:$0xff] %vm2268, %v2398
      %2589 = vst.msk [vmem:[#allocation2 + $0x40] sm:$0xff] %vm2268, %v2400
      %2590 = vst.msk [vmem:[#allocation2 + $0x58] sm:$0xff] %vm2268, %v2402
      %2591 = vst.msk [vmem:[#allocation2 + $0x70] sm:$0xff] %vm2268, %v2404
      %2592 = vst.msk [vmem:[#allocation2 + $0x88] sm:$0xff] %vm2268, %v2405
      %2593 = vst.msk [vmem:[#allocation2 + $0xa0] sm:$0xff] %vm2268, %v2407
      %2594 = vst.msk [vmem:[#allocation2 + $0xb8] sm:$0xff] %vm2268, %v2394
      %v2595 = vld [vmem:[#allocation2] sm:$0xff]
      %v2596 = vld [vmem:[#allocation2 + $0x8] sm:$0xff]
      %v2597 = vld [vmem:[#allocation2 + $0x10] sm:$0xff]
      %v2598 = vld [vmem:[#allocation2 + $0x18] sm:$0xff]
      %v2599 = vld [vmem:[#allocation2 + $0x20] sm:$0xff]
      %v2600 = vld [vmem:[#allocation2 + $0x28] sm:$0xff]
      %v2601 = vld [vmem:[#allocation2 + $0x30] sm:$0xff]
      %v2602 = vld [vmem:[#allocation2 + $0x38] sm:$0xff]
      %v2603 = vld [vmem:[#allocation2 + $0x40] sm:$0xff]
      %v2604 = vld [vmem:[#allocation2 + $0x48] sm:$0xff]
      %v2605 = vld [vmem:[#allocation2 + $0x50] sm:$0xff]
      %v2606 = vld [vmem:[#allocation2 + $0x58] sm:$0xff]
      %v2607 = vld [vmem:[#allocation2 + $0x60] sm:$0xff]
      %v2608 = vld [vmem:[#allocation2 + $0x68] sm:$0xff]
      %v2609 = vld [vmem:[#allocation2 + $0x70] sm:$0xff]
      %v2610 = vld [vmem:[#allocation2 + $0x78] sm:$0xff]
      %v2611 = vld [vmem:[#allocation2 + $0x80] sm:$0xff]
      %v2612 = vld [vmem:[#allocation2 + $0x88] sm:$0xff]
      %v2613 = vld [vmem:[#allocation2 + $0x90] sm:$0xff]
      %v2614 = vld [vmem:[#allocation2 + $0x98] sm:$0xff]
      %v2615 = vld [vmem:[#allocation2 + $0xa0] sm:$0xff]
      %v2616 = vld [vmem:[#allocation2 + $0xa8] sm:$0xff]
      %v2617 = vld [vmem:[#allocation2 + $0xb0] sm:$0xff]
      %v2618 = vld [vmem:[#allocation2 + $0xb8] sm:$0xff]
      %v2619 = vld [vmem:[%s6] sm:$0xff]
      %v2620 = vld [vmem:[%s6 + $0x8] sm:$0xff]
      %v2621 = vld [vmem:[%s6 + $0x10] sm:$0xff]
      %v2622 = vld [vmem:[%s6 + $0x18] sm:$0xff]
      %v2623 = vld [vmem:[%s6 + $0x20] sm:$0xff]
      %v2624 = vld [vmem:[%s6 + $0x28] sm:$0xff]
      %v2625 = vld [vmem:[%s6 + $0x30] sm:$0xff]
      %v2626 = vld [vmem:[%s6 + $0x38] sm:$0xff]
      %v2627 = vld [vmem:[%s6 + $0x40] sm:$0xff]
      %v2628 = vld [vmem:[%s6 + $0x48] sm:$0xff]
      %v2629 = vld [vmem:[%s6 + $0x50] sm:$0xff]
      %v2630 = vld [vmem:[%s6 + $0x58] sm:$0xff]
      %v2631 = vld [vmem:[%s6 + $0x60] sm:$0xff]
      %v2632 = vld [vmem:[%s6 + $0x68] sm:$0xff]
      %v2633 = vld [vmem:[%s6 + $0x70] sm:$0xff]
      %v2634 = vld [vmem:[%s6 + $0x78] sm:$0xff]
      %v2635 = vld [vmem:[%s6 + $0x80] sm:$0xff]
      %v2636 = vld [vmem:[%s6 + $0x88] sm:$0xff]
      %v2637 = vld [vmem:[%s6 + $0x90] sm:$0xff]
      %v2638 = vld [vmem:[%s6 + $0x98] sm:$0xff]
      %v2639 = vld [vmem:[%s6 + $0xa0] sm:$0xff]
      %v2640 = vld [vmem:[%s6 + $0xa8] sm:$0xff]
      %v2641 = vld [vmem:[%s6 + $0xb0] sm:$0xff]
      %v2642 = vld [vmem:[%s6 + $0xb8] sm:$0xff]
      %v2643 = vmul.f32 %v2595, %v2619
      %v2644 = vmul.f32 %v2596, %v2620
      %v2645 = vmul.f32 %v2597, %v2621
      %v2646 = vmul.f32 %v2598, %v2622
      %v2647 = vmul.f32 %v2599, %v2623
      %v2648 = vmul.f32 %v2600, %v2624
      %v2649 = vmul.f32 %v2601, %v2625
      %v2650 = vmul.f32 %v2602, %v2626
      %v2651 = vmul.f32 %v2603, %v2627
      %v2652 = vmul.f32 %v2604, %v2628
      %v2653 = vmul.f32 %v2605, %v2629
      %v2654 = vmul.f32 %v2606, %v2630
      %v2655 = vmul.f32 %v2607, %v2631
      %v2656 = vmul.f32 %v2608, %v2632
      %v2657 = vmul.f32 %v2609, %v2633
      %v2658 = vmul.f32 %v2610, %v2634
      %v2659 = vmul.f32 %v2611, %v2635
      %v2660 = vmul.f32 %v2612, %v2636
      %v2661 = vmul.f32 %v2613, %v2637
      %v2662 = vmul.f32 %v2614, %v2638
      %v2663 = vmul.f32 %v2615, %v2639
      %v2664 = vmul.f32 %v2616, %v2640
      %v2665 = vmul.f32 %v2617, %v2641
      %v2666 = vmul.f32 %v2618, %v2642
      %v2667 = vpack.c.bf16 %v2646, %v2643
      %v2668 = vpack.c.bf16 %v2647, %v2644
      %v2669 = vpack.c.bf16 %v2648, %v2645
      %v2670 = vpack.c.bf16 %v2652, %v2649
      %v2671 = vpack.c.bf16 %v2653, %v2650
      %v2672 = vpack.c.bf16 %v2654, %v2651
      %v2673 = vpack.c.bf16 %v2658, %v2655
      %v2674 = vpack.c.bf16 %v2659, %v2656
      %v2675 = vpack.c.bf16 %v2660, %v2657
      %v2676 = vpack.c.bf16 %v2664, %v2661
      %v2677 = vpack.c.bf16 %v2665, %v2662
      %v2678 = vpack.c.bf16 %v2666, %v2663
      %v2679 = vld [vmem:[%s4] sm:$0xf]
      %v2680 = vld [vmem:[%s4 + $0x4] sm:$0xf]
      %v2681 = vld [vmem:[%s4 + $0x8] sm:$0xf]
      %v2682 = vld [vmem:[%s4 + $0xc] sm:$0xf]
      %v2683 = vld [vmem:[%s4 + $0x10] sm:$0xf]
      %v2684 = vld [vmem:[%s4 + $0x14] sm:$0xf]
      %v2685 = vld [vmem:[%s4 + $0x18] sm:$0xf]
      %v2686 = vld [vmem:[%s4 + $0x1c] sm:$0xf]
      %v2687 = vld [vmem:[%s4 + $0x20] sm:$0xf]
      %v2688 = vld [vmem:[%s4 + $0x24] sm:$0xf]
      %v2689 = vld [vmem:[%s4 + $0x28] sm:$0xf]
      %v2690 = vld [vmem:[%s4 + $0x2c] sm:$0xf]
      %v2691 = vld [vmem:[%s4 + $0x30] sm:$0xf]
      %v2692 = vld [vmem:[%s4 + $0x34] sm:$0xf]
      %v2693 = vld [vmem:[%s4 + $0x38] sm:$0xf]
      %v2694 = vld [vmem:[%s4 + $0x3c] sm:$0xf]
      %v2695 = vld [vmem:[%s4 + $0x40] sm:$0xf]
      %v2696 = vld [vmem:[%s4 + $0x44] sm:$0xf]
      %v2697 = vld [vmem:[%s4 + $0x48] sm:$0xf]
      %v2698 = vld [vmem:[%s4 + $0x4c] sm:$0xf]
      %v2699 = vld [vmem:[%s4 + $0x50] sm:$0xf]
      %v2700 = vld [vmem:[%s4 + $0x54] sm:$0xf]
      %v2701 = vld [vmem:[%s4 + $0x58] sm:$0xf]
      %v2702 = vld [vmem:[%s4 + $0x5c] sm:$0xf]
      %v2703 = vld [vmem:[%s4 + $0x60] sm:$0xf]
      %v2704 = vld [vmem:[%s4 + $0x64] sm:$0xf]
      %v2705 = vld [vmem:[%s4 + $0x68] sm:$0xf]
      %v2706 = vld [vmem:[%s4 + $0x6c] sm:$0xf]
      %v2707 = vld [vmem:[%s4 + $0x70] sm:$0xf]
      %v2708 = vld [vmem:[%s4 + $0x74] sm:$0xf]
      %v2709 = vld [vmem:[%s4 + $0x78] sm:$0xf]
      %v2710 = vld [vmem:[%s4 + $0x7c] sm:$0xf]
      %v2711 = vld [vmem:[%s4 + $0x80] sm:$0xf]
      %v2712 = vld [vmem:[%s4 + $0x84] sm:$0xf]
      %v2713 = vld [vmem:[%s4 + $0x88] sm:$0xf]
      %v2714 = vld [vmem:[%s4 + $0x8c] sm:$0xf]
      %v2715 = vld [vmem:[%s5] sm:$0x1]
      %v2717 = vperm.slane %v2715, 0
      %v2755 = vunpack.c.l.b16 %v2679
      %v2756 = vunpack.c.l.b16 %v2680
      %v2757 = vunpack.c.l.b16 %v2681
      %v2758 = vunpack.c.l.b16 %v2682
      %v2759 = vunpack.c.l.b16 %v2683
      %v2760 = vunpack.c.l.b16 %v2684
      %v2761 = vunpack.c.l.b16 %v2685
      %v2762 = vunpack.c.l.b16 %v2686
      %v2763 = vunpack.c.l.b16 %v2687
      %v2764 = vunpack.c.l.b16 %v2688
      %v2765 = vunpack.c.l.b16 %v2689
      %v2766 = vunpack.c.l.b16 %v2690
      %v2767 = vunpack.c.l.b16 %v2691
      %v2768 = vunpack.c.l.b16 %v2692
      %v2769 = vunpack.c.l.b16 %v2693
      %v2770 = vunpack.c.l.b16 %v2694
      %v2771 = vunpack.c.l.b16 %v2695
      %v2772 = vunpack.c.l.b16 %v2696
      %v2773 = vunpack.c.l.b16 %v2697
      %v2774 = vunpack.c.l.b16 %v2698
      %v2775 = vunpack.c.l.b16 %v2699
      %v2776 = vunpack.c.l.b16 %v2700
      %v2777 = vunpack.c.l.b16 %v2701
      %v2778 = vunpack.c.l.b16 %v2702
      %v2779 = vunpack.c.l.b16 %v2703
      %v2780 = vunpack.c.l.b16 %v2704
      %v2781 = vunpack.c.l.b16 %v2705
      %v2782 = vunpack.c.l.b16 %v2706
      %v2783 = vunpack.c.l.b16 %v2707
      %v2784 = vunpack.c.l.b16 %v2708
      %v2785 = vunpack.c.l.b16 %v2709
      %v2786 = vunpack.c.l.b16 %v2710
      %v2787 = vunpack.c.l.b16 %v2711
      %v2788 = vunpack.c.l.b16 %v2712
      %v2789 = vunpack.c.l.b16 %v2713
      %v2790 = vunpack.c.l.b16 %v2714
      %v2791 = vpack.c.b16 %v2756, %v2755
      %v2792 = vpack.c.b16 %v2758, %v2757
      %v2793 = vpack.c.b16 %v2760, %v2759
      %v2794 = vpack.c.b16 %v2762, %v2761
      %v2795 = vpack.c.b16 %v2764, %v2763
      %v2796 = vpack.c.b16 %v2766, %v2765
      %v2797 = vpack.c.b16 %v2768, %v2767
      %v2798 = vpack.c.b16 %v2770, %v2769
      %v2799 = vpack.c.b16 %v2772, %v2771
      %v2800 = vpack.c.b16 %v2774, %v2773
      %v2801 = vpack.c.b16 %v2776, %v2775
      %v2802 = vpack.c.b16 %v2778, %v2777
      %v2803 = vpack.c.b16 %v2780, %v2779
      %v2804 = vpack.c.b16 %v2782, %v2781
      %v2805 = vpack.c.b16 %v2784, %v2783
      %v2806 = vpack.c.b16 %v2786, %v2785
      %v2807 = vpack.c.b16 %v2788, %v2787
      %v2808 = vpack.c.b16 %v2790, %v2789
      %v2828 = vsel %vm2268, %v2669, 0
      %v2831 = vsel %vm2268, %v2672, 0
      %v2834 = vsel %vm2268, %v2675, 0
      %v2837 = vsel %vm2268, %v2678, 0
      %2839 = vmatpush.bf16.msra.mxu0 %v2798
      %2840 = vmatpush.bf16.msra.mxu0 %v2797
      %2841 = vmatpush.bf16.msra.mxu0 %v2796
      %2842 = vmatpush.bf16.msra.mxu0 %v2795
      %2843 = vmatpush.bf16.msra.mxu0 %v2794
      %2844 = vmatpush.bf16.msra.mxu0 %v2793
      %2845 = vmatpush.bf16.msra.mxu0 %v2792
      %2846 = vmatpush.bf16.msra.mxu0 %v2791
      %2847 = vmatmul.bf16.gmra.mxu0 %v2667
      %v2848 = vpop.f32.mrf.mxu0
      %v2849 = vadd.f32 %v2717, %v2848
      %v2850 = vpop.f32.mrf.mxu0
      %v2851 = vadd.f32 %v2717, %v2850
      %2852 = vmatmul.bf16.gmra.mxu0 %v2670
      %v2853 = vpop.f32.mrf.mxu0
      %v2854 = vadd.f32 %v2717, %v2853
      %v2855 = vpop.f32.mrf.mxu0
      %v2856 = vadd.f32 %v2717, %v2855
      %2857 = vmatmul.bf16.gmra.mxu0 %v2673
      %v2858 = vpop.f32.mrf.mxu0
      %v2859 = vadd.f32 %v2717, %v2858
      %v2860 = vpop.f32.mrf.mxu0
      %v2861 = vadd.f32 %v2717, %v2860
      %2862 = vmatmul.bf16.gmra.mxu0 %v2676
      %v2863 = vpop.f32.mrf.mxu0
      %v2864 = vadd.f32 %v2717, %v2863
      %v2865 = vpop.f32.mrf.mxu0
      %v2866 = vadd.f32 %v2717, %v2865
      %2867 = vdwg.mxu0
      %2868 = vmatpush.bf16.msra.mxu0 %v2806
      %2869 = vmatpush.bf16.msra.mxu0 %v2805
      %2870 = vmatpush.bf16.msra.mxu0 %v2804
      %2871 = vmatpush.bf16.msra.mxu0 %v2803
      %2872 = vmatpush.bf16.msra.mxu0 %v2802
      %2873 = vmatpush.bf16.msra.mxu0 %v2801
      %2874 = vmatpush.bf16.msra.mxu0 %v2800
      %2875 = vmatpush.bf16.msra.mxu0 %v2799
      %2876 = vmatmul.bf16.gmra.mxu0 %v2668
      %v2877 = vpop.f32.mrf.mxu0
      %v2878 = vadd.f32 %v2849, %v2877
      %v2879 = vpop.f32.mrf.mxu0
      %v2880 = vadd.f32 %v2851, %v2879
      %2881 = vmatmul.bf16.gmra.mxu0 %v2671
      %v2882 = vpop.f32.mrf.mxu0
      %v2883 = vadd.f32 %v2854, %v2882
      %v2884 = vpop.f32.mrf.mxu0
      %v2885 = vadd.f32 %v2856, %v2884
      %2886 = vmatmul.bf16.gmra.mxu0 %v2674
      %v2887 = vpop.f32.mrf.mxu0
      %v2888 = vadd.f32 %v2859, %v2887
      %v2889 = vpop.f32.mrf.mxu0
      %v2890 = vadd.f32 %v2861, %v2889
      %2891 = vmatmul.bf16.gmra.mxu0 %v2677
      %v2892 = vpop.f32.mrf.mxu0
      %v2893 = vadd.f32 %v2864, %v2892
      %v2894 = vpop.f32.mrf.mxu0
      %v2895 = vadd.f32 %v2866, %v2894
      %2896 = vdwg.mxu0
      %2897 = vmatpush.bf16.msra.mxu0 0
      %2898 = vmatpush.bf16.msra.mxu0 0
      %2899 = vmatpush.bf16.msra.mxu0 0
      %2900 = vmatpush.bf16.msra.mxu0 0
      %2901 = vmatpush.bf16.msra.mxu0 0
      %2902 = vmatpush.bf16.msra.mxu0 0
      %2903 = vmatpush.bf16.msra.mxu0 %v2808
      %2904 = vmatpush.bf16.msra.mxu0 %v2807
      %2905 = vmatmul.bf16.gmra.mxu0 %v2828
      %v2906 = vpop.f32.mrf.mxu0
      %v2907 = vadd.f32 %v2878, %v2906
      %v2908 = vpop.f32.mrf.mxu0
      %v2909 = vadd.f32 %v2880, %v2908
      %2910 = vmatmul.bf16.gmra.mxu0 %v2831
      %v2911 = vpop.f32.mrf.mxu0
      %v2912 = vadd.f32 %v2883, %v2911
      %v2913 = vpop.f32.mrf.mxu0
      %v2914 = vadd.f32 %v2885, %v2913
      %2915 = vmatmul.bf16.gmra.mxu0 %v2834
      %v2916 = vpop.f32.mrf.mxu0
      %v2917 = vadd.f32 %v2888, %v2916
      %v2918 = vpop.f32.mrf.mxu0
      %v2919 = vadd.f32 %v2890, %v2918
      %2920 = vmatmul.bf16.gmra.mxu0 %v2837
      %v2921 = vpop.f32.mrf.mxu0
      %v2922 = vadd.f32 %v2893, %v2921
      %v2923 = vpop.f32.mrf.mxu0
      %v2924 = vadd.f32 %v2895, %v2923
      %2925 = vdwg.mxu0
      %v2926 = vmax.f32 %v2907, 0.0
      %v2927 = vmax.f32 %v2909, 0.0
      %v2928 = vmax.f32 %v2912, 0.0
      %v2929 = vmax.f32 %v2914, 0.0
      %v2930 = vmax.f32 %v2917, 0.0
      %v2931 = vmax.f32 %v2919, 0.0
      %v2932 = vmax.f32 %v2922, 0.0
      %v2933 = vmax.f32 %v2924, 0.0
      %v2942 = vrot.slane %v2926, 1
      %v2943 = vrot.slane %v2927, 1
      %v2944 = vsel %vm793, %v2942, %v2943
      %v2945 = vrot.slane %v2928, 1
      %v2946 = vsel %vm793, %v2943, %v2945
      %v2947 = vrot.slane %v2929, 1
      %v2948 = vsel %vm793, %v2945, %v2947
      %v2949 = vrot.slane %v2930, 1
      %v2950 = vsel %vm793, %v2947, %v2949
      %v2951 = vrot.slane %v2931, 1
      %v2952 = vsel %vm793, %v2949, %v2951
      %v2953 = vrot.slane %v2932, 1
      %v2954 = vsel %vm793, %v2951, %v2953
      %v2955 = vrot.slane %v2933, 1
      %v2956 = vsel %vm793, %v2953, %v2955
      %v2966 = vsel %vm793, %v2955, %v2942
      %v2967 = vmax.f32 %v2926, %v2944
      %v2968 = vmax.f32 %v2927, %v2946
      %v2969 = vmax.f32 %v2928, %v2948
      %v2970 = vmax.f32 %v2929, %v2950
      %v2971 = vmax.f32 %v2930, %v2952
      %v2972 = vmax.f32 %v2931, %v2954
      %v2973 = vmax.f32 %v2932, %v2956
      %v2974 = vmax.f32 %v2933, %v2966
      %v2975 = vmax.f32 %v2967, %v2968
      %v2976 = vmax.f32 %v2968, %v2969
      %v2977 = vmax.f32 %v2969, %v2970
      %v2978 = vmax.f32 %v2970, %v2971
      %v2979 = vmax.f32 %v2971, %v2972
      %v2980 = vmax.f32 %v2972, %v2973
      %v2981 = vmax.f32 %v2973, %v2974
      %v2982 = vmax.f32 %v2974, %v2967
      %2983 = vst.msk [vmem:[#allocation3] sm:$0xff] %vm2268, %v2975
      %2984 = vst.msk [vmem:[#allocation3 + $0x8] sm:$0xff] %vm2268, %v2976
      %2985 = vst.msk [vmem:[#allocation3 + $0x10] sm:$0xff] %vm2268, %v2977
      %2986 = vst.msk [vmem:[#allocation3 + $0x18] sm:$0xff] %vm2268, %v2978
      %2987 = vst.msk [vmem:[#allocation3 + $0x20] sm:$0xff] %vm2268, %v2979
      %2988 = vst.msk [vmem:[#allocation3 + $0x28] sm:$0xff] %vm2268, %v2980
      %2989 = vst.msk [vmem:[#allocation3 + $0x30] sm:$0xff] %vm2268, %v2981
      %2990 = vst.msk [vmem:[#allocation3 + $0x38] sm:$0xff] %vm2268, %v2982
      %v2991 = vld [vmem:[#allocation3] ss:$2 sm:$0xf]
      %s2992 = scalar_lea.vmem [#allocation3], 16
      %v2993 = vld [vmem:[%s2992] ss:$2 sm:$0xf]
      %v2994 = vld [vmem:[%s2302] ss:$2 sm:$0xf]
      %s2995 = scalar_lea.vmem [#allocation3], 48
      %v2996 = vld [vmem:[%s2995] ss:$2 sm:$0xf]
      %v2998 = vrot.slane %v2993, 4
      %v3001 = vrot.slane %v2996, 4
      %vm3003 = vcmask 1043456
      %v3004 = vsel %vm3003, %v2991, %v2998
      %v3005 = vsel %vm3003, %v2994, %v3001
      %v3007 = vrot.slane %v3005, 3
      %vm3010 = vcmask 1044480
      %v3011 = vrot.slane %v3004, 3
      %v3012 = vsel %vm3010, %v3011, %v3007
      %v3015 = vsel %vm3010, %v3007, %v3011
      %3016 = vst.msk [vmem:[#allocation2] sm:$0xff] %vm2268, %v3015
      %3017 = vst.msk [vmem:[#allocation2 + $0x18] sm:$0xff] %vm2268, %v3012
      %v3018 = vrot.slane %v3005, 4
      %v3020 = vrot.slane %v3004, 4
      %v3021 = vsel %vm3003, %v3020, %v3018
      %v3023 = vsel %vm3003, %v3018, %v3020
      %3025 = vrot.lane.b32.xlu0 %v3023, 32
      %v3026 = vpop.permute.xlu0 %3025
      %3027 = vrot.lane.b32.xlu0 %v3021, 32
      %v3028 = vpop.permute.xlu0 %3027
      %3031 = vst.msk [vmem:[#allocation2] sm:$0xff] %vm2381, %v3026
      %3032 = vst.msk [vmem:[#allocation2 + $0x18] sm:$0xff] %vm2381, %v3028
      %v3033 = vrot.slane %v3005, 5
      %vm3035 = vcmask 1042432
      %v3036 = vrot.slane %v3004, 5
      %v3037 = vsel %vm3035, %v3036, %v3033
      %v3039 = vsel %vm3035, %v3033, %v3036
      %3041 = vrot.lane.b32.xlu0 %v3039, 64
      %v3042 = vpop.permute.xlu0 %3041
      %3043 = vrot.lane.b32.xlu0 %v3037, 64
      %v3044 = vpop.permute.xlu0 %3043
      %3047 = vst.msk [vmem:[#allocation2] sm:$0xff] %vm2433, %v3042
      %3048 = vst.msk [vmem:[#allocation2 + $0x18] sm:$0xff] %vm2433, %v3044
      %v3049 = vrot.slane %v3005, 7
      %v3051 = vrot.slane %v3004, 7
      %v3052 = vsel %vm504, %v3051, %v3049
      %v3054 = vsel %vm504, %v3049, %v3051
      %3056 = vrot.lane.b32.xlu0 %v3054, 96
      %v3057 = vpop.permute.xlu0 %3056
      %3058 = vrot.lane.b32.xlu0 %v3052, 96
      %v3059 = vpop.permute.xlu0 %3058
      %3062 = vst.msk [vmem:[#allocation2] sm:$0xff] %vm2467, %v3057
      %3063 = vst.msk [vmem:[#allocation2 + $0x18] sm:$0xff] %vm2467, %v3059
      %3064 = vst.msk [vmem:[#allocation2 + $0x8] sm:$0xff] %vm2268, %v3004
      %3065 = vst.msk [vmem:[#allocation2 + $0x20] sm:$0xff] %vm2268, %v3005
      %v3066 = vrot.slane %v3004, 1
      %v3067 = vrot.slane %v3005, 1
      %v3068 = vsel %vm793, %v3066, %v3067
      %v3071 = vsel %vm793, %v3067, %v3066
      %3073 = vrot.lane.b32.xlu0 %v3068, 32
      %v3074 = vpop.permute.xlu0 %3073
      %3075 = vrot.lane.b32.xlu0 %v3071, 32
      %v3076 = vpop.permute.xlu0 %3075
      %3079 = vst.msk [vmem:[#allocation2 + $0x8] sm:$0xff] %vm2381, %v3074
      %3080 = vst.msk [vmem:[#allocation2 + $0x20] sm:$0xff] %vm2381, %v3076
      %3082 = vrot.lane.b32.xlu0 %v3012, 64
      %v3083 = vpop.permute.xlu0 %3082
      %3084 = vrot.lane.b32.xlu0 %v3015, 64
      %v3085 = vpop.permute.xlu0 %3084
      %3088 = vst.msk [vmem:[#allocation2 + $0x8] sm:$0xff] %vm2433, %v3083
      %3089 = vst.msk [vmem:[#allocation2 + $0x20] sm:$0xff] %vm2433, %v3085
      %3090 = vrot.lane.b32.xlu0 %v3021, 96
      %v3091 = vpop.permute.xlu0 %3090
      %3092 = vrot.lane.b32.xlu0 %v3023, 96
      %v3093 = vpop.permute.xlu0 %3092
      %3096 = vst.msk [vmem:[#allocation2 + $0x8] sm:$0xff] %vm2467, %v3091
      %3097 = vst.msk [vmem:[#allocation2 + $0x20] sm:$0xff] %vm2467, %v3093
      %3099 = vst.msk [vmem:[#allocation2 + $0x10] sm:$0xff] %vm2268, %v3037
      %3100 = vst.msk [vmem:[#allocation2 + $0x28] sm:$0xff] %vm2268, %v3039
      %v3101 = vld [vmem:[#allocation2] sm:$0xff]
      %v3102 = vld [vmem:[#allocation2 + $0x8] sm:$0xff]
      %v3103 = vld [vmem:[#allocation2 + $0x10] sm:$0xff]
      %v3104 = vld [vmem:[#allocation2 + $0x18] sm:$0xff]
      %v3105 = vld [vmem:[#allocation2 + $0x20] sm:$0xff]
      %v3106 = vld [vmem:[#allocation2 + $0x28] sm:$0xff]
      %v3107 = vld [vmem:[%s9] sm:$0xff]
      %v3108 = vld [vmem:[%s9 + $0x8] sm:$0xff]
      %v3109 = vld [vmem:[%s9 + $0x10] sm:$0xff]
      %v3110 = vld [vmem:[%s9 + $0x18] sm:$0xff]
      %v3111 = vld [vmem:[%s9 + $0x20] sm:$0xff]
      %v3112 = vld [vmem:[%s9 + $0x28] sm:$0xff]
      %v3113 = vmul.f32 %v3101, %v3107
      %v3114 = vmul.f32 %v3102, %v3108
      %v3115 = vmul.f32 %v3103, %v3109
      %v3116 = vmul.f32 %v3104, %v3110
      %v3117 = vmul.f32 %v3105, %v3111
      %v3118 = vmul.f32 %v3106, %v3112
      %v3119 = vpack.c.bf16 %v3116, %v3113
      %v3120 = vpack.c.bf16 %v3117, %v3114
      %v3121 = vpack.c.bf16 %v3118, %v3115
      %v3122 = vld [vmem:[%s7] sm:$0xf]
      %v3123 = vld [vmem:[%s7 + $0x4] sm:$0xf]
      %v3124 = vld [vmem:[%s7 + $0x8] sm:$0xf]
      %v3125 = vld [vmem:[%s7 + $0xc] sm:$0xf]
      %v3126 = vld [vmem:[%s7 + $0x10] sm:$0xf]
      %v3127 = vld [vmem:[%s7 + $0x14] sm:$0xf]
      %v3128 = vld [vmem:[%s7 + $0x18] sm:$0xf]
      %v3129 = vld [vmem:[%s7 + $0x1c] sm:$0xf]
      %v3130 = vld [vmem:[%s7 + $0x20] sm:$0xf]
      %v3131 = vld [vmem:[%s7 + $0x24] sm:$0xf]
      %v3132 = vld [vmem:[%s7 + $0x28] sm:$0xf]
      %v3133 = vld [vmem:[%s7 + $0x2c] sm:$0xf]
      %v3134 = vld [vmem:[%s7 + $0x30] sm:$0xf]
      %v3135 = vld [vmem:[%s7 + $0x34] sm:$0xf]
      %v3136 = vld [vmem:[%s7 + $0x38] sm:$0xf]
      %v3137 = vld [vmem:[%s7 + $0x3c] sm:$0xf]
      %v3138 = vld [vmem:[%s7 + $0x40] sm:$0xf]
      %v3139 = vld [vmem:[%s7 + $0x44] sm:$0xf]
      %v3140 = vld [vmem:[%s7 + $0x48] sm:$0xf]
      %v3141 = vld [vmem:[%s7 + $0x4c] sm:$0xf]
      %v3142 = vld [vmem:[%s7 + $0x50] sm:$0xf]
      %v3143 = vld [vmem:[%s7 + $0x54] sm:$0xf]
      %v3144 = vld [vmem:[%s7 + $0x58] sm:$0xf]
      %v3145 = vld [vmem:[%s7 + $0x5c] sm:$0xf]
      %v3146 = vld [vmem:[%s7 + $0x60] sm:$0xf]
      %v3147 = vld [vmem:[%s7 + $0x64] sm:$0xf]
      %v3148 = vld [vmem:[%s7 + $0x68] sm:$0xf]
      %v3149 = vld [vmem:[%s7 + $0x6c] sm:$0xf]
      %v3150 = vld [vmem:[%s7 + $0x70] sm:$0xf]
      %v3151 = vld [vmem:[%s7 + $0x74] sm:$0xf]
      %v3152 = vld [vmem:[%s7 + $0x78] sm:$0xf]
      %v3153 = vld [vmem:[%s7 + $0x7c] sm:$0xf]
      %v3154 = vld [vmem:[%s7 + $0x80] sm:$0xf]
      %v3155 = vld [vmem:[%s7 + $0x84] sm:$0xf]
      %v3156 = vld [vmem:[%s7 + $0x88] sm:$0xf]
      %v3157 = vld [vmem:[%s7 + $0x8c] sm:$0xf]
      %v3158 = vld [vmem:[%s8] sm:$0x1]
      %v3160 = vperm.slane %v3158, 0
      %v3198 = vunpack.c.l.b16 %v3122
      %v3199 = vunpack.c.l.b16 %v3123
      %v3200 = vunpack.c.l.b16 %v3124
      %v3201 = vunpack.c.l.b16 %v3125
      %v3202 = vunpack.c.l.b16 %v3126
      %v3203 = vunpack.c.l.b16 %v3127
      %v3204 = vunpack.c.l.b16 %v3128
      %v3205 = vunpack.c.l.b16 %v3129
      %v3206 = vunpack.c.l.b16 %v3130
      %v3207 = vunpack.c.l.b16 %v3131
      %v3208 = vunpack.c.l.b16 %v3132
      %v3209 = vunpack.c.l.b16 %v3133
      %v3210 = vunpack.c.l.b16 %v3134
      %v3211 = vunpack.c.l.b16 %v3135
      %v3212 = vunpack.c.l.b16 %v3136
      %v3213 = vunpack.c.l.b16 %v3137
      %v3214 = vunpack.c.l.b16 %v3138
      %v3215 = vunpack.c.l.b16 %v3139
      %v3216 = vunpack.c.l.b16 %v3140
      %v3217 = vunpack.c.l.b16 %v3141
      %v3218 = vunpack.c.l.b16 %v3142
      %v3219 = vunpack.c.l.b16 %v3143
      %v3220 = vunpack.c.l.b16 %v3144
      %v3221 = vunpack.c.l.b16 %v3145
      %v3222 = vunpack.c.l.b16 %v3146
      %v3223 = vunpack.c.l.b16 %v3147
      %v3224 = vunpack.c.l.b16 %v3148
      %v3225 = vunpack.c.l.b16 %v3149
      %v3226 = vunpack.c.l.b16 %v3150
      %v3227 = vunpack.c.l.b16 %v3151
      %v3228 = vunpack.c.l.b16 %v3152
      %v3229 = vunpack.c.l.b16 %v3153
      %v3230 = vunpack.c.l.b16 %v3154
      %v3231 = vunpack.c.l.b16 %v3155
      %v3232 = vunpack.c.l.b16 %v3156
      %v3233 = vunpack.c.l.b16 %v3157
      %v3234 = vpack.c.b16 %v3199, %v3198
      %v3235 = vpack.c.b16 %v3201, %v3200
      %v3236 = vpack.c.b16 %v3203, %v3202
      %v3237 = vpack.c.b16 %v3205, %v3204
      %v3238 = vpack.c.b16 %v3207, %v3206
      %v3239 = vpack.c.b16 %v3209, %v3208
      %v3240 = vpack.c.b16 %v3211, %v3210
      %v3241 = vpack.c.b16 %v3213, %v3212
      %v3242 = vpack.c.b16 %v3215, %v3214
      %v3243 = vpack.c.b16 %v3217, %v3216
      %v3244 = vpack.c.b16 %v3219, %v3218
      %v3245 = vpack.c.b16 %v3221, %v3220
      %v3246 = vpack.c.b16 %v3223, %v3222
      %v3247 = vpack.c.b16 %v3225, %v3224
      %v3248 = vpack.c.b16 %v3227, %v3226
      %v3249 = vpack.c.b16 %v3229, %v3228
      %v3250 = vpack.c.b16 %v3231, %v3230
      %v3251 = vpack.c.b16 %v3233, %v3232
      %v3271 = vsel %vm2268, %v3121, 0
      %3273 = vmatpush.bf16.msra.mxu0 %v3241
      %3274 = vmatpush.bf16.msra.mxu0 %v3240
      %3275 = vmatpush.bf16.msra.mxu0 %v3239
      %3276 = vmatpush.bf16.msra.mxu0 %v3238
      %3277 = vmatpush.bf16.msra.mxu0 %v3237
      %3278 = vmatpush.bf16.msra.mxu0 %v3236
      %3279 = vmatpush.bf16.msra.mxu0 %v3235
      %3280 = vmatpush.bf16.msra.mxu0 %v3234
      %3281 = vmatmul.bf16.gmra.mxu0 %v3119
      %v3282 = vpop.f32.mrf.mxu0
      %v3283 = vadd.f32 %v3160, %v3282
      %v3284 = vpop.f32.mrf.mxu0
      %v3285 = vadd.f32 %v3160, %v3284
      %3286 = vdwg.mxu0
      %3287 = vmatpush.bf16.msra.mxu0 %v3249
      %3288 = vmatpush.bf16.msra.mxu0 %v3248
      %3289 = vmatpush.bf16.msra.mxu0 %v3247
      %3290 = vmatpush.bf16.msra.mxu0 %v3246
      %3291 = vmatpush.bf16.msra.mxu0 %v3245
      %3292 = vmatpush.bf16.msra.mxu0 %v3244
      %3293 = vmatpush.bf16.msra.mxu0 %v3243
      %3294 = vmatpush.bf16.msra.mxu0 %v3242
      %3295 = vmatmul.bf16.gmra.mxu0 %v3120
      %v3296 = vpop.f32.mrf.mxu0
      %v3297 = vadd.f32 %v3283, %v3296
      %v3298 = vpop.f32.mrf.mxu0
      %v3299 = vadd.f32 %v3285, %v3298
      %3300 = vdwg.mxu0
      %3301 = vmatpush.bf16.msra.mxu0 0
      %3302 = vmatpush.bf16.msra.mxu0 0
      %3303 = vmatpush.bf16.msra.mxu0 0
      %3304 = vmatpush.bf16.msra.mxu0 0
      %3305 = vmatpush.bf16.msra.mxu0 0
      %3306 = vmatpush.bf16.msra.mxu0 0
      %3307 = vmatpush.bf16.msra.mxu0 %v3251
      %3308 = vmatpush.bf16.msra.mxu0 %v3250
      %3309 = vmatmul.bf16.gmra.mxu0 %v3271
      %v3310 = vpop.f32.mrf.mxu0
      %v3311 = vadd.f32 %v3297, %v3310
      %v3312 = vpop.f32.mrf.mxu0
      %v3313 = vadd.f32 %v3299, %v3312
      %3314 = vdwg.mxu0
      %v3315 = vmax.f32 %v3311, 0.0
      %v3316 = vmax.f32 %v3313, 0.0
      %v3317 = vpack.c.bf16 %v3316, %v3315
      %v3318 = vld [vmem:[%s10] sm:$0xf]
      %v3319 = vld [vmem:[%s10 + $0x4] sm:$0xf]
      %v3320 = vld [vmem:[%s10 + $0x8] sm:$0xf]
      %v3321 = vld [vmem:[%s10 + $0xc] sm:$0xf]
      %v3322 = vld [vmem:[%s11] sm:$0x1]
      %v3324 = vperm.slane %v3322, 0
      %v3330 = vunpack.c.l.b16 %v3318
      %v3331 = vunpack.c.l.b16 %v3319
      %v3332 = vunpack.c.l.b16 %v3320
      %v3333 = vunpack.c.l.b16 %v3321
      %v3334 = vpack.c.b16 %v3331, %v3330
      %v3335 = vpack.c.b16 %v3333, %v3332
      %v3339 = vsel %vm2268, %v3317, 0
      %3341 = vmatpush.bf16.msra.mxu0 0
      %3342 = vmatpush.bf16.msra.mxu0 0
      %3343 = vmatpush.bf16.msra.mxu0 0
      %3344 = vmatpush.bf16.msra.mxu0 0
      %3345 = vmatpush.bf16.msra.mxu0 0
      %3346 = vmatpush.bf16.msra.mxu0 0
      %3347 = vmatpush.bf16.msra.mxu0 %v3335
      %3348 = vmatpush.bf16.msra.mxu0 %v3334
      %3349 = vmatmul.bf16.gmra.mxu0 %v3339
      %v3350 = vpop.f32.mrf.mxu0
      %v3351 = vadd.f32 %v3324, %v3350
      %v3352 = vpop.f32.mrf.mxu0
      %v3353 = vadd.f32 %v3324, %v3352
      %3354 = vdwg.mxu0
      %v3355 = vmax.f32 %v3351, 0.0
      %v3356 = vmax.f32 %v3353, 0.0
      %s3357 = scalar_lea.vmem %s10, 16
      %v3358 = vld [vmem:[%s3357] sm:$0xf]
      %v3359 = vld [vmem:[%s3357 + $0x4] sm:$0xf]
      %v3360 = vld [vmem:[%s3357 + $0x8] sm:$0xf]
      %v3361 = vld [vmem:[%s3357 + $0xc] sm:$0xf]
      %v3366 = vunpack.c.l.b16 %v3358
      %v3367 = vunpack.c.l.b16 %v3359
      %v3368 = vunpack.c.l.b16 %v3360
      %v3369 = vunpack.c.l.b16 %v3361
      %v3370 = vpack.c.b16 %v3367, %v3366
      %v3371 = vpack.c.b16 %v3369, %v3368
      %3374 = vmatpush.bf16.msra.mxu0 0
      %3375 = vmatpush.bf16.msra.mxu0 0
      %3376 = vmatpush.bf16.msra.mxu0 0
      %3377 = vmatpush.bf16.msra.mxu0 0
      %3378 = vmatpush.bf16.msra.mxu0 0
      %3379 = vmatpush.bf16.msra.mxu0 0
      %3380 = vmatpush.bf16.msra.mxu0 %v3371
      %3381 = vmatpush.bf16.msra.mxu0 %v3370
      %3382 = vmatmul.bf16.gmra.mxu0 %v3339
      %v3383 = vpop.f32.mrf.mxu0
      %v3384 = vadd.f32 %v3324, %v3383
      %v3385 = vpop.f32.mrf.mxu0
      %v3386 = vadd.f32 %v3324, %v3385
      %3387 = vdwg.mxu0
      %v3388 = vmax.f32 %v3384, 0.0
      %v3389 = vmax.f32 %v3386, 0.0
      %s3390 = scalar_lea.vmem %s10, 32
      %v3391 = vld [vmem:[%s3390] sm:$0xf]
      %v3392 = vld [vmem:[%s3390 + $0x4] sm:$0xf]
      %v3393 = vld [vmem:[%s3390 + $0x8] sm:$0xf]
      %v3394 = vld [vmem:[%s3390 + $0xc] sm:$0xf]
      %v3399 = vunpack.c.l.b16 %v3391
      %v3400 = vunpack.c.l.b16 %v3392
      %v3401 = vunpack.c.l.b16 %v3393
      %v3402 = vunpack.c.l.b16 %v3394
      %v3403 = vpack.c.b16 %v3400, %v3399
      %v3404 = vpack.c.b16 %v3402, %v3401
      %3407 = vmatpush.bf16.msra.mxu0 0
      %3408 = vmatpush.bf16.msra.mxu0 0
      %3409 = vmatpush.bf16.msra.mxu0 0
      %3410 = vmatpush.bf16.msra.mxu0 0
      %3411 = vmatpush.bf16.msra.mxu0 0
      %3412 = vmatpush.bf16.msra.mxu0 0
      %3413 = vmatpush.bf16.msra.mxu0 %v3404
      %3414 = vmatpush.bf16.msra.mxu0 %v3403
      %3415 = vmatmul.bf16.gmra.mxu0 %v3339
      %v3416 = vpop.f32.mrf.mxu0
      %v3417 = vadd.f32 %v3324, %v3416
      %v3418 = vpop.f32.mrf.mxu0
      %v3419 = vadd.f32 %v3324, %v3418
      %3420 = vdwg.mxu0
      %v3421 = vmax.f32 %v3417, 0.0
      %v3422 = vmax.f32 %v3419, 0.0
      %s3423 = scalar_lea.vmem %s10, 48
      %v3424 = vld [vmem:[%s3423] sm:$0xf]
      %v3425 = vld [vmem:[%s3423 + $0x4] sm:$0xf]
      %v3426 = vld [vmem:[%s3423 + $0x8] sm:$0xf]
      %v3427 = vld [vmem:[%s3423 + $0xc] sm:$0xf]
      %v3432 = vunpack.c.l.b16 %v3424
      %v3433 = vunpack.c.l.b16 %v3425
      %v3434 = vunpack.c.l.b16 %v3426
      %v3435 = vunpack.c.l.b16 %v3427
      %v3436 = vpack.c.b16 %v3433, %v3432
      %v3437 = vpack.c.b16 %v3435, %v3434
      %3440 = vmatpush.bf16.msra.mxu0 0
      %3441 = vmatpush.bf16.msra.mxu0 0
      %3442 = vmatpush.bf16.msra.mxu0 0
      %3443 = vmatpush.bf16.msra.mxu0 0
      %3444 = vmatpush.bf16.msra.mxu0 0
      %3445 = vmatpush.bf16.msra.mxu0 0
      %3446 = vmatpush.bf16.msra.mxu0 %v3437
      %3447 = vmatpush.bf16.msra.mxu0 %v3436
      %3448 = vmatmul.bf16.gmra.mxu0 %v3339
      %v3449 = vpop.f32.mrf.mxu0
      %v3450 = vadd.f32 %v3324, %v3449
      %v3451 = vpop.f32.mrf.mxu0
      %v3452 = vadd.f32 %v3324, %v3451
      %3453 = vdwg.mxu0
      %v3454 = vmax.f32 %v3450, 0.0
      %v3455 = vmax.f32 %v3452, 0.0
      %v3456 = vpack.c.bf16 %v3356, %v3355
      %v3457 = vpack.c.bf16 %v3389, %v3388
      %v3458 = vpack.c.bf16 %v3422, %v3421
      %v3459 = vpack.c.bf16 %v3455, %v3454
      %v3460 = vld [vmem:[%s12] sm:$0xf]
      %v3461 = vld [vmem:[%s12 + $0x4] sm:$0xf]
      %v3462 = vld [vmem:[%s12 + $0x8] sm:$0xf]
      %v3463 = vld [vmem:[%s12 + $0xc] sm:$0xf]
      %v3464 = vld [vmem:[%s13] sm:$0x1]
      %v3466 = vperm.slane %v3464, 0
      %v3472 = vunpack.c.l.b16 %v3460
      %v3473 = vunpack.c.l.b16 %v3461
      %v3474 = vunpack.c.l.b16 %v3462
      %v3475 = vunpack.c.l.b16 %v3463
      %v3476 = vpack.c.b16 %v3473, %v3472
      %v3477 = vpack.c.b16 %v3475, %v3474
      %v3481 = vsel %vm2268, %v3456, 0
      %v3484 = vsel %vm2268, %v3457, 0
      %v3487 = vsel %vm2268, %v3458, 0
      %v3490 = vsel %vm2268, %v3459, 0
      %3492 = vmatpush.bf16.msra.mxu0 0
      %3493 = vmatpush.bf16.msra.mxu0 0
      %3494 = vmatpush.bf16.msra.mxu0 0
      %3495 = vmatpush.bf16.msra.mxu0 0
      %3496 = vmatpush.bf16.msra.mxu0 0
      %3497 = vmatpush.bf16.msra.mxu0 0
      %3498 = vmatpush.bf16.msra.mxu0 %v3477
      %3499 = vmatpush.bf16.msra.mxu0 %v3476
      %3500 = vmatmul.bf16.gmra.mxu0 %v3481
      %v3501 = vpop.f32.mrf.mxu0
      %v3502 = vadd.f32 %v3466, %v3501
      %v3503 = vpop.f32.mrf.mxu0
      %v3504 = vadd.f32 %v3466, %v3503
      %3505 = vmatmul.bf16.gmra.mxu0 %v3484
      %v3506 = vpop.f32.mrf.mxu0
      %v3507 = vadd.f32 %v3466, %v3506
      %v3508 = vpop.f32.mrf.mxu0
      %v3509 = vadd.f32 %v3466, %v3508
      %3510 = vmatmul.bf16.gmra.mxu0 %v3487
      %v3511 = vpop.f32.mrf.mxu0
      %v3512 = vadd.f32 %v3466, %v3511
      %v3513 = vpop.f32.mrf.mxu0
      %v3514 = vadd.f32 %v3466, %v3513
      %3515 = vmatmul.bf16.gmra.mxu0 %v3490
      %v3516 = vpop.f32.mrf.mxu0
      %v3517 = vadd.f32 %v3466, %v3516
      %v3518 = vpop.f32.mrf.mxu0
      %v3519 = vadd.f32 %v3466, %v3518
      %3520 = vdwg.mxu0
      %vm3521 = vcmask 23552
      %v3522 = vsel %vm3521, %v3502, -inf
      %3523 = vmax.xlane.f32.xlu0 %v3522
      %v3524 = vpop.xlane.xlu0 %3523
      %v3525 = vsel %vm3521, %v3504, -inf
      %3526 = vmax.xlane.f32.xlu0 %v3525
      %v3527 = vpop.xlane.xlu0 %3526
      %v3528 = vsel %vm3521, %v3507, -inf
      %3529 = vmax.xlane.f32.xlu0 %v3528
      %v3530 = vpop.xlane.xlu0 %3529
      %v3531 = vsel %vm3521, %v3509, -inf
      %3532 = vmax.xlane.f32.xlu0 %v3531
      %v3533 = vpop.xlane.xlu0 %3532
      %v3534 = vsel %vm3521, %v3512, -inf
      %3535 = vmax.xlane.f32.xlu0 %v3534
      %v3536 = vpop.xlane.xlu0 %3535
      %v3537 = vsel %vm3521, %v3514, -inf
      %3538 = vmax.xlane.f32.xlu0 %v3537
      %v3539 = vpop.xlane.xlu0 %3538
      %v3540 = vsel %vm3521, %v3517, -inf
      %3541 = vmax.xlane.f32.xlu0 %v3540
      %v3542 = vpop.xlane.xlu0 %3541
      %v3543 = vsel %vm3521, %v3519, -inf
      %3544 = vmax.xlane.f32.xlu0 %v3543
      %v3545 = vpop.xlane.xlu0 %3544
      %v3546 = vsub.f32 %v3502, %v3524
      %v3547 = vsub.f32 %v3504, %v3527
      %v3548 = vsub.f32 %v3507, %v3530
      %v3549 = vsub.f32 %v3509, %v3533
      %v3550 = vsub.f32 %v3512, %v3536
      %v3551 = vsub.f32 %v3514, %v3539
      %v3552 = vsub.f32 %v3517, %v3542
      %v3553 = vsub.f32 %v3519, %v3545
      %v3554 = vmul.f32 %v3546, 1.442695
      %v3555 = vpow.pop %v3554
      %v3556 = vmul.f32 %v3547, 1.442695
      %v3557 = vpow.pop %v3556
      %v3558 = vmul.f32 %v3548, 1.442695
      %v3559 = vpow.pop %v3558
      %v3560 = vmul.f32 %v3549, 1.442695
      %v3561 = vpow.pop %v3560
      %v3562 = vmul.f32 %v3550, 1.442695
      %v3563 = vpow.pop %v3562
      %v3564 = vmul.f32 %v3551, 1.442695
      %v3565 = vpow.pop %v3564
      %v3566 = vmul.f32 %v3552, 1.442695
      %v3567 = vpow.pop %v3566
      %v3568 = vmul.f32 %v3553, 1.442695
      %v3569 = vpow.pop %v3568
      %v3570 = vsel %vm3521, %v3555, 0.0
      %3571 = vadd.xlane.f32.xlu0 %v3570
      %v3572 = vpop.xlane.xlu0 %3571
      %v3573 = vsel %vm3521, %v3557, 0.0
      %3574 = vadd.xlane.f32.xlu0 %v3573
      %v3575 = vpop.xlane.xlu0 %3574
      %v3576 = vsel %vm3521, %v3559, 0.0
      %3577 = vadd.xlane.f32.xlu0 %v3576
      %v3578 = vpop.xlane.xlu0 %3577
      %v3579 = vsel %vm3521, %v3561, 0.0
      %3580 = vadd.xlane.f32.xlu0 %v3579
      %v3581 = vpop.xlane.xlu0 %3580
      %v3582 = vsel %vm3521, %v3563, 0.0
      %3583 = vadd.xlane.f32.xlu0 %v3582
      %v3584 = vpop.xlane.xlu0 %3583
      %v3585 = vsel %vm3521, %v3565, 0.0
      %3586 = vadd.xlane.f32.xlu0 %v3585
      %v3587 = vpop.xlane.xlu0 %3586
      %v3588 = vsel %vm3521, %v3567, 0.0
      %3589 = vadd.xlane.f32.xlu0 %v3588
      %v3590 = vpop.xlane.xlu0 %3589
      %v3591 = vsel %vm3521, %v3569, 0.0
      %3592 = vadd.xlane.f32.xlu0 %v3591
      %v3593 = vpop.xlane.xlu0 %3592
      %v3594 = vrcp.pop %v3572
      %v3595 = vmul.f32 %v3572, %v3594
      %v3596 = vsub.f32 1.0, %v3595
      %v3597 = vmul.f32 %v3594, %v3596
      %v3598 = vadd.f32 %v3594, %v3597
      %vm3599 = vweird.f32 %v3572
      %vm3600 = vweird.f32 %v3594
      %vm3601 = vmor %vm3599, %vm3600
      %v3602 = vsel %vm3601, %v3594, %v3598
      %v3603 = vand.u32 2147483647, %v3572
      %vm3604 = vcmp.eq.f32.partialorder %v3603, 8.507059e+37
      %v3605 = vand.u32 %v3572, 2147483648
      %v3606 = vor.u32 1.1754944e-38, %v3605
      %v3607 = vsel %vm3604, %v3606, %v3602
      %v3608 = vmul.f32 %v3555, %v3607
      %v3609 = vrcp.pop %v3575
      %v3610 = vmul.f32 %v3575, %v3609
      %v3611 = vsub.f32 1.0, %v3610
      %v3612 = vmul.f32 %v3609, %v3611
      %v3613 = vadd.f32 %v3609, %v3612
      %vm3614 = vweird.f32 %v3575
      %vm3615 = vweird.f32 %v3609
      %vm3616 = vmor %vm3614, %vm3615
      %v3617 = vsel %vm3616, %v3609, %v3613
      %v3618 = vand.u32 2147483647, %v3575
      %vm3619 = vcmp.eq.f32.partialorder %v3618, 8.507059e+37
      %v3620 = vand.u32 %v3575, 2147483648
      %v3621 = vor.u32 1.1754944e-38, %v3620
      %v3622 = vsel %vm3619, %v3621, %v3617
      %v3623 = vmul.f32 %v3557, %v3622
      %v3624 = vrcp.pop %v3578
      %v3625 = vmul.f32 %v3578, %v3624
      %v3626 = vsub.f32 1.0, %v3625
      %v3627 = vmul.f32 %v3624, %v3626
      %v3628 = vadd.f32 %v3624, %v3627
      %vm3629 = vweird.f32 %v3578
      %vm3630 = vweird.f32 %v3624
      %vm3631 = vmor %vm3629, %vm3630
      %v3632 = vsel %vm3631, %v3624, %v3628
      %v3633 = vand.u32 2147483647, %v3578
      %vm3634 = vcmp.eq.f32.partialorder %v3633, 8.507059e+37
      %v3635 = vand.u32 %v3578, 2147483648
      %v3636 = vor.u32 1.1754944e-38, %v3635
      %v3637 = vsel %vm3634, %v3636, %v3632
      %v3638 = vmul.f32 %v3559, %v3637
      %v3639 = vrcp.pop %v3581
      %v3640 = vmul.f32 %v3581, %v3639
      %v3641 = vsub.f32 1.0, %v3640
      %v3642 = vmul.f32 %v3639, %v3641
      %v3643 = vadd.f32 %v3639, %v3642
      %vm3644 = vweird.f32 %v3581
      %vm3645 = vweird.f32 %v3639
      %vm3646 = vmor %vm3644, %vm3645
      %v3647 = vsel %vm3646, %v3639, %v3643
      %v3648 = vand.u32 2147483647, %v3581
      %vm3649 = vcmp.eq.f32.partialorder %v3648, 8.507059e+37
      %v3650 = vand.u32 %v3581, 2147483648
      %v3651 = vor.u32 1.1754944e-38, %v3650
      %v3652 = vsel %vm3649, %v3651, %v3647
      %v3653 = vmul.f32 %v3561, %v3652
      %v3654 = vrcp.pop %v3584
      %v3655 = vmul.f32 %v3584, %v3654
      %v3656 = vsub.f32 1.0, %v3655
      %v3657 = vmul.f32 %v3654, %v3656
      %v3658 = vadd.f32 %v3654, %v3657
      %vm3659 = vweird.f32 %v3584
      %vm3660 = vweird.f32 %v3654
      %vm3661 = vmor %vm3659, %vm3660
      %v3662 = vsel %vm3661, %v3654, %v3658
      %v3663 = vand.u32 2147483647, %v3584
      %vm3664 = vcmp.eq.f32.partialorder %v3663, 8.507059e+37
      %v3665 = vand.u32 %v3584, 2147483648
      %v3666 = vor.u32 1.1754944e-38, %v3665
      %v3667 = vsel %vm3664, %v3666, %v3662
      %v3668 = vmul.f32 %v3563, %v3667
      %v3669 = vrcp.pop %v3587
      %v3670 = vmul.f32 %v3587, %v3669
      %v3671 = vsub.f32 1.0, %v3670
      %v3672 = vmul.f32 %v3669, %v3671
      %v3673 = vadd.f32 %v3669, %v3672
      %vm3674 = vweird.f32 %v3587
      %vm3675 = vweird.f32 %v3669
      %vm3676 = vmor %vm3674, %vm3675
      %v3677 = vsel %vm3676, %v3669, %v3673
      %v3678 = vand.u32 2147483647, %v3587
      %vm3679 = vcmp.eq.f32.partialorder %v3678, 8.507059e+37
      %v3680 = vand.u32 %v3587, 2147483648
      %v3681 = vor.u32 1.1754944e-38, %v3680
      %v3682 = vsel %vm3679, %v3681, %v3677
      %v3683 = vmul.f32 %v3565, %v3682
      %v3684 = vrcp.pop %v3590
      %v3685 = vmul.f32 %v3590, %v3684
      %v3686 = vsub.f32 1.0, %v3685
      %v3687 = vmul.f32 %v3684, %v3686
      %v3688 = vadd.f32 %v3684, %v3687
      %vm3689 = vweird.f32 %v3590
      %vm3690 = vweird.f32 %v3684
      %vm3691 = vmor %vm3689, %vm3690
      %v3692 = vsel %vm3691, %v3684, %v3688
      %v3693 = vand.u32 2147483647, %v3590
      %vm3694 = vcmp.eq.f32.partialorder %v3693, 8.507059e+37
      %v3695 = vand.u32 %v3590, 2147483648
      %v3696 = vor.u32 1.1754944e-38, %v3695
      %v3697 = vsel %vm3694, %v3696, %v3692
      %v3698 = vmul.f32 %v3567, %v3697
      %v3699 = vrcp.pop %v3593
      %v3700 = vmul.f32 %v3593, %v3699
      %v3701 = vsub.f32 1.0, %v3700
      %v3702 = vmul.f32 %v3699, %v3701
      %v3703 = vadd.f32 %v3699, %v3702
      %vm3704 = vweird.f32 %v3593
      %vm3705 = vweird.f32 %v3699
      %vm3706 = vmor %vm3704, %vm3705
      %v3707 = vsel %vm3706, %v3699, %v3703
      %v3708 = vand.u32 2147483647, %v3593
      %vm3709 = vcmp.eq.f32.partialorder %v3708, 8.507059e+37
      %v3710 = vand.u32 %v3593, 2147483648
      %v3711 = vor.u32 1.1754944e-38, %v3710
      %v3712 = vsel %vm3709, %v3711, %v3707
      %v3713 = vmul.f32 %v3569, %v3712
      %3714 = vst.msk [vmem:[%s467] sm:$0xff] %vm3521, %v3608
      %3715 = vst.msk [vmem:[%s467 + $0x8] sm:$0xff] %vm3521, %v3623
      %3716 = vst.msk [vmem:[%s467 + $0x10] sm:$0xff] %vm3521, %v3638
      %3717 = vst.msk [vmem:[%s467 + $0x18] sm:$0xff] %vm3521, %v3653
      %3718 = vst.msk [vmem:[%s467 + $0x20] sm:$0xff] %vm3521, %v3668
      %3719 = vst.msk [vmem:[%s467 + $0x28] sm:$0xff] %vm3521, %v3683
      %3720 = vst.msk [vmem:[%s467 + $0x30] sm:$0xff] %vm3521, %v3698
      %3721 = vst.msk [vmem:[%s467 + $0x38] sm:$0xff] %vm3521, %v3713
      %vm3722 = vcmask 48152
      %v3723 = vsel %vm3722, %v3502, -inf
      %3724 = vmax.xlane.f32.xlu0 %v3723
      %v3725 = vpop.xlane.xlu0 %3724
      %v3726 = vsel %vm3722, %v3504, -inf
      %3727 = vmax.xlane.f32.xlu0 %v3726
      %v3728 = vpop.xlane.xlu0 %3727
      %v3729 = vsel %vm3722, %v3507, -inf
      %3730 = vmax.xlane.f32.xlu0 %v3729
      %v3731 = vpop.xlane.xlu0 %3730
      %v3732 = vsel %vm3722, %v3509, -inf
      %3733 = vmax.xlane.f32.xlu0 %v3732
      %v3734 = vpop.xlane.xlu0 %3733
      %v3735 = vsel %vm3722, %v3512, -inf
      %3736 = vmax.xlane.f32.xlu0 %v3735
      %v3737 = vpop.xlane.xlu0 %3736
      %v3738 = vsel %vm3722, %v3514, -inf
      %3739 = vmax.xlane.f32.xlu0 %v3738
      %v3740 = vpop.xlane.xlu0 %3739
      %v3741 = vsel %vm3722, %v3517, -inf
      %3742 = vmax.xlane.f32.xlu0 %v3741
      %v3743 = vpop.xlane.xlu0 %3742
      %v3744 = vsel %vm3722, %v3519, -inf
      %3745 = vmax.xlane.f32.xlu0 %v3744
      %v3746 = vpop.xlane.xlu0 %3745
      %v3747 = vsub.f32 %v3502, %v3725
      %v3748 = vsub.f32 %v3504, %v3728
      %v3749 = vsub.f32 %v3507, %v3731
      %v3750 = vsub.f32 %v3509, %v3734
      %v3751 = vsub.f32 %v3512, %v3737
      %v3752 = vsub.f32 %v3514, %v3740
      %v3753 = vsub.f32 %v3517, %v3743
      %v3754 = vsub.f32 %v3519, %v3746
      %v3755 = vmul.f32 %v3747, 1.442695
      %v3756 = vpow.pop %v3755
      %v3757 = vmul.f32 %v3748, 1.442695
      %v3758 = vpow.pop %v3757
      %v3759 = vmul.f32 %v3749, 1.442695
      %v3760 = vpow.pop %v3759
      %v3761 = vmul.f32 %v3750, 1.442695
      %v3762 = vpow.pop %v3761
      %v3763 = vmul.f32 %v3751, 1.442695
      %v3764 = vpow.pop %v3763
      %v3765 = vmul.f32 %v3752, 1.442695
      %v3766 = vpow.pop %v3765
      %v3767 = vmul.f32 %v3753, 1.442695
      %v3768 = vpow.pop %v3767
      %v3769 = vmul.f32 %v3754, 1.442695
      %v3770 = vpow.pop %v3769
      %3779 = vrot.lane.b32.xlu0 %v3756, 125
      %v3780 = vpop.permute.xlu0 %3779
      %3781 = vrot.lane.b32.xlu0 %v3758, 125
      %v3782 = vpop.permute.xlu0 %3781
      %3783 = vrot.lane.b32.xlu0 %v3760, 125
      %v3784 = vpop.permute.xlu0 %3783
      %3785 = vrot.lane.b32.xlu0 %v3762, 125
      %v3786 = vpop.permute.xlu0 %3785
      %3787 = vrot.lane.b32.xlu0 %v3764, 125
      %v3788 = vpop.permute.xlu0 %3787
      %3789 = vrot.lane.b32.xlu0 %v3766, 125
      %v3790 = vpop.permute.xlu0 %3789
      %3791 = vrot.lane.b32.xlu0 %v3768, 125
      %v3792 = vpop.permute.xlu0 %3791
      %3793 = vrot.lane.b32.xlu0 %v3770, 125
      %v3794 = vpop.permute.xlu0 %3793
      %v3803 = vsel %vm3521, %v3780, 0.0
      %3804 = vadd.xlane.f32.xlu0 %v3803
      %v3805 = vpop.xlane.xlu0 %3804
      %v3806 = vsel %vm3521, %v3782, 0.0
      %3807 = vadd.xlane.f32.xlu0 %v3806
      %v3808 = vpop.xlane.xlu0 %3807
      %v3809 = vsel %vm3521, %v3784, 0.0
      %3810 = vadd.xlane.f32.xlu0 %v3809
      %v3811 = vpop.xlane.xlu0 %3810
      %v3812 = vsel %vm3521, %v3786, 0.0
      %3813 = vadd.xlane.f32.xlu0 %v3812
      %v3814 = vpop.xlane.xlu0 %3813
      %v3815 = vsel %vm3521, %v3788, 0.0
      %3816 = vadd.xlane.f32.xlu0 %v3815
      %v3817 = vpop.xlane.xlu0 %3816
      %v3818 = vsel %vm3521, %v3790, 0.0
      %3819 = vadd.xlane.f32.xlu0 %v3818
      %v3820 = vpop.xlane.xlu0 %3819
      %v3821 = vsel %vm3521, %v3792, 0.0
      %3822 = vadd.xlane.f32.xlu0 %v3821
      %v3823 = vpop.xlane.xlu0 %3822
      %v3824 = vsel %vm3521, %v3794, 0.0
      %3825 = vadd.xlane.f32.xlu0 %v3824
      %v3826 = vpop.xlane.xlu0 %3825
      %v3827 = vrcp.pop %v3805
      %v3828 = vmul.f32 %v3805, %v3827
      %v3829 = vsub.f32 1.0, %v3828
      %v3830 = vmul.f32 %v3827, %v3829
      %v3831 = vadd.f32 %v3827, %v3830
      %vm3832 = vweird.f32 %v3805
      %vm3833 = vweird.f32 %v3827
      %vm3834 = vmor %vm3832, %vm3833
      %v3835 = vsel %vm3834, %v3827, %v3831
      %v3836 = vand.u32 2147483647, %v3805
      %vm3837 = vcmp.eq.f32.partialorder %v3836, 8.507059e+37
      %v3838 = vand.u32 %v3805, 2147483648
      %v3839 = vor.u32 1.1754944e-38, %v3838
      %v3840 = vsel %vm3837, %v3839, %v3835
      %v3841 = vmul.f32 %v3756, %v3840
      %v3842 = vrcp.pop %v3808
      %v3843 = vmul.f32 %v3808, %v3842
      %v3844 = vsub.f32 1.0, %v3843
      %v3845 = vmul.f32 %v3842, %v3844
      %v3846 = vadd.f32 %v3842, %v3845
      %vm3847 = vweird.f32 %v3808
      %vm3848 = vweird.f32 %v3842
      %vm3849 = vmor %vm3847, %vm3848
      %v3850 = vsel %vm3849, %v3842, %v3846
      %v3851 = vand.u32 2147483647, %v3808
      %vm3852 = vcmp.eq.f32.partialorder %v3851, 8.507059e+37
      %v3853 = vand.u32 %v3808, 2147483648
      %v3854 = vor.u32 1.1754944e-38, %v3853
      %v3855 = vsel %vm3852, %v3854, %v3850
      %v3856 = vmul.f32 %v3758, %v3855
      %v3857 = vrcp.pop %v3811
      %v3858 = vmul.f32 %v3811, %v3857
      %v3859 = vsub.f32 1.0, %v3858
      %v3860 = vmul.f32 %v3857, %v3859
      %v3861 = vadd.f32 %v3857, %v3860
      %vm3862 = vweird.f32 %v3811
      %vm3863 = vweird.f32 %v3857
      %vm3864 = vmor %vm3862, %vm3863
      %v3865 = vsel %vm3864, %v3857, %v3861
      %v3866 = vand.u32 2147483647, %v3811
      %vm3867 = vcmp.eq.f32.partialorder %v3866, 8.507059e+37
      %v3868 = vand.u32 %v3811, 2147483648
      %v3869 = vor.u32 1.1754944e-38, %v3868
      %v3870 = vsel %vm3867, %v3869, %v3865
      %v3871 = vmul.f32 %v3760, %v3870
      %v3872 = vrcp.pop %v3814
      %v3873 = vmul.f32 %v3814, %v3872
      %v3874 = vsub.f32 1.0, %v3873
      %v3875 = vmul.f32 %v3872, %v3874
      %v3876 = vadd.f32 %v3872, %v3875
      %vm3877 = vweird.f32 %v3814
      %vm3878 = vweird.f32 %v3872
      %vm3879 = vmor %vm3877, %vm3878
      %v3880 = vsel %vm3879, %v3872, %v3876
      %v3881 = vand.u32 2147483647, %v3814
      %vm3882 = vcmp.eq.f32.partialorder %v3881, 8.507059e+37
      %v3883 = vand.u32 %v3814, 2147483648
      %v3884 = vor.u32 1.1754944e-38, %v3883
      %v3885 = vsel %vm3882, %v3884, %v3880
      %v3886 = vmul.f32 %v3762, %v3885
      %v3887 = vrcp.pop %v3817
      %v3888 = vmul.f32 %v3817, %v3887
      %v3889 = vsub.f32 1.0, %v3888
      %v3890 = vmul.f32 %v3887, %v3889
      %v3891 = vadd.f32 %v3887, %v3890
      %vm3892 = vweird.f32 %v3817
      %vm3893 = vweird.f32 %v3887
      %vm3894 = vmor %vm3892, %vm3893
      %v3895 = vsel %vm3894, %v3887, %v3891
      %v3896 = vand.u32 2147483647, %v3817
      %vm3897 = vcmp.eq.f32.partialorder %v3896, 8.507059e+37
      %v3898 = vand.u32 %v3817, 2147483648
      %v3899 = vor.u32 1.1754944e-38, %v3898
      %v3900 = vsel %vm3897, %v3899, %v3895
      %v3901 = vmul.f32 %v3764, %v3900
      %v3902 = vrcp.pop %v3820
      %v3903 = vmul.f32 %v3820, %v3902
      %v3904 = vsub.f32 1.0, %v3903
      %v3905 = vmul.f32 %v3902, %v3904
      %v3906 = vadd.f32 %v3902, %v3905
      %vm3907 = vweird.f32 %v3820
      %vm3908 = vweird.f32 %v3902
      %vm3909 = vmor %vm3907, %vm3908
      %v3910 = vsel %vm3909, %v3902, %v3906
      %v3911 = vand.u32 2147483647, %v3820
      %vm3912 = vcmp.eq.f32.partialorder %v3911, 8.507059e+37
      %v3913 = vand.u32 %v3820, 2147483648
      %v3914 = vor.u32 1.1754944e-38, %v3913
      %v3915 = vsel %vm3912, %v3914, %v3910
      %v3916 = vmul.f32 %v3766, %v3915
      %v3917 = vrcp.pop %v3823
      %v3918 = vmul.f32 %v3823, %v3917
      %v3919 = vsub.f32 1.0, %v3918
      %v3920 = vmul.f32 %v3917, %v3919
      %v3921 = vadd.f32 %v3917, %v3920
      %vm3922 = vweird.f32 %v3823
      %vm3923 = vweird.f32 %v3917
      %vm3924 = vmor %vm3922, %vm3923
      %v3925 = vsel %vm3924, %v3917, %v3921
      %v3926 = vand.u32 2147483647, %v3823
      %vm3927 = vcmp.eq.f32.partialorder %v3926, 8.507059e+37
      %v3928 = vand.u32 %v3823, 2147483648
      %v3929 = vor.u32 1.1754944e-38, %v3928
      %v3930 = vsel %vm3927, %v3929, %v3925
      %v3931 = vmul.f32 %v3768, %v3930
      %v3932 = vrcp.pop %v3826
      %v3933 = vmul.f32 %v3826, %v3932
      %v3934 = vsub.f32 1.0, %v3933
      %v3935 = vmul.f32 %v3932, %v3934
      %v3936 = vadd.f32 %v3932, %v3935
      %vm3937 = vweird.f32 %v3826
      %vm3938 = vweird.f32 %v3932
      %vm3939 = vmor %vm3937, %vm3938
      %v3940 = vsel %vm3939, %v3932, %v3936
      %v3941 = vand.u32 2147483647, %v3826
      %vm3942 = vcmp.eq.f32.partialorder %v3941, 8.507059e+37
      %v3943 = vand.u32 %v3826, 2147483648
      %v3944 = vor.u32 1.1754944e-38, %v3943
      %v3945 = vsel %vm3942, %v3944, %v3940
      %v3946 = vmul.f32 %v3770, %v3945
      %3947 = vst.msk [vmem:[%s467] sm:$0xff] %vm3722, %v3841
      %3948 = vst.msk [vmem:[%s467 + $0x8] sm:$0xff] %vm3722, %v3856
      %3949 = vst.msk [vmem:[%s467 + $0x10] sm:$0xff] %vm3722, %v3871
      %3950 = vst.msk [vmem:[%s467 + $0x18] sm:$0xff] %vm3722, %v3886
      %3951 = vst.msk [vmem:[%s467 + $0x20] sm:$0xff] %vm3722, %v3901
      %3952 = vst.msk [vmem:[%s467 + $0x28] sm:$0xff] %vm3722, %v3916
      %3953 = vst.msk [vmem:[%s467 + $0x30] sm:$0xff] %vm3722, %v3931
      %3954 = vst.msk [vmem:[%s467 + $0x38] sm:$0xff] %vm3722, %v3946
      %vm3955 = vcmask 72752
      %v3956 = vsel %vm3955, %v3502, -inf
      %3957 = vmax.xlane.f32.xlu0 %v3956
      %v3958 = vpop.xlane.xlu0 %3957
      %v3959 = vsel %vm3955, %v3504, -inf
      %3960 = vmax.xlane.f32.xlu0 %v3959
      %v3961 = vpop.xlane.xlu0 %3960
      %v3962 = vsel %vm3955, %v3507, -inf
      %3963 = vmax.xlane.f32.xlu0 %v3962
      %v3964 = vpop.xlane.xlu0 %3963
      %v3965 = vsel %vm3955, %v3509, -inf
      %3966 = vmax.xlane.f32.xlu0 %v3965
      %v3967 = vpop.xlane.xlu0 %3966
      %v3968 = vsel %vm3955, %v3512, -inf
      %3969 = vmax.xlane.f32.xlu0 %v3968
      %v3970 = vpop.xlane.xlu0 %3969
      %v3971 = vsel %vm3955, %v3514, -inf
      %3972 = vmax.xlane.f32.xlu0 %v3971
      %v3973 = vpop.xlane.xlu0 %3972
      %v3974 = vsel %vm3955, %v3517, -inf
      %3975 = vmax.xlane.f32.xlu0 %v3974
      %v3976 = vpop.xlane.xlu0 %3975
      %v3977 = vsel %vm3955, %v3519, -inf
      %3978 = vmax.xlane.f32.xlu0 %v3977
      %v3979 = vpop.xlane.xlu0 %3978
      %v3980 = vsub.f32 %v3502, %v3958
      %v3981 = vsub.f32 %v3504, %v3961
      %v3982 = vsub.f32 %v3507, %v3964
      %v3983 = vsub.f32 %v3509, %v3967
      %v3984 = vsub.f32 %v3512, %v3970
      %v3985 = vsub.f32 %v3514, %v3973
      %v3986 = vsub.f32 %v3517, %v3976
      %v3987 = vsub.f32 %v3519, %v3979
      %v3988 = vmul.f32 %v3980, 1.442695
      %v3989 = vpow.pop %v3988
      %v3990 = vmul.f32 %v3981, 1.442695
      %v3991 = vpow.pop %v3990
      %v3992 = vmul.f32 %v3982, 1.442695
      %v3993 = vpow.pop %v3992
      %v3994 = vmul.f32 %v3983, 1.442695
      %v3995 = vpow.pop %v3994
      %v3996 = vmul.f32 %v3984, 1.442695
      %v3997 = vpow.pop %v3996
      %v3998 = vmul.f32 %v3985, 1.442695
      %v3999 = vpow.pop %v3998
      %v4000 = vmul.f32 %v3986, 1.442695
      %v4001 = vpow.pop %v4000
      %v4002 = vmul.f32 %v3987, 1.442695
      %v4003 = vpow.pop %v4002
      %4012 = vrot.lane.b32.xlu0 %v3989, 122
      %v4013 = vpop.permute.xlu0 %4012
      %4014 = vrot.lane.b32.xlu0 %v3991, 122
      %v4015 = vpop.permute.xlu0 %4014
      %4016 = vrot.lane.b32.xlu0 %v3993, 122
      %v4017 = vpop.permute.xlu0 %4016
      %4018 = vrot.lane.b32.xlu0 %v3995, 122
      %v4019 = vpop.permute.xlu0 %4018
      %4020 = vrot.lane.b32.xlu0 %v3997, 122
      %v4021 = vpop.permute.xlu0 %4020
      %4022 = vrot.lane.b32.xlu0 %v3999, 122
      %v4023 = vpop.permute.xlu0 %4022
      %4024 = vrot.lane.b32.xlu0 %v4001, 122
      %v4025 = vpop.permute.xlu0 %4024
      %4026 = vrot.lane.b32.xlu0 %v4003, 122
      %v4027 = vpop.permute.xlu0 %4026
      %v4036 = vsel %vm3521, %v4013, 0.0
      %4037 = vadd.xlane.f32.xlu0 %v4036
      %v4038 = vpop.xlane.xlu0 %4037
      %v4039 = vsel %vm3521, %v4015, 0.0
      %4040 = vadd.xlane.f32.xlu0 %v4039
      %v4041 = vpop.xlane.xlu0 %4040
      %v4042 = vsel %vm3521, %v4017, 0.0
      %4043 = vadd.xlane.f32.xlu0 %v4042
      %v4044 = vpop.xlane.xlu0 %4043
      %v4045 = vsel %vm3521, %v4019, 0.0
      %4046 = vadd.xlane.f32.xlu0 %v4045
      %v4047 = vpop.xlane.xlu0 %4046
      %v4048 = vsel %vm3521, %v4021, 0.0
      %4049 = vadd.xlane.f32.xlu0 %v4048
      %v4050 = vpop.xlane.xlu0 %4049
      %v4051 = vsel %vm3521, %v4023, 0.0
      %4052 = vadd.xlane.f32.xlu0 %v4051
      %v4053 = vpop.xlane.xlu0 %4052
      %v4054 = vsel %vm3521, %v4025, 0.0
      %4055 = vadd.xlane.f32.xlu0 %v4054
      %v4056 = vpop.xlane.xlu0 %4055
      %v4057 = vsel %vm3521, %v4027, 0.0
      %4058 = vadd.xlane.f32.xlu0 %v4057
      %v4059 = vpop.xlane.xlu0 %4058
      %v4060 = vrcp.pop %v4038
      %v4061 = vmul.f32 %v4038, %v4060
      %v4062 = vsub.f32 1.0, %v4061
      %v4063 = vmul.f32 %v4060, %v4062
      %v4064 = vadd.f32 %v4060, %v4063
      %vm4065 = vweird.f32 %v4038
      %vm4066 = vweird.f32 %v4060
      %vm4067 = vmor %vm4065, %vm4066
      %v4068 = vsel %vm4067, %v4060, %v4064
      %v4069 = vand.u32 2147483647, %v4038
      %vm4070 = vcmp.eq.f32.partialorder %v4069, 8.507059e+37
      %v4071 = vand.u32 %v4038, 2147483648
      %v4072 = vor.u32 1.1754944e-38, %v4071
      %v4073 = vsel %vm4070, %v4072, %v4068
      %v4074 = vmul.f32 %v3989, %v4073
      %v4075 = vrcp.pop %v4041
      %v4076 = vmul.f32 %v4041, %v4075
      %v4077 = vsub.f32 1.0, %v4076
      %v4078 = vmul.f32 %v4075, %v4077
      %v4079 = vadd.f32 %v4075, %v4078
      %vm4080 = vweird.f32 %v4041
      %vm4081 = vweird.f32 %v4075
      %vm4082 = vmor %vm4080, %vm4081
      %v4083 = vsel %vm4082, %v4075, %v4079
      %v4084 = vand.u32 2147483647, %v4041
      %vm4085 = vcmp.eq.f32.partialorder %v4084, 8.507059e+37
      %v4086 = vand.u32 %v4041, 2147483648
      %v4087 = vor.u32 1.1754944e-38, %v4086
      %v4088 = vsel %vm4085, %v4087, %v4083
      %v4089 = vmul.f32 %v3991, %v4088
      %v4090 = vrcp.pop %v4044
      %v4091 = vmul.f32 %v4044, %v4090
      %v4092 = vsub.f32 1.0, %v4091
      %v4093 = vmul.f32 %v4090, %v4092
      %v4094 = vadd.f32 %v4090, %v4093
      %vm4095 = vweird.f32 %v4044
      %vm4096 = vweird.f32 %v4090
      %vm4097 = vmor %vm4095, %vm4096
      %v4098 = vsel %vm4097, %v4090, %v4094
      %v4099 = vand.u32 2147483647, %v4044
      %vm4100 = vcmp.eq.f32.partialorder %v4099, 8.507059e+37
      %v4101 = vand.u32 %v4044, 2147483648
      %v4102 = vor.u32 1.1754944e-38, %v4101
      %v4103 = vsel %vm4100, %v4102, %v4098
      %v4104 = vmul.f32 %v3993, %v4103
      %v4105 = vrcp.pop %v4047
      %v4106 = vmul.f32 %v4047, %v4105
      %v4107 = vsub.f32 1.0, %v4106
      %v4108 = vmul.f32 %v4105, %v4107
      %v4109 = vadd.f32 %v4105, %v4108
      %vm4110 = vweird.f32 %v4047
      %vm4111 = vweird.f32 %v4105
      %vm4112 = vmor %vm4110, %vm4111
      %v4113 = vsel %vm4112, %v4105, %v4109
      %v4114 = vand.u32 2147483647, %v4047
      %vm4115 = vcmp.eq.f32.partialorder %v4114, 8.507059e+37
      %v4116 = vand.u32 %v4047, 2147483648
      %v4117 = vor.u32 1.1754944e-38, %v4116
      %v4118 = vsel %vm4115, %v4117, %v4113
      %v4119 = vmul.f32 %v3995, %v4118
      %v4120 = vrcp.pop %v4050
      %v4121 = vmul.f32 %v4050, %v4120
      %v4122 = vsub.f32 1.0, %v4121
      %v4123 = vmul.f32 %v4120, %v4122
      %v4124 = vadd.f32 %v4120, %v4123
      %vm4125 = vweird.f32 %v4050
      %vm4126 = vweird.f32 %v4120
      %vm4127 = vmor %vm4125, %vm4126
      %v4128 = vsel %vm4127, %v4120, %v4124
      %v4129 = vand.u32 2147483647, %v4050
      %vm4130 = vcmp.eq.f32.partialorder %v4129, 8.507059e+37
      %v4131 = vand.u32 %v4050, 2147483648
      %v4132 = vor.u32 1.1754944e-38, %v4131
      %v4133 = vsel %vm4130, %v4132, %v4128
      %v4134 = vmul.f32 %v3997, %v4133
      %v4135 = vrcp.pop %v4053
      %v4136 = vmul.f32 %v4053, %v4135
      %v4137 = vsub.f32 1.0, %v4136
      %v4138 = vmul.f32 %v4135, %v4137
      %v4139 = vadd.f32 %v4135, %v4138
      %vm4140 = vweird.f32 %v4053
      %vm4141 = vweird.f32 %v4135
      %vm4142 = vmor %vm4140, %vm4141
      %v4143 = vsel %vm4142, %v4135, %v4139
      %v4144 = vand.u32 2147483647, %v4053
      %vm4145 = vcmp.eq.f32.partialorder %v4144, 8.507059e+37
      %v4146 = vand.u32 %v4053, 2147483648
      %v4147 = vor.u32 1.1754944e-38, %v4146
      %v4148 = vsel %vm4145, %v4147, %v4143
      %v4149 = vmul.f32 %v3999, %v4148
      %v4150 = vrcp.pop %v4056
      %v4151 = vmul.f32 %v4056, %v4150
      %v4152 = vsub.f32 1.0, %v4151
      %v4153 = vmul.f32 %v4150, %v4152
      %v4154 = vadd.f32 %v4150, %v4153
      %vm4155 = vweird.f32 %v4056
      %vm4156 = vweird.f32 %v4150
      %vm4157 = vmor %vm4155, %vm4156
      %v4158 = vsel %vm4157, %v4150, %v4154
      %v4159 = vand.u32 2147483647, %v4056
      %vm4160 = vcmp.eq.f32.partialorder %v4159, 8.507059e+37
      %v4161 = vand.u32 %v4056, 2147483648
      %v4162 = vor.u32 1.1754944e-38, %v4161
      %v4163 = vsel %vm4160, %v4162, %v4158
      %v4164 = vmul.f32 %v4001, %v4163
      %v4165 = vrcp.pop %v4059
      %v4166 = vmul.f32 %v4059, %v4165
      %v4167 = vsub.f32 1.0, %v4166
      %v4168 = vmul.f32 %v4165, %v4167
      %v4169 = vadd.f32 %v4165, %v4168
      %vm4170 = vweird.f32 %v4059
      %vm4171 = vweird.f32 %v4165
      %vm4172 = vmor %vm4170, %vm4171
      %v4173 = vsel %vm4172, %v4165, %v4169
      %v4174 = vand.u32 2147483647, %v4059
      %vm4175 = vcmp.eq.f32.partialorder %v4174, 8.507059e+37
      %v4176 = vand.u32 %v4059, 2147483648
      %v4177 = vor.u32 1.1754944e-38, %v4176
      %v4178 = vsel %vm4175, %v4177, %v4173
      %v4179 = vmul.f32 %v4003, %v4178
      %4180 = vst.msk [vmem:[%s467] sm:$0xff] %vm3955, %v4074
      %4181 = vst.msk [vmem:[%s467 + $0x8] sm:$0xff] %vm3955, %v4089
      %4182 = vst.msk [vmem:[%s467 + $0x10] sm:$0xff] %vm3955, %v4104
      %4183 = vst.msk [vmem:[%s467 + $0x18] sm:$0xff] %vm3955, %v4119
      %4184 = vst.msk [vmem:[%s467 + $0x20] sm:$0xff] %vm3955, %v4134
      %4185 = vst.msk [vmem:[%s467 + $0x28] sm:$0xff] %vm3955, %v4149
      %4186 = vst.msk [vmem:[%s467 + $0x30] sm:$0xff] %vm3955, %v4164
      %4187 = vst.msk [vmem:[%s467 + $0x38] sm:$0xff] %vm3955, %v4179
      %vm4188 = vcmask 97352
      %v4189 = vsel %vm4188, %v3502, -inf
      %4190 = vmax.xlane.f32.xlu0 %v4189
      %v4191 = vpop.xlane.xlu0 %4190
      %v4192 = vsel %vm4188, %v3504, -inf
      %4193 = vmax.xlane.f32.xlu0 %v4192
      %v4194 = vpop.xlane.xlu0 %4193
      %v4195 = vsel %vm4188, %v3507, -inf
      %4196 = vmax.xlane.f32.xlu0 %v4195
      %v4197 = vpop.xlane.xlu0 %4196
      %v4198 = vsel %vm4188, %v3509, -inf
      %4199 = vmax.xlane.f32.xlu0 %v4198
      %v4200 = vpop.xlane.xlu0 %4199
      %v4201 = vsel %vm4188, %v3512, -inf
      %4202 = vmax.xlane.f32.xlu0 %v4201
      %v4203 = vpop.xlane.xlu0 %4202
      %v4204 = vsel %vm4188, %v3514, -inf
      %4205 = vmax.xlane.f32.xlu0 %v4204
      %v4206 = vpop.xlane.xlu0 %4205
      %v4207 = vsel %vm4188, %v3517, -inf
      %4208 = vmax.xlane.f32.xlu0 %v4207
      %v4209 = vpop.xlane.xlu0 %4208
      %v4210 = vsel %vm4188, %v3519, -inf
      %4211 = vmax.xlane.f32.xlu0 %v4210
      %v4212 = vpop.xlane.xlu0 %4211
      %v4213 = vsub.f32 %v3502, %v4191
      %v4214 = vsub.f32 %v3504, %v4194
      %v4215 = vsub.f32 %v3507, %v4197
      %v4216 = vsub.f32 %v3509, %v4200
      %v4217 = vsub.f32 %v3512, %v4203
      %v4218 = vsub.f32 %v3514, %v4206
      %v4219 = vsub.f32 %v3517, %v4209
      %v4220 = vsub.f32 %v3519, %v4212
      %v4221 = vmul.f32 %v4213, 1.442695
      %v4222 = vpow.pop %v4221
      %v4223 = vmul.f32 %v4214, 1.442695
      %v4224 = vpow.pop %v4223
      %v4225 = vmul.f32 %v4215, 1.442695
      %v4226 = vpow.pop %v4225
      %v4227 = vmul.f32 %v4216, 1.442695
      %v4228 = vpow.pop %v4227
      %v4229 = vmul.f32 %v4217, 1.442695
      %v4230 = vpow.pop %v4229
      %v4231 = vmul.f32 %v4218, 1.442695
      %v4232 = vpow.pop %v4231
      %v4233 = vmul.f32 %v4219, 1.442695
      %v4234 = vpow.pop %v4233
      %v4235 = vmul.f32 %v4220, 1.442695
      %v4236 = vpow.pop %v4235
      %4245 = vrot.lane.b32.xlu0 %v4222, 119
      %v4246 = vpop.permute.xlu0 %4245
      %4247 = vrot.lane.b32.xlu0 %v4224, 119
      %v4248 = vpop.permute.xlu0 %4247
      %4249 = vrot.lane.b32.xlu0 %v4226, 119
      %v4250 = vpop.permute.xlu0 %4249
      %4251 = vrot.lane.b32.xlu0 %v4228, 119
      %v4252 = vpop.permute.xlu0 %4251
      %4253 = vrot.lane.b32.xlu0 %v4230, 119
      %v4254 = vpop.permute.xlu0 %4253
      %4255 = vrot.lane.b32.xlu0 %v4232, 119
      %v4256 = vpop.permute.xlu0 %4255
      %4257 = vrot.lane.b32.xlu0 %v4234, 119
      %v4258 = vpop.permute.xlu0 %4257
      %4259 = vrot.lane.b32.xlu0 %v4236, 119
      %v4260 = vpop.permute.xlu0 %4259
      %v4269 = vsel %vm3521, %v4246, 0.0
      %4270 = vadd.xlane.f32.xlu0 %v4269
      %v4271 = vpop.xlane.xlu0 %4270
      %v4272 = vsel %vm3521, %v4248, 0.0
      %4273 = vadd.xlane.f32.xlu0 %v4272
      %v4274 = vpop.xlane.xlu0 %4273
      %v4275 = vsel %vm3521, %v4250, 0.0
      %4276 = vadd.xlane.f32.xlu0 %v4275
      %v4277 = vpop.xlane.xlu0 %4276
      %v4278 = vsel %vm3521, %v4252, 0.0
      %4279 = vadd.xlane.f32.xlu0 %v4278
      %v4280 = vpop.xlane.xlu0 %4279
      %v4281 = vsel %vm3521, %v4254, 0.0
      %4282 = vadd.xlane.f32.xlu0 %v4281
      %v4283 = vpop.xlane.xlu0 %4282
      %v4284 = vsel %vm3521, %v4256, 0.0
      %4285 = vadd.xlane.f32.xlu0 %v4284
      %v4286 = vpop.xlane.xlu0 %4285
      %v4287 = vsel %vm3521, %v4258, 0.0
      %4288 = vadd.xlane.f32.xlu0 %v4287
      %v4289 = vpop.xlane.xlu0 %4288
      %v4290 = vsel %vm3521, %v4260, 0.0
      %4291 = vadd.xlane.f32.xlu0 %v4290
      %v4292 = vpop.xlane.xlu0 %4291
      %v4293 = vrcp.pop %v4271
      %v4294 = vmul.f32 %v4271, %v4293
      %v4295 = vsub.f32 1.0, %v4294
      %v4296 = vmul.f32 %v4293, %v4295
      %v4297 = vadd.f32 %v4293, %v4296
      %vm4298 = vweird.f32 %v4271
      %vm4299 = vweird.f32 %v4293
      %vm4300 = vmor %vm4298, %vm4299
      %v4301 = vsel %vm4300, %v4293, %v4297
      %v4302 = vand.u32 2147483647, %v4271
      %vm4303 = vcmp.eq.f32.partialorder %v4302, 8.507059e+37
      %v4304 = vand.u32 %v4271, 2147483648
      %v4305 = vor.u32 1.1754944e-38, %v4304
      %v4306 = vsel %vm4303, %v4305, %v4301
      %v4307 = vmul.f32 %v4222, %v4306
      %v4308 = vrcp.pop %v4274
      %v4309 = vmul.f32 %v4274, %v4308
      %v4310 = vsub.f32 1.0, %v4309
      %v4311 = vmul.f32 %v4308, %v4310
      %v4312 = vadd.f32 %v4308, %v4311
      %vm4313 = vweird.f32 %v4274
      %vm4314 = vweird.f32 %v4308
      %vm4315 = vmor %vm4313, %vm4314
      %v4316 = vsel %vm4315, %v4308, %v4312
      %v4317 = vand.u32 2147483647, %v4274
      %vm4318 = vcmp.eq.f32.partialorder %v4317, 8.507059e+37
      %v4319 = vand.u32 %v4274, 2147483648
      %v4320 = vor.u32 1.1754944e-38, %v4319
      %v4321 = vsel %vm4318, %v4320, %v4316
      %v4322 = vmul.f32 %v4224, %v4321
      %v4323 = vrcp.pop %v4277
      %v4324 = vmul.f32 %v4277, %v4323
      %v4325 = vsub.f32 1.0, %v4324
      %v4326 = vmul.f32 %v4323, %v4325
      %v4327 = vadd.f32 %v4323, %v4326
      %vm4328 = vweird.f32 %v4277
      %vm4329 = vweird.f32 %v4323
      %vm4330 = vmor %vm4328, %vm4329
      %v4331 = vsel %vm4330, %v4323, %v4327
      %v4332 = vand.u32 2147483647, %v4277
      %vm4333 = vcmp.eq.f32.partialorder %v4332, 8.507059e+37
      %v4334 = vand.u32 %v4277, 2147483648
      %v4335 = vor.u32 1.1754944e-38, %v4334
      %v4336 = vsel %vm4333, %v4335, %v4331
      %v4337 = vmul.f32 %v4226, %v4336
      %v4338 = vrcp.pop %v4280
      %v4339 = vmul.f32 %v4280, %v4338
      %v4340 = vsub.f32 1.0, %v4339
      %v4341 = vmul.f32 %v4338, %v4340
      %v4342 = vadd.f32 %v4338, %v4341
      %vm4343 = vweird.f32 %v4280
      %vm4344 = vweird.f32 %v4338
      %vm4345 = vmor %vm4343, %vm4344
      %v4346 = vsel %vm4345, %v4338, %v4342
      %v4347 = vand.u32 2147483647, %v4280
      %vm4348 = vcmp.eq.f32.partialorder %v4347, 8.507059e+37
      %v4349 = vand.u32 %v4280, 2147483648
      %v4350 = vor.u32 1.1754944e-38, %v4349
      %v4351 = vsel %vm4348, %v4350, %v4346
      %v4352 = vmul.f32 %v4228, %v4351
      %v4353 = vrcp.pop %v4283
      %v4354 = vmul.f32 %v4283, %v4353
      %v4355 = vsub.f32 1.0, %v4354
      %v4356 = vmul.f32 %v4353, %v4355
      %v4357 = vadd.f32 %v4353, %v4356
      %vm4358 = vweird.f32 %v4283
      %vm4359 = vweird.f32 %v4353
      %vm4360 = vmor %vm4358, %vm4359
      %v4361 = vsel %vm4360, %v4353, %v4357
      %v4362 = vand.u32 2147483647, %v4283
      %vm4363 = vcmp.eq.f32.partialorder %v4362, 8.507059e+37
      %v4364 = vand.u32 %v4283, 2147483648
      %v4365 = vor.u32 1.1754944e-38, %v4364
      %v4366 = vsel %vm4363, %v4365, %v4361
      %v4367 = vmul.f32 %v4230, %v4366
      %v4368 = vrcp.pop %v4286
      %v4369 = vmul.f32 %v4286, %v4368
      %v4370 = vsub.f32 1.0, %v4369
      %v4371 = vmul.f32 %v4368, %v4370
      %v4372 = vadd.f32 %v4368, %v4371
      %vm4373 = vweird.f32 %v4286
      %vm4374 = vweird.f32 %v4368
      %vm4375 = vmor %vm4373, %vm4374
      %v4376 = vsel %vm4375, %v4368, %v4372
      %v4377 = vand.u32 2147483647, %v4286
      %vm4378 = vcmp.eq.f32.partialorder %v4377, 8.507059e+37
      %v4379 = vand.u32 %v4286, 2147483648
      %v4380 = vor.u32 1.1754944e-38, %v4379
      %v4381 = vsel %vm4378, %v4380, %v4376
      %v4382 = vmul.f32 %v4232, %v4381
      %v4383 = vrcp.pop %v4289
      %v4384 = vmul.f32 %v4289, %v4383
      %v4385 = vsub.f32 1.0, %v4384
      %v4386 = vmul.f32 %v4383, %v4385
      %v4387 = vadd.f32 %v4383, %v4386
      %vm4388 = vweird.f32 %v4289
      %vm4389 = vweird.f32 %v4383
      %vm4390 = vmor %vm4388, %vm4389
      %v4391 = vsel %vm4390, %v4383, %v4387
      %v4392 = vand.u32 2147483647, %v4289
      %vm4393 = vcmp.eq.f32.partialorder %v4392, 8.507059e+37
      %v4394 = vand.u32 %v4289, 2147483648
      %v4395 = vor.u32 1.1754944e-38, %v4394
      %v4396 = vsel %vm4393, %v4395, %v4391
      %v4397 = vmul.f32 %v4234, %v4396
      %v4398 = vrcp.pop %v4292
      %v4399 = vmul.f32 %v4292, %v4398
      %v4400 = vsub.f32 1.0, %v4399
      %v4401 = vmul.f32 %v4398, %v4400
      %v4402 = vadd.f32 %v4398, %v4401
      %vm4403 = vweird.f32 %v4292
      %vm4404 = vweird.f32 %v4398
      %vm4405 = vmor %vm4403, %vm4404
      %v4406 = vsel %vm4405, %v4398, %v4402
      %v4407 = vand.u32 2147483647, %v4292
      %vm4408 = vcmp.eq.f32.partialorder %v4407, 8.507059e+37
      %v4409 = vand.u32 %v4292, 2147483648
      %v4410 = vor.u32 1.1754944e-38, %v4409
      %v4411 = vsel %vm4408, %v4410, %v4406
      %v4412 = vmul.f32 %v4236, %v4411
      %4413 = vst.msk [vmem:[%s467] sm:$0xff] %vm4188, %v4307
      %4414 = vst.msk [vmem:[%s467 + $0x8] sm:$0xff] %vm4188, %v4322
      %4415 = vst.msk [vmem:[%s467 + $0x10] sm:$0xff] %vm4188, %v4337
      %4416 = vst.msk [vmem:[%s467 + $0x18] sm:$0xff] %vm4188, %v4352
      %4417 = vst.msk [vmem:[%s467 + $0x20] sm:$0xff] %vm4188, %v4367
      %4418 = vst.msk [vmem:[%s467 + $0x28] sm:$0xff] %vm4188, %v4382
      %4419 = vst.msk [vmem:[%s467 + $0x30] sm:$0xff] %vm4188, %v4397
      %4420 = vst.msk [vmem:[%s467 + $0x38] sm:$0xff] %vm4188, %v4412
      %p4421 = scmp.lt.s32.totalorder %s25, 1
      %s4422 = scalar_select %p4421, %s25, 1
      %s4423 = smul.addr %s4422, 8
      %s4424 = smul.addr %s4423, 8
      %s4425 = scalar_lea.vmem %s14, %s4424
      // Predicated region
      $region77: #{_forward_jit.1} parent=75 // pred_check
        %p4426 = pneg %p342
      $region78: #{_forward_jit.1} parent=75 // pred_check_branch
        %4428 = sbr.rel (%p4426) target = $region80
      $region79: #{_forward_jit.1} parent=75 // pred_region
        _
      $region80: #{_forward_jit.1} parent=75 // pred_fallthru
        _
    $region76: #{_forward_jit.1} parent=5 // pred_fallthru
      _
    %p4429 = scmp.le.s32.totalorder 2, %s20
    // Predicated region
    $region81: #{_forward_jit.1} parent=5 // pred_check
      %p4430 = pneg %p4429
    $region82: #{_forward_jit.1} parent=5 // pred_check_branch
      %4432 = sbr.rel (%p4430) target = $region84
    $region83: #{_forward_jit.1} parent=5 // pred_region
      %s4433 = ssub.s32 %s20, 2
      // Predicated region
      $region85: #{_forward_jit.1} parent=83 // pred_check
        %p4434 = pneg %p348
      $region86: #{_forward_jit.1} parent=83 // pred_check_branch
        %4436 = sbr.rel (%p4434) target = $region88
      $region87: #{_forward_jit.1} parent=83 // pred_region
        %p4437 = scmp.lt.s32.totalorder %s26, 1
        %s4438 = scalar_select %p4437, %s26, 1
        %s4439 = smul.addr %s4438, 8
        %s4440 = smul.addr %s4439, 8
        %s4441 = scalar_lea.vmem %s14, %s4440
      $region88: #{_forward_jit.1} parent=83 // pred_fallthru
        _
    $region84: #{_forward_jit.1} parent=5 // pred_fallthru
      _
  $region6: #{_forward_jit.1} parent=0 // loop_footer
    %s24 = sadd.s32 1, %s20
  $region7: #{_forward_jit.1} parent=0 // loop_footer_branch
    %19 = sbr.rel target = $region3
  $region8: #{_forward_jit.1} parent=0 // loop_exit
    _

</llo_original>
